<compile_context>
chip_gen: v7x
topology: tpu7x:2x2x1
jax: 0.10.0
libtpu: 0.0.40
codegen_flags: <defaults>
</compile_context>

<pallas_src>
import jax
import jax.numpy as jnp
import numpy as np
from jax import lax
from jax.experimental import pallas as pl
from jax.experimental.pallas import tpu as pltpu


def _round_up(x, m):
    return (x + m - 1) // m * m


# ----------------------------- Pallas kernel --------------------------------


def _make_block_kernel(stride, epe, Ho, Wo, Cin, Cp, per_tap_conv1, shortcut_mode):
    """Fused BasicBlock kernel for one estimator (epe images stacked into M)."""
    M = epe * Ho * Wo
    n_x = 1 if stride == 1 else 4
    taps = [(kh, kw) for kh in range(3) for kw in range(3)]

    def kernel(*refs):
        o_ref, pad_ref = refs[-2], refs[-1]
        in_refs = refs[:-2]
        x_refs = in_refs[:n_x]
        rest = list(in_refs[n_x:])
        w1_ref = rest.pop(0)
        b1_ref = rest.pop(0)
        if shortcut_mode == "fold":
            bsc_ref = rest.pop(0)
        elif shortcut_mode == "dot":
            wsc_ref = rest.pop(0)
            bsc_ref = rest.pop(0)
        w2_ref = rest.pop(0)
        b2_ref = rest.pop(0)

        # ---- conv1 3x3 taps built in VMEM (no HBM im2col) ----
        if stride == 1:
            xp = x_refs[0][...]                           # (epe, H+2, W+2, Cin) f32

            def tap1(kh, kw):
                return xp[:, kh:kh + Ho, kw:kw + Wo, :]
        else:  # stride == 2: four even/odd phases of the padded input
            ph = [r[...] for r in x_refs]                 # ee, eo, oe, oo

            def tap1(kh, kw):
                src = ph[(kh % 2) * 2 + (kw % 2)]
                return src[:, kh // 2:kh // 2 + Ho, kw // 2:kw // 2 + Wo, :]

        # ---- conv1 (+ shortcut columns when folded), bf16 MXU, f32 accumulate ----
        if per_tap_conv1:
            n1 = w1_ref.shape[-1]
            acc1 = jnp.zeros((M, n1), jnp.float32)
            for t, (kh, kw) in enumerate(taps):
                acc1 = acc1 + jnp.dot(
                    tap1(kh, kw).reshape(M, Cin).astype(jnp.bfloat16),
                    w1_ref[0, t * Cin:(t + 1) * Cin, :],
                    preferred_element_type=jnp.float32)
            y_all = acc1
        else:
            # TODO(synk): for tiny Cin the 9-way lane concat is lane-misaligned;
            # acceptable at stem sizes, per-tap path takes over once Cin >= 128.
            p1 = jnp.concatenate(
                [tap1(kh, kw).reshape(M, Cin) for kh, kw in taps], axis=-1)
            y_all = jnp.dot(p1.astype(jnp.bfloat16), w1_ref[0],
                            preferred_element_type=jnp.float32)

        # ---- shortcut branch (1x1 projection + BN, or identity) ----
        if shortcut_mode == "fold":
            y1 = y_all[:, :Cp]
            ysc = y_all[:, Cp:] + bsc_ref[...]            # (M, Cp)
        else:
            y1 = y_all
            if shortcut_mode == "dot":
                ysc = jnp.dot(tap1(1, 1).reshape(M, Cin).astype(jnp.bfloat16),
                              wsc_ref[...],
                              preferred_element_type=jnp.float32) + bsc_ref[...]
            else:  # identity shortcut: plain VPU add (no matmul)
                xc = tap1(1, 1).reshape(M, Cin).astype(jnp.float32)
                if Cp > Cin:
                    xc = jnp.concatenate(
                        [xc, jnp.zeros((M, Cp - Cin), jnp.float32)], axis=-1)
                ysc = xc

        # conv1 -> BN1 -> (dropout = identity) -> ReLU
        y1 = jnp.maximum(y1 + b1_ref[0], 0.0)             # (M, Cp) f32

        # ---- conv1 output -> zero-padded VMEM scratch for conv2's taps ----
        # Only the 1-wide border is zeroed (the interior is fully rewritten each
        # grid step), removing the full per-step zero-fill/store pass.
        zrow = jnp.zeros((epe, 1, Wo + 2, Cp), jnp.float32)
        zcol = jnp.zeros((epe, Ho, 1, Cp), jnp.float32)
        pad_ref[:, pl.ds(0, 1), :, :] = zrow
        pad_ref[:, pl.ds(Ho + 1, 1), :, :] = zrow
        pad_ref[:, pl.ds(1, Ho), pl.ds(0, 1), :] = zcol
        pad_ref[:, pl.ds(1, Ho), pl.ds(Wo + 1, 1), :] = zcol
        pad_ref[:, pl.ds(1, Ho), pl.ds(1, Wo), :] = y1.reshape(epe, Ho, Wo, Cp)
        y1p = pad_ref[...]                                # (epe, Ho+2, Wo+2, Cp)

        # ---- conv2: 9-tap accumulation, no (M, 9*Cp) im2col ----
        acc2 = jnp.zeros((M, Cp), jnp.float32)
        for t, (kh, kw) in enumerate(taps):
            tap = y1p[:, kh:kh + Ho, kw:kw + Wo, :].reshape(M, Cp)
            acc2 = acc2 + jnp.dot(tap.astype(jnp.bfloat16),
                                  w2_ref[0, t * Cp:(t + 1) * Cp, :],
                                  preferred_element_type=jnp.float32)
        y2 = acc2 + b2_ref[0]

        out = jnp.maximum(y2 + ysc, 0.0)                  # residual add + ReLU
        o_ref[...] = out.reshape(epe, Ho, Wo, Cp).astype(o_ref.dtype)

    return kernel


# ------------------------------- wrapper -------------------------------------


def _bn_affine(bn):
    scale = bn["gamma"] / jnp.sqrt(bn["var"] + bn["eps"])
    shift = bn["beta"] - bn["mean"] * scale
    return scale, shift                                   # 1-D (C,)


def basic_block_forward(x, params, *, num_estimators, stride, conv_bias):
    """x: (B, Cin, H, W) float32 NCHW as in PyTorch.  Returns NCHW float32."""
    B, Cin, H, W = x.shape
    E = num_estimators
    assert B % E == 0, "batch must be divisible by num_estimators"
    epe = B // E
    assert stride in (1, 2), "only stride 1/2 supported (ResNet basic block)"
    if stride == 2:
        assert H % 2 == 0 and W % 2 == 0

    planes = params["conv1"]["weight"].shape[0]
    Ho = (H + 2 - 3) // stride + 1
    Wo = (W + 2 - 3) // stride + 1
    Cp = _round_up(planes, 128)            # lane-dense padded output channels
    K1 = 9 * Cin
    M = epe * Ho * Wo

    has_projection = (stride != 1) or (Cin != planes)
    per_tap_conv1 = Cin >= 128
    if has_projection:
        shortcut_mode = "dot" if per_tap_conv1 else "fold"
    else:
        shortcut_mode = "add"

    x_nhwc = jnp.transpose(x, (0, 2, 3, 1)).astype(jnp.float32)
    xpad = jnp.pad(x_nhwc, ((0, 0), (1, 1), (1, 1), (0, 0)))

    # -------- fold BatchEnsemble R/S, conv bias and BatchNorm into weights ----
    g1, h1 = _bn_affine(params["bn1"])
    g2, h2 = _bn_affine(params["bn2"])

    def pad_cols(a):                        # pad last axis: planes -> Cp (zeros)
        return jnp.pad(a, [(0, 0)] * (a.ndim - 1) + [(0, Cp - planes)])

    def fold_conv(p, g, h, cin):
        # effective per-estimator im2col weight (E, 9, cin, planes) and bias (E,1,Cp)
        w = jnp.transpose(p["weight"], (2, 3, 1, 0)).reshape(9, cin, planes)
        w_eff = (w[None]
                 * p["r"][:, None, :, None]
                 * (p["s"] * g[None, :])[:, None, None, :])
        if conv_bias:
            b_eff = p["bias"] * g[None, :] + h[None, :]
        else:
            b_eff = jnp.broadcast_to(h[None, :], (E, planes))
        return w_eff, pad_cols(b_eff)[:, None, :]

    w1_4d, b1_eff = fold_conv(params["conv1"], g1, h1, Cin)
    w1_eff = pad_cols(w1_4d).reshape(E, K1, Cp)

    w2_4d, b2_eff = fold_conv(params["conv2"], g2, h2, planes)
    # conv2 consumes the Cp-channel (zero-padded) conv1 output: pad input rows too.
    w2_eff = jnp.pad(w2_4d, ((0, 0), (0, 0), (0, Cp - planes), (0, Cp - planes)))
    w2_eff = w2_eff.reshape(E, 9 * Cp, Cp)

    # -------- shortcut: 1x1 projection (+BN) folded, or identity --------------
    bsc_eff = None
    wsc_eff = None
    if has_projection:
        gsc, hsc = _bn_affine(params["bnsc"])
        wsc = params["convsc"]["weight"].reshape(planes, Cin).T * gsc[None, :]
        bsc = params["convsc"]["bias"] * gsc if conv_bias else jnp.zeros((planes,), jnp.float32)
        wsc_eff = pad_cols(wsc)                                   # (Cin, Cp)
        bsc_eff = pad_cols(bsc + hsc)[None, :]                    # (1, Cp)

    if shortcut_mode == "fold":
        # Shortcut input == conv1 centre tap (tap index 4): fold the 1x1 projection
        # as extra output columns of conv1's matmul (one dot, N doubled).
        sc_cols = jnp.zeros((E, K1, Cp), jnp.float32)
        sc_cols = sc_cols.at[:, 4 * Cin:5 * Cin, :].set(
            jnp.broadcast_to(wsc_eff[None], (E, Cin, Cp)))
        w1_ext = jnp.concatenate([w1_eff, sc_cols], axis=-1)      # (E, K1, 2*Cp)
        N1 = 2 * Cp
    else:
        w1_ext = w1_eff
        N1 = Cp

    # -------- activation inputs: padded NHWC (stride 1) or its 4 phases -------
    # TODO(synk): the stride-2 phase split is an extra XLA pass over xpad; fuse it
    #             into the producer / do it in-kernel if it shows up in traces.
    if stride == 1:
        x_inputs = [xpad]
        Hp, Wp = H + 2, W + 2
        x_specs = [pl.BlockSpec((epe, Hp, Wp, Cin), lambda e: (e, 0, 0, 0))]
    else:
        x_inputs = [xpad[:, ph::2, pw::2, :] for ph in (0, 1) for pw in (0, 1)]
        Hp, Wp = x_inputs[0].shape[1], x_inputs[0].shape[2]
        x_specs = [pl.BlockSpec((epe, Hp, Wp, Cin), lambda e: (e, 0, 0, 0))] * 4

    # -------- weight / bias inputs (weights in bf16, biases in f32) -----------
    w_inputs = [w1_ext.astype(jnp.bfloat16), b1_eff.astype(jnp.float32)]
    w_specs = [pl.BlockSpec((1, K1, N1), lambda e: (e, 0, 0)),
               pl.BlockSpec((1, 1, Cp), lambda e: (e, 0, 0))]
    if shortcut_mode == "fold":
        w_inputs += [bsc_eff.astype(jnp.float32)]
        w_specs += [pl.BlockSpec((1, Cp), lambda e: (0, 0))]
    elif shortcut_mode == "dot":
        w_inputs += [wsc_eff.astype(jnp.bfloat16), bsc_eff.astype(jnp.float32)]
        w_specs += [pl.BlockSpec((Cin, Cp), lambda e: (0, 0)),
                    pl.BlockSpec((1, Cp), lambda e: (0, 0))]
    w_inputs += [w2_eff.astype(jnp.bfloat16), b2_eff.astype(jnp.float32)]
    w_specs += [pl.BlockSpec((1, 9 * Cp, Cp), lambda e: (e, 0, 0)),
                pl.BlockSpec((1, 1, Cp), lambda e: (e, 0, 0))]

    # -------- VMEM budget + cost estimate --------------------------------------
    blk_in_bytes = (len(x_inputs) * epe * Hp * Wp * Cin * 4
                    + K1 * N1 * 2 + Cp * 4 + 9 * Cp * Cp * 2 + Cp * 4)
    if shortcut_mode == "dot":
        blk_in_bytes += Cin * Cp * 2 + Cp * 4
    elif shortcut_mode == "fold":
        blk_in_bytes += Cp * 4
    blk_out_bytes = epe * Ho * Wo * Cp * 4
    scratch_bytes = epe * (Ho + 2) * (Wo + 2) * Cp * 4
    interm_bytes = M * (9 * Cin * 6 + N1 * 4 + Cp * 16)
    vmem_needed = 2 * (blk_in_bytes + blk_out_bytes) + scratch_bytes + interm_bytes
    vmem_limit = int(min(max(2 * vmem_needed, 32 * 2 ** 20), 64 * 2 ** 20))

    Mtot = B * Ho * Wo
    flops = 2 * Mtot * K1 * N1 + 2 * Mtot * 9 * Cp * Cp
    if shortcut_mode == "dot":
        flops += 2 * Mtot * Cin * Cp
    bytes_accessed = (sum(int(np.prod(a.shape)) * a.dtype.itemsize
                          for a in list(x_inputs) + list(w_inputs))
                      + B * Ho * Wo * Cp * 4)
    cost = pl.CostEstimate(flops=int(flops), transcendentals=0,
                           bytes_accessed=int(bytes_accessed))

    kernel = _make_block_kernel(stride, epe, Ho, Wo, Cin, Cp,
                                per_tap_conv1, shortcut_mode)
    out_pad = pl.pallas_call(
        kernel,
        out_shape=jax.ShapeDtypeStruct((B, Ho, Wo, Cp), jnp.float32),
        grid=(E,),
        in_specs=x_specs + w_specs,
        out_specs=pl.BlockSpec((epe, Ho, Wo, Cp), lambda e: (e, 0, 0, 0)),
        scratch_shapes=[pltpu.VMEM((epe, Ho + 2, Wo + 2, Cp), jnp.float32)],
        compiler_params=pltpu.CompilerParams(
            dimension_semantics=("parallel",),
            vmem_limit_bytes=vmem_limit),
        cost_estimate=cost,
    )(*x_inputs, *w_inputs)

    out = out_pad[..., :planes]                  # drop lane padding
    return jnp.transpose(out, (0, 3, 1, 2))      # back to NCHW


# ----------------------- deterministic parameter init -----------------------


def init_params(key, in_planes, planes, num_estimators):
    ks = jax.random.split(key, 13)

    def nrm(k, shape, scale=0.1):
        return scale * jax.random.normal(k, shape, jnp.float32)

    def conv_w(k, cout, cin, ksz):
        return jax.random.normal(k, (cout, cin, ksz, ksz), jnp.float32) / np.sqrt(ksz * ksz * cin)

    def bn(k, c):
        k1, k2, k3, k4 = jax.random.split(k, 4)
        return dict(gamma=1.0 + 0.1 * jax.random.normal(k1, (c,), jnp.float32),
                    beta=nrm(k2, (c,)), mean=nrm(k3, (c,)),
                    var=0.5 + 0.5 * jnp.abs(jax.random.normal(k4, (c,), jnp.float32)),
                    eps=1e-5)

    return {
        "conv1": dict(weight=conv_w(ks[0], planes, in_planes, 3),
                      r=1.0 + nrm(ks[1], (num_estimators, in_planes)),
                      s=1.0 + nrm(ks[2], (num_estimators, planes)),
                      bias=nrm(ks[3], (num_estimators, planes))),
        "bn1": bn(ks[4], planes),
        "conv2": dict(weight=conv_w(ks[5], planes, planes, 3),
                      r=1.0 + nrm(ks[6], (num_estimators, planes)),
                      s=1.0 + nrm(ks[7], (num_estimators, planes)),
                      bias=nrm(ks[8], (num_estimators, planes))),
        "bn2": bn(ks[9], planes),
        "convsc": dict(weight=conv_w(ks[10], planes, in_planes, 1),
                       bias=nrm(ks[11], (planes,))),
        "bnsc": bn(ks[12], planes),
    }


# ----------------------------- pure-JAX reference ----------------------------


def reference_forward(x, params, *, num_estimators, stride, conv_bias):
    B, Cin, H, W = x.shape
    epe = B // num_estimators

    def rep(v):
        return jnp.repeat(v, epe, axis=0)[:, :, None, None]

    def conv(xx, w, st, pad):
        return lax.conv_general_dilated(xx, w, (st, st), [(pad, pad)] * 2,
                                        dimension_numbers=("NCHW", "OIHW", "NCHW"))

    def bn(xx, p):
        sc = p["gamma"] / jnp.sqrt(p["var"] + p["eps"])
        sh = p["beta"] - p["mean"] * sc
        return xx * sc[None, :, None, None] + sh[None, :, None, None]

    c1, c2 = params["conv1"], params["conv2"]
    planes = c1["weight"].shape[0]
    out = conv(x * rep(c1["r"]), c1["weight"], stride, 1) * rep(c1["s"])
    if conv_bias:
        out = out + rep(c1["bias"])
    out = jax.nn.relu(bn(out, params["bn1"]))
    out = conv(out * rep(c2["r"]), c2["weight"], 1, 1) * rep(c2["s"])
    if conv_bias:
        out = out + rep(c2["bias"])
    out = bn(out, params["bn2"])
    if stride != 1 or Cin != planes:
        sc = conv(x, params["convsc"]["weight"], stride, 0)
        if conv_bias:
            sc = sc + params["convsc"]["bias"][None, :, None, None]
        sc = bn(sc, params["bnsc"])
    else:
        sc = x
    return jax.nn.relu(out + sc)


if __name__ == "__main__":
    root = jax.random.PRNGKey(0)
    num_estimators = 2

    cases = [
        # projection shortcut folded into conv1's matmul, concat-conv1, 4-phase input
        dict(Cin=8, planes=16, H=16, W=16, stride=2, conv_bias=True),
        # identity shortcut (VPU add), concat-conv1
        dict(Cin=16, planes=16, H=16, W=16, stride=1, conv_bias=False),
        # Cin >= 128: per-tap conv1 accumulation + standalone projection dot
        dict(Cin=128, planes=64, H=8, W=8, stride=1, conv_bias=True),
    ]

    for i, c in enumerate(cases):
        kx, kp = jax.random.split(jax.random.fold_in(root, i))
        B = num_estimators * 2
        x = jax.random.normal(kx, (B, c["Cin"], c["H"], c["W"]), jnp.float32)
        params = init_params(kp, c["Cin"], c["planes"], num_estimators)

        out = basic_block_forward(x, params, num_estimators=num_estimators,
                                  stride=c["stride"], conv_bias=c["conv_bias"])
        out = jax.block_until_ready(out)

        ref = reference_forward(x, params, num_estimators=num_estimators,
                                stride=c["stride"], conv_bias=c["conv_bias"])
        Ho, Wo = c["H"] // c["stride"], c["W"] // c["stride"]
        assert out.shape == ref.shape == (B, c["planes"], Ho, Wo)
        # bf16 MXU operands with f32 accumulation vs. pure-f32 reference.
        np.testing.assert_allclose(np.asarray(out), np.asarray(ref),
                                   rtol=5e-2, atol=5e-2)

    print("KERNEL_OK")
</pallas_src>

<mosaic_0001>
module attributes {stable_mosaic.version = 11 : i64} {
  func.func @kernel(%arg0: i32, %arg1: memref<2x9x9x8xf32, #tpu.memory_space<vmem>>, %arg2: memref<2x9x9x8xf32, #tpu.memory_space<vmem>>, %arg3: memref<2x9x9x8xf32, #tpu.memory_space<vmem>>, %arg4: memref<2x9x9x8xf32, #tpu.memory_space<vmem>>, %arg5: memref<1x72x256xbf16, #tpu.memory_space<vmem>>, %arg6: memref<1x1x128xf32, #tpu.memory_space<vmem>>, %arg7: memref<1x128xf32, #tpu.memory_space<vmem>>, %arg8: memref<1x1152x128xbf16, #tpu.memory_space<vmem>>, %arg9: memref<1x1x128xf32, #tpu.memory_space<vmem>>, %arg10: memref<2x8x8x128xf32, #tpu.memory_space<vmem>>, %arg11: memref<2x10x10x128xf32, #tpu.memory_space<vmem>>) attributes {dimension_semantics = [#tpu.dimension_semantics<parallel>], iteration_bounds = array<i64: 2>, scalar_prefetch = 0 : i64, scratch_operands = 1 : i64, tpu.core_type = #tpu.core_type<tc>, window_params = [{transform_indices = @transform_0, window_bounds = array<i64: 2, 9, 9, 8>}, {transform_indices = @transform_1, window_bounds = array<i64: 2, 9, 9, 8>}, {transform_indices = @transform_2, window_bounds = array<i64: 2, 9, 9, 8>}, {transform_indices = @transform_3, window_bounds = array<i64: 2, 9, 9, 8>}, {transform_indices = @transform_4, window_bounds = array<i64: 1, 72, 256>}, {transform_indices = @transform_5, window_bounds = array<i64: 1, 1, 128>}, {pipeline_mode = #tpu.pipeline_mode<synchronous>, transform_indices = @transform_6, window_bounds = array<i64: 1, 128>}, {transform_indices = @transform_7, window_bounds = array<i64: 1, 1152, 128>}, {transform_indices = @transform_8, window_bounds = array<i64: 1, 1, 128>}, {transform_indices = @transform_9, window_bounds = array<i64: 2, 8, 8, 128>}]} {
    %c0 = arith.constant 0 : index
    %c0_0 = arith.constant 0 : index
    %c0_1 = arith.constant 0 : index
    %c0_2 = arith.constant 0 : index
    %0 = vector.load %arg1[%c0, %c0_0, %c0_1, %c0_2] : memref<2x9x9x8xf32, #tpu.memory_space<vmem>>, vector<2x9x9x8xf32>
    %c0_3 = arith.constant 0 : index
    %c0_4 = arith.constant 0 : index
    %c0_5 = arith.constant 0 : index
    %c0_6 = arith.constant 0 : index
    %1 = vector.load %arg2[%c0_3, %c0_4, %c0_5, %c0_6] : memref<2x9x9x8xf32, #tpu.memory_space<vmem>>, vector<2x9x9x8xf32>
    %c0_7 = arith.constant 0 : index
    %c0_8 = arith.constant 0 : index
    %c0_9 = arith.constant 0 : index
    %c0_10 = arith.constant 0 : index
    %2 = vector.load %arg3[%c0_7, %c0_8, %c0_9, %c0_10] : memref<2x9x9x8xf32, #tpu.memory_space<vmem>>, vector<2x9x9x8xf32>
    %c0_11 = arith.constant 0 : index
    %c0_12 = arith.constant 0 : index
    %c0_13 = arith.constant 0 : index
    %c0_14 = arith.constant 0 : index
    %3 = vector.load %arg4[%c0_11, %c0_12, %c0_13, %c0_14] : memref<2x9x9x8xf32, #tpu.memory_space<vmem>>, vector<2x9x9x8xf32>
    %4 = vector.extract_strided_slice %0 {offsets = [0, 0, 0, 0], sizes = [2, 8, 8, 8], strides = [1, 1, 1, 1]} : vector<2x9x9x8xf32> to vector<2x8x8x8xf32>
    %5 = vector.shape_cast %4 : vector<2x8x8x8xf32> to vector<128x8xf32>
    %6 = vector.extract_strided_slice %1 {offsets = [0, 0, 0, 0], sizes = [2, 8, 8, 8], strides = [1, 1, 1, 1]} : vector<2x9x9x8xf32> to vector<2x8x8x8xf32>
    %7 = vector.shape_cast %6 : vector<2x8x8x8xf32> to vector<128x8xf32>
    %8 = vector.extract_strided_slice %0 {offsets = [0, 0, 1, 0], sizes = [2, 8, 8, 8], strides = [1, 1, 1, 1]} : vector<2x9x9x8xf32> to vector<2x8x8x8xf32>
    %9 = vector.shape_cast %8 : vector<2x8x8x8xf32> to vector<128x8xf32>
    %10 = vector.extract_strided_slice %2 {offsets = [0, 0, 0, 0], sizes = [2, 8, 8, 8], strides = [1, 1, 1, 1]} : vector<2x9x9x8xf32> to vector<2x8x8x8xf32>
    %11 = vector.shape_cast %10 : vector<2x8x8x8xf32> to vector<128x8xf32>
    %12 = vector.extract_strided_slice %3 {offsets = [0, 0, 0, 0], sizes = [2, 8, 8, 8], strides = [1, 1, 1, 1]} : vector<2x9x9x8xf32> to vector<2x8x8x8xf32>
    %13 = vector.shape_cast %12 : vector<2x8x8x8xf32> to vector<128x8xf32>
    %14 = vector.extract_strided_slice %2 {offsets = [0, 0, 1, 0], sizes = [2, 8, 8, 8], strides = [1, 1, 1, 1]} : vector<2x9x9x8xf32> to vector<2x8x8x8xf32>
    %15 = vector.shape_cast %14 : vector<2x8x8x8xf32> to vector<128x8xf32>
    %16 = vector.extract_strided_slice %0 {offsets = [0, 1, 0, 0], sizes = [2, 8, 8, 8], strides = [1, 1, 1, 1]} : vector<2x9x9x8xf32> to vector<2x8x8x8xf32>
    %17 = vector.shape_cast %16 : vector<2x8x8x8xf32> to vector<128x8xf32>
    %18 = vector.extract_strided_slice %1 {offsets = [0, 1, 0, 0], sizes = [2, 8, 8, 8], strides = [1, 1, 1, 1]} : vector<2x9x9x8xf32> to vector<2x8x8x8xf32>
    %19 = vector.shape_cast %18 : vector<2x8x8x8xf32> to vector<128x8xf32>
    %20 = vector.extract_strided_slice %0 {offsets = [0, 1, 1, 0], sizes = [2, 8, 8, 8], strides = [1, 1, 1, 1]} : vector<2x9x9x8xf32> to vector<2x8x8x8xf32>
    %21 = vector.shape_cast %20 : vector<2x8x8x8xf32> to vector<128x8xf32>
    %22 = tpu.concatenate %5, %7, %9, %11, %13, %15, %17, %19, %21 in 1 : vector<128x8xf32>, vector<128x8xf32>, vector<128x8xf32>, vector<128x8xf32>, vector<128x8xf32>, vector<128x8xf32>, vector<128x8xf32>, vector<128x8xf32>, vector<128x8xf32> -> vector<128x72xf32>
    %23 = arith.truncf %22 : vector<128x72xf32> to vector<128x72xbf16>
    %c0_15 = arith.constant 0 : index
    %c0_16 = arith.constant 0 : index
    %c0_17 = arith.constant 0 : index
    %24 = vector.load %arg5[%c0_15, %c0_16, %c0_17] : memref<1x72x256xbf16, #tpu.memory_space<vmem>>, vector<1x72x256xbf16>
    %25 = vector.shape_cast %24 : vector<1x72x256xbf16> to vector<72x256xbf16>
    %cst = arith.constant dense<0.000000e+00> : vector<128x256xf32>
    %26 = tpu.matmul %23, %25, %cst {dimension_numbers = #tpu.dot_dimension_numbers<[1], [0], [0], [1], [0, 0, 1, 1], [], []>} : vector<128x72xbf16>, vector<72x256xbf16>, vector<128x256xf32> -> vector<128x256xf32>
    %27 = vector.extract_strided_slice %26 {offsets = [0, 0], sizes = [128, 128], strides = [1, 1]} : vector<128x256xf32> to vector<128x128xf32>
    %28 = vector.extract_strided_slice %26 {offsets = [0, 128], sizes = [128, 128], strides = [1, 1]} : vector<128x256xf32> to vector<128x128xf32>
    %c0_18 = arith.constant 0 : index
    %c0_19 = arith.constant 0 : index
    %29 = vector.load %arg7[%c0_18, %c0_19] : memref<1x128xf32, #tpu.memory_space<vmem>>, vector<1x128xf32>
    %30 = vector.broadcast %29 : vector<1x128xf32> to vector<128x128xf32>
    %31 = arith.addf %28, %30 : vector<128x128xf32>
    %c0_20 = arith.constant 0 : index
    %c0_21 = arith.constant 0 : index
    %c0_22 = arith.constant 0 : index
    %32 = vector.load %arg6[%c0_20, %c0_21, %c0_22] : memref<1x1x128xf32, #tpu.memory_space<vmem>>, vector<1x1x128xf32>
    %33 = vector.shape_cast %32 : vector<1x1x128xf32> to vector<1x128xf32>
    %34 = vector.broadcast %33 : vector<1x128xf32> to vector<128x128xf32>
    %35 = arith.addf %27, %34 : vector<128x128xf32>
    %cst_23 = arith.constant 0.000000e+00 : f32
    %36 = vector.broadcast %cst_23 : f32 to vector<128x128xf32>
    %37 = arith.maximumf %35, %36 : vector<128x128xf32>
    %cst_24 = arith.constant 0.000000e+00 : f32
    %38 = vector.broadcast %cst_24 : f32 to vector<2x1x10x128xf32>
    %cst_25 = arith.constant 0.000000e+00 : f32
    %39 = vector.broadcast %cst_25 : f32 to vector<2x8x1x128xf32>
    %c0_26 = arith.constant 0 : index
    %c0_27 = arith.constant 0 : index
    %c0_28 = arith.constant 0 : index
    %c0_29 = arith.constant 0 : index
    %40 = vector.load %arg11[%c0_26, %c0_27, %c0_28, %c0_29] : memref<2x10x10x128xf32, #tpu.memory_space<vmem>>, vector<2x1x10x128xf32>
    tpu.vector_store %arg11[%c0_26, %c0_27, %c0_28, %c0_29], %38 {strides = array<i32>} : memref<2x10x10x128xf32, #tpu.memory_space<vmem>>, vector<2x1x10x128xf32>,
    %c0_30 = arith.constant 0 : index
    %c9 = arith.constant 9 : index
    %c0_31 = arith.constant 0 : index
    %c0_32 = arith.constant 0 : index
    %41 = vector.load %arg11[%c0_30, %c9, %c0_31, %c0_32] : memref<2x10x10x128xf32, #tpu.memory_space<vmem>>, vector<2x1x10x128xf32>
    tpu.vector_store %arg11[%c0_30, %c9, %c0_31, %c0_32], %38 {strides = array<i32>} : memref<2x10x10x128xf32, #tpu.memory_space<vmem>>, vector<2x1x10x128xf32>,
    %c0_33 = arith.constant 0 : index
    %c1 = arith.constant 1 : index
    %c0_34 = arith.constant 0 : index
    %c0_35 = arith.constant 0 : index
    %42 = vector.load %arg11[%c0_33, %c1, %c0_34, %c0_35] : memref<2x10x10x128xf32, #tpu.memory_space<vmem>>, vector<2x8x1x128xf32>
    tpu.vector_store %arg11[%c0_33, %c1, %c0_34, %c0_35], %39 {strides = array<i32>} : memref<2x10x10x128xf32, #tpu.memory_space<vmem>>, vector<2x8x1x128xf32>,
    %c0_36 = arith.constant 0 : index
    %c1_37 = arith.constant 1 : index
    %c9_38 = arith.constant 9 : index
    %c0_39 = arith.constant 0 : index
    %43 = vector.load %arg11[%c0_36, %c1_37, %c9_38, %c0_39] : memref<2x10x10x128xf32, #tpu.memory_space<vmem>>, vector<2x8x1x128xf32>
    tpu.vector_store %arg11[%c0_36, %c1_37, %c9_38, %c0_39], %39 {strides = array<i32>} : memref<2x10x10x128xf32, #tpu.memory_space<vmem>>, vector<2x8x1x128xf32>,
    %44 = vector.shape_cast %37 : vector<128x128xf32> to vector<2x8x8x128xf32>
    %c0_40 = arith.constant 0 : index
    %c1_41 = arith.constant 1 : index
    %c1_42 = arith.constant 1 : index
    %c0_43 = arith.constant 0 : index
    %45 = vector.load %arg11[%c0_40, %c1_41, %c1_42, %c0_43] : memref<2x10x10x128xf32, #tpu.memory_space<vmem>>, vector<2x8x8x128xf32>
    tpu.vector_store %arg11[%c0_40, %c1_41, %c1_42, %c0_43], %44 {strides = array<i32>} : memref<2x10x10x128xf32, #tpu.memory_space<vmem>>, vector<2x8x8x128xf32>,
    %c0_44 = arith.constant 0 : index
    %c0_45 = arith.constant 0 : index
    %c0_46 = arith.constant 0 : index
    %c0_47 = arith.constant 0 : index
    %46 = vector.load %arg11[%c0_44, %c0_45, %c0_46, %c0_47] : memref<2x10x10x128xf32, #tpu.memory_space<vmem>>, vector<2x10x10x128xf32>
    %cst_48 = arith.constant 0.000000e+00 : f32
    %47 = vector.broadcast %cst_48 : f32 to vector<128x128xf32>
    %48 = vector.extract_strided_slice %46 {offsets = [0, 0, 0, 0], sizes = [2, 8, 8, 128], strides = [1, 1, 1, 1]} : vector<2x10x10x128xf32> to vector<2x8x8x128xf32>
    %49 = vector.shape_cast %48 : vector<2x8x8x128xf32> to vector<128x128xf32>
    %50 = arith.truncf %49 : vector<128x128xf32> to vector<128x128xbf16>
    %c0_49 = arith.constant 0 : index
    %c0_50 = arith.constant 0 : index
    %c0_51 = arith.constant 0 : index
    %51 = vector.load %arg8[%c0_49, %c0_50, %c0_51] : memref<1x1152x128xbf16, #tpu.memory_space<vmem>>, vector<1x128x128xbf16>
    %52 = vector.shape_cast %51 : vector<1x128x128xbf16> to vector<128x128xbf16>
    %cst_52 = arith.constant dense<0.000000e+00> : vector<128x128xf32>
    %53 = tpu.matmul %50, %52, %cst_52 {dimension_numbers = #tpu.dot_dimension_numbers<[1], [0], [0], [1], [0, 0, 1, 1], [], []>} : vector<128x128xbf16>, vector<128x128xbf16>, vector<128x128xf32> -> vector<128x128xf32>
    %54 = arith.addf %47, %53 : vector<128x128xf32>
    %55 = vector.extract_strided_slice %46 {offsets = [0, 0, 1, 0], sizes = [2, 8, 8, 128], strides = [1, 1, 1, 1]} : vector<2x10x10x128xf32> to vector<2x8x8x128xf32>
    %56 = vector.shape_cast %55 : vector<2x8x8x128xf32> to vector<128x128xf32>
    %57 = arith.truncf %56 : vector<128x128xf32> to vector<128x128xbf16>
    %c0_53 = arith.constant 0 : index
    %c128 = arith.constant 128 : index
    %c0_54 = arith.constant 0 : index
    %58 = vector.load %arg8[%c0_53, %c128, %c0_54] : memref<1x1152x128xbf16, #tpu.memory_space<vmem>>, vector<1x128x128xbf16>
    %59 = vector.shape_cast %58 : vector<1x128x128xbf16> to vector<128x128xbf16>
    %cst_55 = arith.constant dense<0.000000e+00> : vector<128x128xf32>
    %60 = tpu.matmul %57, %59, %cst_55 {dimension_numbers = #tpu.dot_dimension_numbers<[1], [0], [0], [1], [0, 0, 1, 1], [], []>} : vector<128x128xbf16>, vector<128x128xbf16>, vector<128x128xf32> -> vector<128x128xf32>
    %61 = arith.addf %54, %60 : vector<128x128xf32>
    %62 = vector.extract_strided_slice %46 {offsets = [0, 0, 2, 0], sizes = [2, 8, 8, 128], strides = [1, 1, 1, 1]} : vector<2x10x10x128xf32> to vector<2x8x8x128xf32>
    %63 = vector.shape_cast %62 : vector<2x8x8x128xf32> to vector<128x128xf32>
    %64 = arith.truncf %63 : vector<128x128xf32> to vector<128x128xbf16>
    %c0_56 = arith.constant 0 : index
    %c256 = arith.constant 256 : index
    %c0_57 = arith.constant 0 : index
    %65 = vector.load %arg8[%c0_56, %c256, %c0_57] : memref<1x1152x128xbf16, #tpu.memory_space<vmem>>, vector<1x128x128xbf16>
    %66 = vector.shape_cast %65 : vector<1x128x128xbf16> to vector<128x128xbf16>
    %cst_58 = arith.constant dense<0.000000e+00> : vector<128x128xf32>
    %67 = tpu.matmul %64, %66, %cst_58 {dimension_numbers = #tpu.dot_dimension_numbers<[1], [0], [0], [1], [0, 0, 1, 1], [], []>} : vector<128x128xbf16>, vector<128x128xbf16>, vector<128x128xf32> -> vector<128x128xf32>
    %68 = arith.addf %61, %67 : vector<128x128xf32>
    %69 = vector.extract_strided_slice %46 {offsets = [0, 1, 0, 0], sizes = [2, 8, 8, 128], strides = [1, 1, 1, 1]} : vector<2x10x10x128xf32> to vector<2x8x8x128xf32>
    %70 = vector.shape_cast %69 : vector<2x8x8x128xf32> to vector<128x128xf32>
    %71 = arith.truncf %70 : vector<128x128xf32> to vector<128x128xbf16>
    %c0_59 = arith.constant 0 : index
    %c384 = arith.constant 384 : index
    %c0_60 = arith.constant 0 : index
    %72 = vector.load %arg8[%c0_59, %c384, %c0_60] : memref<1x1152x128xbf16, #tpu.memory_space<vmem>>, vector<1x128x128xbf16>
    %73 = vector.shape_cast %72 : vector<1x128x128xbf16> to vector<128x128xbf16>
    %cst_61 = arith.constant dense<0.000000e+00> : vector<128x128xf32>
    %74 = tpu.matmul %71, %73, %cst_61 {dimension_numbers = #tpu.dot_dimension_numbers<[1], [0], [0], [1], [0, 0, 1, 1], [], []>} : vector<128x128xbf16>, vector<128x128xbf16>, vector<128x128xf32> -> vector<128x128xf32>
    %75 = arith.addf %68, %74 : vector<128x128xf32>
    %76 = vector.extract_strided_slice %46 {offsets = [0, 1, 1, 0], sizes = [2, 8, 8, 128], strides = [1, 1, 1, 1]} : vector<2x10x10x128xf32> to vector<2x8x8x128xf32>
    %77 = vector.shape_cast %76 : vector<2x8x8x128xf32> to vector<128x128xf32>
    %78 = arith.truncf %77 : vector<128x128xf32> to vector<128x128xbf16>
    %c0_62 = arith.constant 0 : index
    %c512 = arith.constant 512 : index
    %c0_63 = arith.constant 0 : index
    %79 = vector.load %arg8[%c0_62, %c512, %c0_63] : memref<1x1152x128xbf16, #tpu.memory_space<vmem>>, vector<1x128x128xbf16>
    %80 = vector.shape_cast %79 : vector<1x128x128xbf16> to vector<128x128xbf16>
    %cst_64 = arith.constant dense<0.000000e+00> : vector<128x128xf32>
    %81 = tpu.matmul %78, %80, %cst_64 {dimension_numbers = #tpu.dot_dimension_numbers<[1], [0], [0], [1], [0, 0, 1, 1], [], []>} : vector<128x128xbf16>, vector<128x128xbf16>, vector<128x128xf32> -> vector<128x128xf32>
    %82 = arith.addf %75, %81 : vector<128x128xf32>
    %83 = vector.extract_strided_slice %46 {offsets = [0, 1, 2, 0], sizes = [2, 8, 8, 128], strides = [1, 1, 1, 1]} : vector<2x10x10x128xf32> to vector<2x8x8x128xf32>
    %84 = vector.shape_cast %83 : vector<2x8x8x128xf32> to vector<128x128xf32>
    %85 = arith.truncf %84 : vector<128x128xf32> to vector<128x128xbf16>
    %c0_65 = arith.constant 0 : index
    %c640 = arith.constant 640 : index
    %c0_66 = arith.constant 0 : index
    %86 = vector.load %arg8[%c0_65, %c640, %c0_66] : memref<1x1152x128xbf16, #tpu.memory_space<vmem>>, vector<1x128x128xbf16>
    %87 = vector.shape_cast %86 : vector<1x128x128xbf16> to vector<128x128xbf16>
    %cst_67 = arith.constant dense<0.000000e+00> : vector<128x128xf32>
    %88 = tpu.matmul %85, %87, %cst_67 {dimension_numbers = #tpu.dot_dimension_numbers<[1], [0], [0], [1], [0, 0, 1, 1], [], []>} : vector<128x128xbf16>, vector<128x128xbf16>, vector<128x128xf32> -> vector<128x128xf32>
    %89 = arith.addf %82, %88 : vector<128x128xf32>
    %90 = vector.extract_strided_slice %46 {offsets = [0, 2, 0, 0], sizes = [2, 8, 8, 128], strides = [1, 1, 1, 1]} : vector<2x10x10x128xf32> to vector<2x8x8x128xf32>
    %91 = vector.shape_cast %90 : vector<2x8x8x128xf32> to vector<128x128xf32>
    %92 = arith.truncf %91 : vector<128x128xf32> to vector<128x128xbf16>
    %c0_68 = arith.constant 0 : index
    %c768 = arith.constant 768 : index
    %c0_69 = arith.constant 0 : index
    %93 = vector.load %arg8[%c0_68, %c768, %c0_69] : memref<1x1152x128xbf16, #tpu.memory_space<vmem>>, vector<1x128x128xbf16>
    %94 = vector.shape_cast %93 : vector<1x128x128xbf16> to vector<128x128xbf16>
    %cst_70 = arith.constant dense<0.000000e+00> : vector<128x128xf32>
    %95 = tpu.matmul %92, %94, %cst_70 {dimension_numbers = #tpu.dot_dimension_numbers<[1], [0], [0], [1], [0, 0, 1, 1], [], []>} : vector<128x128xbf16>, vector<128x128xbf16>, vector<128x128xf32> -> vector<128x128xf32>
    %96 = arith.addf %89, %95 : vector<128x128xf32>
    %97 = vector.extract_strided_slice %46 {offsets = [0, 2, 1, 0], sizes = [2, 8, 8, 128], strides = [1, 1, 1, 1]} : vector<2x10x10x128xf32> to vector<2x8x8x128xf32>
    %98 = vector.shape_cast %97 : vector<2x8x8x128xf32> to vector<128x128xf32>
    %99 = arith.truncf %98 : vector<128x128xf32> to vector<128x128xbf16>
    %c0_71 = arith.constant 0 : index
    %c896 = arith.constant 896 : index
    %c0_72 = arith.constant 0 : index
    %100 = vector.load %arg8[%c0_71, %c896, %c0_72] : memref<1x1152x128xbf16, #tpu.memory_space<vmem>>, vector<1x128x128xbf16>
    %101 = vector.shape_cast %100 : vector<1x128x128xbf16> to vector<128x128xbf16>
    %cst_73 = arith.constant dense<0.000000e+00> : vector<128x128xf32>
    %102 = tpu.matmul %99, %101, %cst_73 {dimension_numbers = #tpu.dot_dimension_numbers<[1], [0], [0], [1], [0, 0, 1, 1], [], []>} : vector<128x128xbf16>, vector<128x128xbf16>, vector<128x128xf32> -> vector<128x128xf32>
    %103 = arith.addf %96, %102 : vector<128x128xf32>
    %104 = vector.extract_strided_slice %46 {offsets = [0, 2, 2, 0], sizes = [2, 8, 8, 128], strides = [1, 1, 1, 1]} : vector<2x10x10x128xf32> to vector<2x8x8x128xf32>
    %105 = vector.shape_cast %104 : vector<2x8x8x128xf32> to vector<128x128xf32>
    %106 = arith.truncf %105 : vector<128x128xf32> to vector<128x128xbf16>
    %c0_74 = arith.constant 0 : index
    %c1024 = arith.constant 1024 : index
    %c0_75 = arith.constant 0 : index
    %107 = vector.load %arg8[%c0_74, %c1024, %c0_75] : memref<1x1152x128xbf16, #tpu.memory_space<vmem>>, vector<1x128x128xbf16>
    %108 = vector.shape_cast %107 : vector<1x128x128xbf16> to vector<128x128xbf16>
    %cst_76 = arith.constant dense<0.000000e+00> : vector<128x128xf32>
    %109 = tpu.matmul %106, %108, %cst_76 {dimension_numbers = #tpu.dot_dimension_numbers<[1], [0], [0], [1], [0, 0, 1, 1], [], []>} : vector<128x128xbf16>, vector<128x128xbf16>, vector<128x128xf32> -> vector<128x128xf32>
    %110 = arith.addf %103, %109 : vector<128x128xf32>
    %c0_77 = arith.constant 0 : index
    %c0_78 = arith.constant 0 : index
    %c0_79 = arith.constant 0 : index
    %111 = vector.load %arg9[%c0_77, %c0_78, %c0_79] : memref<1x1x128xf32, #tpu.memory_space<vmem>>, vector<1x1x128xf32>
    %112 = vector.shape_cast %111 : vector<1x1x128xf32> to vector<1x128xf32>
    %113 = vector.broadcast %112 : vector<1x128xf32> to vector<128x128xf32>
    %114 = arith.addf %110, %113 : vector<128x128xf32>
    %115 = arith.addf %114, %31 : vector<128x128xf32>
    %cst_80 = arith.constant 0.000000e+00 : f32
    %116 = vector.broadcast %cst_80 : f32 to vector<128x128xf32>
    %117 = arith.maximumf %115, %116 : vector<128x128xf32>
    %118 = vector.shape_cast %117 : vector<128x128xf32> to vector<2x8x8x128xf32>
    %c0_81 = arith.constant 0 : index
    %c0_82 = arith.constant 0 : index
    %c0_83 = arith.constant 0 : index
    %c0_84 = arith.constant 0 : index
    %119 = vector.load %arg10[%c0_81, %c0_82, %c0_83, %c0_84] : memref<2x8x8x128xf32, #tpu.memory_space<vmem>>, vector<2x8x8x128xf32>
    tpu.vector_store %arg10[%c0_81, %c0_82, %c0_83, %c0_84], %118 {strides = array<i32>} : memref<2x8x8x128xf32, #tpu.memory_space<vmem>>, vector<2x8x8x128xf32>,
    return
  }
  func.func @transform_0(%arg0: i32) -> (i32, i32, i32, i32) {
    %c0_i32 = arith.constant 0 : i32
    %c0_i32_0 = arith.constant 0 : i32
    %c0_i32_1 = arith.constant 0 : i32
    %c0_i32_2 = arith.constant 0 : i32
    return %arg0, %c0_i32, %c0_i32_0, %c0_i32_1 : i32, i32, i32, i32
  }
  func.func @transform_1(%arg0: i32) -> (i32, i32, i32, i32) {
    %c0_i32 = arith.constant 0 : i32
    %c0_i32_0 = arith.constant 0 : i32
    %c0_i32_1 = arith.constant 0 : i32
    %c0_i32_2 = arith.constant 0 : i32
    return %arg0, %c0_i32, %c0_i32_0, %c0_i32_1 : i32, i32, i32, i32
  }
  func.func @transform_2(%arg0: i32) -> (i32, i32, i32, i32) {
    %c0_i32 = arith.constant 0 : i32
    %c0_i32_0 = arith.constant 0 : i32
    %c0_i32_1 = arith.constant 0 : i32
    %c0_i32_2 = arith.constant 0 : i32
    return %arg0, %c0_i32, %c0_i32_0, %c0_i32_1 : i32, i32, i32, i32
  }
  func.func @transform_3(%arg0: i32) -> (i32, i32, i32, i32) {
    %c0_i32 = arith.constant 0 : i32
    %c0_i32_0 = arith.constant 0 : i32
    %c0_i32_1 = arith.constant 0 : i32
    %c0_i32_2 = arith.constant 0 : i32
    return %arg0, %c0_i32, %c0_i32_0, %c0_i32_1 : i32, i32, i32, i32
  }
  func.func @transform_4(%arg0: i32) -> (i32, i32, i32) {
    %c0_i32 = arith.constant 0 : i32
    %c0_i32_0 = arith.constant 0 : i32
    %c0_i32_1 = arith.constant 0 : i32
    return %arg0, %c0_i32, %c0_i32_0 : i32, i32, i32
  }
  func.func @transform_5(%arg0: i32) -> (i32, i32, i32) {
    %c0_i32 = arith.constant 0 : i32
    %c0_i32_0 = arith.constant 0 : i32
    %c0_i32_1 = arith.constant 0 : i32
    return %arg0, %c0_i32, %c0_i32_0 : i32, i32, i32
  }
  func.func @transform_6(%arg0: i32) -> (i32, i32) {
    %c0_i32 = arith.constant 0 : i32
    %c0_i32_0 = arith.constant 0 : i32
    %c0_i32_1 = arith.constant 0 : i32
    return %c0_i32, %c0_i32_0 : i32, i32
  }
  func.func @transform_7(%arg0: i32) -> (i32, i32, i32) {
    %c0_i32 = arith.constant 0 : i32
    %c0_i32_0 = arith.constant 0 : i32
    %c0_i32_1 = arith.constant 0 : i32
    return %arg0, %c0_i32, %c0_i32_0 : i32, i32, i32
  }
  func.func @transform_8(%arg0: i32) -> (i32, i32, i32) {
    %c0_i32 = arith.constant 0 : i32
    %c0_i32_0 = arith.constant 0 : i32
    %c0_i32_1 = arith.constant 0 : i32
    return %arg0, %c0_i32, %c0_i32_0 : i32, i32, i32
  }
  func.func @transform_9(%arg0: i32) -> (i32, i32, i32, i32) {
    %c0_i32 = arith.constant 0 : i32
    %c0_i32_0 = arith.constant 0 : i32
    %c0_i32_1 = arith.constant 0 : i32
    %c0_i32_2 = arith.constant 0 : i32
    return %arg0, %c0_i32, %c0_i32_0, %c0_i32_1 : i32, i32, i32, i32
  }
}

</mosaic_0001>

<llo_original>
// kernel: tpu_custom_call.1
$region0: #{tpu_custom_call.1}
  #allocation0 [shape = 'u32[]', space=smem, size = 0x4, offset = 0x4, fixed_abs, tag = 'smem constant byte address 0x4 - core index']
  #allocation1 [shape = 'u32[144,128]{1,0:T(1,128)}', space=vmem, size = 0x12000, scoped, tag = 'internal scratch']
  #allocation2 [shape = 'f32[2,10,10,128]{3,2,1,0:T(8,128)}', space=vmem, size = 0x28000, scoped, tag = 'scratch operand']
  %s0 = inlined_call_operand.vmem [shape: f32[4,9,9,8], index: 0, kind: input, shape index: {}]
  %s1 = inlined_call_operand.vmem [shape: f32[4,9,9,8], index: 1, kind: input, shape index: {}]
  %s2 = inlined_call_operand.vmem [shape: f32[4,9,9,8], index: 2, kind: input, shape index: {}]
  %s3 = inlined_call_operand.vmem [shape: f32[4,9,9,8], index: 3, kind: input, shape index: {}]
  %s4 = inlined_call_operand.vmem [shape: bf16[2,72,256], index: 4, kind: input, shape index: {}]
  %s5 = inlined_call_operand.vmem [shape: f32[2,1,128], index: 5, kind: input, shape index: {}]
  %s6 = inlined_call_operand.vmem [shape: f32[1,128], index: 6, kind: input, shape index: {}]
  %s7 = inlined_call_operand.vmem [shape: bf16[2,1152,128], index: 7, kind: input, shape index: {}]
  %s8 = inlined_call_operand.vmem [shape: f32[2,1,128], index: 8, kind: input, shape index: {}]
  %s9 = inlined_call_operand.hbm [shape: f32[4,8,8,128], index: 9, kind: output, shape index: {}]
  %s10 = sld [smem:[#allocation0]]
  $region69: #{tpu_custom_call.1} parent=0
    _
  %s12 = ssub.s32 1, %s10
  %s13 = scalar_select 0, %s12, %s10
  $region1: #{tpu_custom_call.1} parent=0
    #allocation3 [shape = 'u8[131072]{0}', space=vmem, size = 0x20000, scoped, tag = 'output window, operand 0']
    #allocation4 [shape = 's32[2]{0}', space=sflag, size = 0x8, scoped, tag = 'scoped memory for tpu_custom_call.1']
    %14 = vsyncpa [#allocation4], 0
    %s15 = scalar_lea.sflag [#allocation4], 1
    %16 = vsyncpa %s15, 0
    loop: start=0, step=1, limit=4
    $region2: #{tpu_custom_call.1} parent=1 // loop_pre_header
      _
    $region3: #{tpu_custom_call.1} parent=1 // loop_header
      %s18 = sphi 0, %s22
      %p19 = scmp.ge.s32.totalorder %s18, 4
      %s28 = sphi 0, %s30
      %s31 = sphi 0, %s28
      %s32 = sphi 0, %s31
      %s48 = sphi 0, %s32
      %s54 = sphi 0, %s56
      %s57 = sphi 0, %s54
      %s58 = sphi 0, %s57
      %s74 = sphi 0, %s58
      %s80 = sphi 0, %s82
      %s83 = sphi 0, %s80
      %s84 = sphi 0, %s83
      %s100 = sphi 0, %s84
      %s106 = sphi 0, %s108
      %s109 = sphi 0, %s106
      %s110 = sphi 0, %s109
      %s126 = sphi 0, %s110
      %s132 = sphi 0, %s134
      %s135 = sphi 0, %s132
      %s136 = sphi 0, %s135
      %s152 = sphi 0, %s136
      %s158 = sphi 0, %s160
      %s161 = sphi 0, %s158
      %s162 = sphi 0, %s161
      %s178 = sphi 0, %s162
      %s182 = sphi 0, %s182
      %s184 = sphi 0, %s182
      %s185 = sphi 0, %s184
      %s199 = sphi 0, %s185
      %s205 = sphi 0, %s207
      %s208 = sphi 0, %s205
      %s209 = sphi 0, %s208
      %s225 = sphi 0, %s209
      %s231 = sphi 0, %s233
      %s234 = sphi 0, %s231
      %s235 = sphi 0, %s234
      %s251 = sphi 0, %s235
      %s257 = sphi 0, %s259
      %s260 = sphi 0, %s257
      %s261 = sphi 0, %s260
      %s277 = sphi 0, %s261
    $region4: #{tpu_custom_call.1} parent=1 // loop_header_branch
      %21 = sbr.rel (%p19) target = $region8
    $region5: #{tpu_custom_call.1} parent=1 // loop_body
      %s23 = ssub.s32 %s18, 1
      %s24 = ssub.s32 %s18, 2
      %s25 = sadd.s32 %s18, 1
      %s26 = ssub.s32 %s18, %s25
      %p27 = scmp.eq.s32.totalorder %s26, 0
      %s29 = sadd.s32 %s28, 1
      %s30 = scalar_select %p27, %s28, %s29
      %p33 = pneg %p27
      %p34 = scmp.eq.s32.totalorder %s18, 1
      %p35 = por %p33, %p34
      %p36 = scmp.ne.s32.totalorder %s28, %s31
      %p37 = scmp.eq.s32.totalorder %s18, 0
      %p38 = por %p36, %p37
      %p39 = scmp.ne.s32.totalorder %s28, %s31
      %p40 = scmp.eq.s32.totalorder %s23, 1
      %p41 = por %p39, %p40
      %p42 = scmp.ne.s32.totalorder %s31, %s32
      %p43 = scmp.eq.s32.totalorder %s23, 0
      %p44 = por %p42, %p43
      %p45 = scmp.ne.s32.totalorder %s31, %s32
      %p46 = scmp.eq.s32.totalorder %s24, 1
      %p47 = por %p45, %p46
      %p49 = scmp.ne.s32.totalorder %s32, %s48
      %p50 = scmp.eq.s32.totalorder %s24, 0
      %p51 = por %p49, %p50
      %s52 = ssub.s32 %s18, %s25
      %p53 = scmp.eq.s32.totalorder %s52, 0
      %s55 = sadd.s32 %s54, 1
      %s56 = scalar_select %p53, %s54, %s55
      %p59 = pneg %p53
      %p60 = scmp.eq.s32.totalorder %s18, 1
      %p61 = por %p59, %p60
      %p62 = scmp.ne.s32.totalorder %s54, %s57
      %p63 = scmp.eq.s32.totalorder %s18, 0
      %p64 = por %p62, %p63
      %p65 = scmp.ne.s32.totalorder %s54, %s57
      %p66 = scmp.eq.s32.totalorder %s23, 1
      %p67 = por %p65, %p66
      %p68 = scmp.ne.s32.totalorder %s57, %s58
      %p69 = scmp.eq.s32.totalorder %s23, 0
      %p70 = por %p68, %p69
      %p71 = scmp.ne.s32.totalorder %s57, %s58
      %p72 = scmp.eq.s32.totalorder %s24, 1
      %p73 = por %p71, %p72
      %p75 = scmp.ne.s32.totalorder %s58, %s74
      %p76 = scmp.eq.s32.totalorder %s24, 0
      %p77 = por %p75, %p76
      %s78 = ssub.s32 %s18, %s25
      %p79 = scmp.eq.s32.totalorder %s78, 0
      %s81 = sadd.s32 %s80, 1
      %s82 = scalar_select %p79, %s80, %s81
      %p85 = pneg %p79
      %p86 = scmp.eq.s32.totalorder %s18, 1
      %p87 = por %p85, %p86
      %p88 = scmp.ne.s32.totalorder %s80, %s83
      %p89 = scmp.eq.s32.totalorder %s18, 0
      %p90 = por %p88, %p89
      %p91 = scmp.ne.s32.totalorder %s80, %s83
      %p92 = scmp.eq.s32.totalorder %s23, 1
      %p93 = por %p91, %p92
      %p94 = scmp.ne.s32.totalorder %s83, %s84
      %p95 = scmp.eq.s32.totalorder %s23, 0
      %p96 = por %p94, %p95
      %p97 = scmp.ne.s32.totalorder %s83, %s84
      %p98 = scmp.eq.s32.totalorder %s24, 1
      %p99 = por %p97, %p98
      %p101 = scmp.ne.s32.totalorder %s84, %s100
      %p102 = scmp.eq.s32.totalorder %s24, 0
      %p103 = por %p101, %p102
      %s104 = ssub.s32 %s18, %s25
      %p105 = scmp.eq.s32.totalorder %s104, 0
      %s107 = sadd.s32 %s106, 1
      %s108 = scalar_select %p105, %s106, %s107
      %p111 = pneg %p105
      %p112 = scmp.eq.s32.totalorder %s18, 1
      %p113 = por %p111, %p112
      %p114 = scmp.ne.s32.totalorder %s106, %s109
      %p115 = scmp.eq.s32.totalorder %s18, 0
      %p116 = por %p114, %p115
      %p117 = scmp.ne.s32.totalorder %s106, %s109
      %p118 = scmp.eq.s32.totalorder %s23, 1
      %p119 = por %p117, %p118
      %p120 = scmp.ne.s32.totalorder %s109, %s110
      %p121 = scmp.eq.s32.totalorder %s23, 0
      %p122 = por %p120, %p121
      %p123 = scmp.ne.s32.totalorder %s109, %s110
      %p124 = scmp.eq.s32.totalorder %s24, 1
      %p125 = por %p123, %p124
      %p127 = scmp.ne.s32.totalorder %s110, %s126
      %p128 = scmp.eq.s32.totalorder %s24, 0
      %p129 = por %p127, %p128
      %s130 = ssub.s32 %s18, %s25
      %p131 = scmp.eq.s32.totalorder %s130, 0
      %s133 = sadd.s32 %s132, 1
      %s134 = scalar_select %p131, %s132, %s133
      %p137 = pneg %p131
      %p138 = scmp.eq.s32.totalorder %s18, 1
      %p139 = por %p137, %p138
      %p140 = scmp.ne.s32.totalorder %s132, %s135
      %p141 = scmp.eq.s32.totalorder %s18, 0
      %p142 = por %p140, %p141
      %p143 = scmp.ne.s32.totalorder %s132, %s135
      %p144 = scmp.eq.s32.totalorder %s23, 1
      %p145 = por %p143, %p144
      %p146 = scmp.ne.s32.totalorder %s135, %s136
      %p147 = scmp.eq.s32.totalorder %s23, 0
      %p148 = por %p146, %p147
      %p149 = scmp.ne.s32.totalorder %s135, %s136
      %p150 = scmp.eq.s32.totalorder %s24, 1
      %p151 = por %p149, %p150
      %p153 = scmp.ne.s32.totalorder %s136, %s152
      %p154 = scmp.eq.s32.totalorder %s24, 0
      %p155 = por %p153, %p154
      %s156 = ssub.s32 %s18, %s25
      %p157 = scmp.eq.s32.totalorder %s156, 0
      %s159 = sadd.s32 %s158, 1
      %s160 = scalar_select %p157, %s158, %s159
      %p163 = pneg %p157
      %p164 = scmp.eq.s32.totalorder %s18, 1
      %p165 = por %p163, %p164
      %p166 = scmp.ne.s32.totalorder %s158, %s161
      %p167 = scmp.eq.s32.totalorder %s18, 0
      %p168 = por %p166, %p167
      %p169 = scmp.ne.s32.totalorder %s158, %s161
      %p170 = scmp.eq.s32.totalorder %s23, 1
      %p171 = por %p169, %p170
      %p172 = scmp.ne.s32.totalorder %s161, %s162
      %p173 = scmp.eq.s32.totalorder %s23, 0
      %p174 = por %p172, %p173
      %p175 = scmp.ne.s32.totalorder %s161, %s162
      %p176 = scmp.eq.s32.totalorder %s24, 1
      %p177 = por %p175, %p176
      %p179 = scmp.ne.s32.totalorder %s162, %s178
      %p180 = scmp.eq.s32.totalorder %s24, 0
      %p181 = por %p179, %p180
      %s183 = sadd.s32 %s182, 1
      %p186 = scmp.eq.s32.totalorder %s18, 1
      %p187 = scmp.ne.s32.totalorder %s182, %s184
      %p188 = scmp.eq.s32.totalorder %s18, 0
      %p189 = por %p187, %p188
      %p190 = scmp.ne.s32.totalorder %s182, %s184
      %p191 = scmp.eq.s32.totalorder %s23, 1
      %p192 = por %p190, %p191
      %p193 = scmp.ne.s32.totalorder %s184, %s185
      %p194 = scmp.eq.s32.totalorder %s23, 0
      %p195 = por %p193, %p194
      %p196 = scmp.ne.s32.totalorder %s184, %s185
      %p197 = scmp.eq.s32.totalorder %s24, 1
      %p198 = por %p196, %p197
      %p200 = scmp.ne.s32.totalorder %s185, %s199
      %p201 = scmp.eq.s32.totalorder %s24, 0
      %p202 = por %p200, %p201
      %s203 = ssub.s32 %s18, %s25
      %p204 = scmp.eq.s32.totalorder %s203, 0
      %s206 = sadd.s32 %s205, 1
      %s207 = scalar_select %p204, %s205, %s206
      %p210 = pneg %p204
      %p211 = scmp.eq.s32.totalorder %s18, 1
      %p212 = por %p210, %p211
      %p213 = scmp.ne.s32.totalorder %s205, %s208
      %p214 = scmp.eq.s32.totalorder %s18, 0
      %p215 = por %p213, %p214
      %p216 = scmp.ne.s32.totalorder %s205, %s208
      %p217 = scmp.eq.s32.totalorder %s23, 1
      %p218 = por %p216, %p217
      %p219 = scmp.ne.s32.totalorder %s208, %s209
      %p220 = scmp.eq.s32.totalorder %s23, 0
      %p221 = por %p219, %p220
      %p222 = scmp.ne.s32.totalorder %s208, %s209
      %p223 = scmp.eq.s32.totalorder %s24, 1
      %p224 = por %p222, %p223
      %p226 = scmp.ne.s32.totalorder %s209, %s225
      %p227 = scmp.eq.s32.totalorder %s24, 0
      %p228 = por %p226, %p227
      %s229 = ssub.s32 %s18, %s25
      %p230 = scmp.eq.s32.totalorder %s229, 0
      %s232 = sadd.s32 %s231, 1
      %s233 = scalar_select %p230, %s231, %s232
      %p236 = pneg %p230
      %p237 = scmp.eq.s32.totalorder %s18, 1
      %p238 = por %p236, %p237
      %p239 = scmp.ne.s32.totalorder %s231, %s234
      %p240 = scmp.eq.s32.totalorder %s18, 0
      %p241 = por %p239, %p240
      %p242 = scmp.ne.s32.totalorder %s231, %s234
      %p243 = scmp.eq.s32.totalorder %s23, 1
      %p244 = por %p242, %p243
      %p245 = scmp.ne.s32.totalorder %s234, %s235
      %p246 = scmp.eq.s32.totalorder %s23, 0
      %p247 = por %p245, %p246
      %p248 = scmp.ne.s32.totalorder %s234, %s235
      %p249 = scmp.eq.s32.totalorder %s24, 1
      %p250 = por %p248, %p249
      %p252 = scmp.ne.s32.totalorder %s235, %s251
      %p253 = scmp.eq.s32.totalorder %s24, 0
      %p254 = por %p252, %p253
      %s255 = ssub.s32 %s18, %s25
      %p256 = scmp.eq.s32.totalorder %s255, 0
      %s258 = sadd.s32 %s257, 1
      %s259 = scalar_select %p256, %s257, %s258
      %p262 = pneg %p256
      %p263 = scmp.eq.s32.totalorder %s18, 1
      %p264 = por %p262, %p263
      %p265 = scmp.ne.s32.totalorder %s257, %s260
      %p266 = scmp.eq.s32.totalorder %s18, 0
      %p267 = por %p265, %p266
      %p268 = scmp.ne.s32.totalorder %s257, %s260
      %p269 = scmp.eq.s32.totalorder %s23, 1
      %p270 = por %p268, %p269
      %p271 = scmp.ne.s32.totalorder %s260, %s261
      %p272 = scmp.eq.s32.totalorder %s23, 0
      %p273 = por %p271, %p272
      %p274 = scmp.ne.s32.totalorder %s260, %s261
      %p275 = scmp.eq.s32.totalorder %s24, 1
      %p276 = por %p274, %p275
      %p278 = scmp.ne.s32.totalorder %s261, %s277
      %p279 = scmp.eq.s32.totalorder %s24, 0
      %p280 = por %p278, %p279
      %p281 = scmp.le.s32.totalorder 1, %s18
      %p282 = scmp.lt.s32.totalorder %s18, 3
      %p283 = pnand %p281, %p282
      %p284 = pneg %p283
      // Predicated region
      $region9: #{tpu_custom_call.1} parent=5 // pred_check
        _
      $region10: #{tpu_custom_call.1} parent=5 // pred_check_branch
        %286 = sbr.rel (%p283) target = $region12
      $region11: #{tpu_custom_call.1} parent=5 // pred_region
        %s287 = ssub.s32 %s18, 1
        // Predicated region
        $region13: #{tpu_custom_call.1} parent=11 // pred_check
          %p288 = pneg %p195
        $region14: #{tpu_custom_call.1} parent=11 // pred_check_branch
          %290 = sbr.rel (%p288) target = $region16
        $region15: #{tpu_custom_call.1} parent=11 // pred_region
          _
        $region16: #{tpu_custom_call.1} parent=11 // pred_fallthru
          _
      $region12: #{tpu_custom_call.1} parent=5 // pred_fallthru
        _
      %p291 = scmp.lt.s32.totalorder %s18, 2
      // Predicated region
      $region17: #{tpu_custom_call.1} parent=5 // pred_check
        %p292 = pneg %p291
      $region18: #{tpu_custom_call.1} parent=5 // pred_check_branch
        %294 = sbr.rel (%p292) target = $region20
      $region19: #{tpu_custom_call.1} parent=5 // pred_region
        // Predicated region
        $region21: #{tpu_custom_call.1} parent=19 // pred_check
          %p295 = pneg %p38
        $region22: #{tpu_custom_call.1} parent=19 // pred_check_branch
          %297 = sbr.rel (%p295) target = $region24
        $region23: #{tpu_custom_call.1} parent=19 // pred_region
          %s298 = smul.u32 2, %s18
          %p299 = scmp.lt.s32.totalorder %s298, 3
          %s300 = scalar_select %p299, %s298, 3
          %s301 = smul.addr %s300, 18
          %s302 = smul.addr %s301, 8
          %s303 = scalar_lea.vmem %s0, %s302
          %s304 = smul.u32 2, %s18
        $region24: #{tpu_custom_call.1} parent=19 // pred_fallthru
          _
        // Predicated region
        $region25: #{tpu_custom_call.1} parent=19 // pred_check
          %p305 = pneg %p64
        $region26: #{tpu_custom_call.1} parent=19 // pred_check_branch
          %307 = sbr.rel (%p305) target = $region28
        $region27: #{tpu_custom_call.1} parent=19 // pred_region
          %s308 = smul.u32 2, %s18
          %p309 = scmp.lt.s32.totalorder %s308, 3
          %s310 = scalar_select %p309, %s308, 3
          %s311 = smul.addr %s310, 18
          %s312 = smul.addr %s311, 8
          %s313 = scalar_lea.vmem %s1, %s312
          %s314 = smul.u32 2, %s18
        $region28: #{tpu_custom_call.1} parent=19 // pred_fallthru
          _
        // Predicated region
        $region29: #{tpu_custom_call.1} parent=19 // pred_check
          %p315 = pneg %p90
        $region30: #{tpu_custom_call.1} parent=19 // pred_check_branch
          %317 = sbr.rel (%p315) target = $region32
        $region31: #{tpu_custom_call.1} parent=19 // pred_region
          %s318 = smul.u32 2, %s18
          %p319 = scmp.lt.s32.totalorder %s318, 3
          %s320 = scalar_select %p319, %s318, 3
          %s321 = smul.addr %s320, 18
          %s322 = smul.addr %s321, 8
          %s323 = scalar_lea.vmem %s2, %s322
          %s324 = smul.u32 2, %s18
        $region32: #{tpu_custom_call.1} parent=19 // pred_fallthru
          _
        // Predicated region
        $region33: #{tpu_custom_call.1} parent=19 // pred_check
          %p325 = pneg %p116
        $region34: #{tpu_custom_call.1} parent=19 // pred_check_branch
          %327 = sbr.rel (%p325) target = $region36
        $region35: #{tpu_custom_call.1} parent=19 // pred_region
          %s328 = smul.u32 2, %s18
          %p329 = scmp.lt.s32.totalorder %s328, 3
          %s330 = scalar_select %p329, %s328, 3
          %s331 = smul.addr %s330, 18
          %s332 = smul.addr %s331, 8
          %s333 = scalar_lea.vmem %s3, %s332
          %s334 = smul.u32 2, %s18
        $region36: #{tpu_custom_call.1} parent=19 // pred_fallthru
          _
        // Predicated region
        $region37: #{tpu_custom_call.1} parent=19 // pred_check
          %p335 = pneg %p142
        $region38: #{tpu_custom_call.1} parent=19 // pred_check_branch
          %337 = sbr.rel (%p335) target = $region40
        $region39: #{tpu_custom_call.1} parent=19 // pred_region
          %p338 = scmp.lt.s32.totalorder %s18, 1
          %s339 = scalar_select %p338, %s18, 1
          %s340 = smul.addr %s339, 18
          %s341 = smul.addr %s340, 4
          %s342 = scalar_lea.vmem %s4, %s341
        $region40: #{tpu_custom_call.1} parent=19 // pred_fallthru
          _
        // Predicated region
        $region41: #{tpu_custom_call.1} parent=19 // pred_check
          %p343 = pneg %p168
        $region42: #{tpu_custom_call.1} parent=19 // pred_check_branch
          %345 = sbr.rel (%p343) target = $region44
        $region43: #{tpu_custom_call.1} parent=19 // pred_region
          %p346 = scmp.lt.s32.totalorder %s18, 1
          %s347 = scalar_select %p346, %s18, 1
          %s348 = scalar_lea.vmem %s5, %s347
        $region44: #{tpu_custom_call.1} parent=19 // pred_fallthru
          _
        // Predicated region
        $region45: #{tpu_custom_call.1} parent=19 // pred_check
          %p349 = pneg %p215
        $region46: #{tpu_custom_call.1} parent=19 // pred_check_branch
          %351 = sbr.rel (%p349) target = $region48
        $region47: #{tpu_custom_call.1} parent=19 // pred_region
          %p352 = scmp.lt.s32.totalorder %s18, 1
          %s353 = scalar_select %p352, %s18, 1
          %s354 = smul.addr %s353, 144
          %s355 = smul.addr %s354, 4
          %s356 = scalar_lea.vmem %s7, %s355
        $region48: #{tpu_custom_call.1} parent=19 // pred_fallthru
          _
        // Predicated region
        $region49: #{tpu_custom_call.1} parent=19 // pred_check
          %p357 = pneg %p241
        $region50: #{tpu_custom_call.1} parent=19 // pred_check_branch
          %359 = sbr.rel (%p357) target = $region52
        $region51: #{tpu_custom_call.1} parent=19 // pred_region
          %p360 = scmp.lt.s32.totalorder %s18, 1
          %s361 = scalar_select %p360, %s18, 1
          %s362 = scalar_lea.vmem %s8, %s361
        $region52: #{tpu_custom_call.1} parent=19 // pred_fallthru
          _
      $region20: #{tpu_custom_call.1} parent=5 // pred_fallthru
        _
      %p363 = scmp.le.s32.totalorder 1, %s18
      %p364 = scmp.lt.s32.totalorder %s18, 3
      %p365 = pnand %p363, %p364
      %p366 = pneg %p365
      // Predicated region
      $region53: #{tpu_custom_call.1} parent=5 // pred_check
        _
      $region54: #{tpu_custom_call.1} parent=5 // pred_check_branch
        %368 = sbr.rel (%p365) target = $region56
      $region55: #{tpu_custom_call.1} parent=5 // pred_region
        %s369 = ssub.s32 %s18, 1
        %s370 = smul.u32 2, %s23
        %p371 = scmp.lt.s32.totalorder %s370, 3
        %s372 = scalar_select %p371, %s370, 3
        %s373 = smul.addr %s372, 18
        %s374 = smul.addr %s373, 8
        %s375 = scalar_lea.vmem %s0, %s374
        %p376 = pneg %p44
        %p377 = pneg %p41
        %s378 = smul.u32 2, %s23
        %p379 = scmp.lt.s32.totalorder %s378, 3
        %s380 = scalar_select %p379, %s378, 3
        %s381 = smul.addr %s380, 18
        %s382 = smul.addr %s381, 8
        %s383 = scalar_lea.vmem %s1, %s382
        %p384 = pneg %p70
        %p385 = pneg %p67
        %s386 = smul.u32 2, %s23
        %p387 = scmp.lt.s32.totalorder %s386, 3
        %s388 = scalar_select %p387, %s386, 3
        %s389 = smul.addr %s388, 18
        %s390 = smul.addr %s389, 8
        %s391 = scalar_lea.vmem %s2, %s390
        %p392 = pneg %p96
        %p393 = pneg %p93
        %s394 = smul.u32 2, %s23
        %p395 = scmp.lt.s32.totalorder %s394, 3
        %s396 = scalar_select %p395, %s394, 3
        %s397 = smul.addr %s396, 18
        %s398 = smul.addr %s397, 8
        %s399 = scalar_lea.vmem %s3, %s398
        %p400 = pneg %p122
        %p401 = pneg %p119
        %p402 = scmp.lt.s32.totalorder %s23, 1
        %s403 = scalar_select %p402, %s23, 1
        %s404 = smul.addr %s403, 18
        %s405 = smul.addr %s404, 4
        %s406 = scalar_lea.vmem %s4, %s405
        %p407 = pneg %p148
        %p408 = pneg %p145
        %p409 = scmp.lt.s32.totalorder %s23, 1
        %s410 = scalar_select %p409, %s23, 1
        %s411 = scalar_lea.vmem %s5, %s410
        %p412 = pneg %p174
        %p413 = pneg %p171
        %p414 = pneg %p195
        %p415 = pneg %p192
        %p416 = scmp.lt.s32.totalorder %s23, 1
        %s417 = scalar_select %p416, %s23, 1
        %s418 = smul.addr %s417, 144
        %s419 = smul.addr %s418, 4
        %s420 = scalar_lea.vmem %s7, %s419
        %p421 = pneg %p221
        %p422 = pneg %p218
        %p423 = scmp.lt.s32.totalorder %s23, 1
        %s424 = scalar_select %p423, %s23, 1
        %s425 = scalar_lea.vmem %s8, %s424
        %p426 = pneg %p247
        %p427 = pneg %p244
        %p428 = pneg %p273
        %p429 = pneg %p270
        %s430 = sand.u32 %s260, 1
        %s431 = scalar_lea.sflag [#allocation4], %s430
        %s432 = sand.u32 %s260, 1
        %s433 = smul.addr %s432, 128
        %s434 = scalar_lea.vmem [#allocation3], %s433
        %s435 = smul.u32 2, %s23
        %p436 = scmp.lt.s32.totalorder %s435, 3
        %s437 = scalar_select %p436, %s435, 3
        %s438 = smul.addr %s437, 18
        %s439 = smul.addr %s438, 8
        %s440 = scalar_lea.vmem %s0, %s439
        %s441 = smul.u32 2, %s23
        %s442 = smul.u32 2, %s23
        %p443 = scmp.lt.s32.totalorder %s442, 3
        %s444 = scalar_select %p443, %s442, 3
        %s445 = smul.addr %s444, 18
        %s446 = smul.addr %s445, 8
        %s447 = scalar_lea.vmem %s1, %s446
        %s448 = smul.u32 2, %s23
        %s449 = smul.u32 2, %s23
        %p450 = scmp.lt.s32.totalorder %s449, 3
        %s451 = scalar_select %p450, %s449, 3
        %s452 = smul.addr %s451, 18
        %s453 = smul.addr %s452, 8
        %s454 = scalar_lea.vmem %s2, %s453
        %s455 = smul.u32 2, %s23
        %s456 = smul.u32 2, %s23
        %p457 = scmp.lt.s32.totalorder %s456, 3
        %s458 = scalar_select %p457, %s456, 3
        %s459 = smul.addr %s458, 18
        %s460 = smul.addr %s459, 8
        %s461 = scalar_lea.vmem %s3, %s460
        %s462 = smul.u32 2, %s23
        %p463 = scmp.lt.s32.totalorder %s23, 1
        %s464 = scalar_select %p463, %s23, 1
        %s465 = smul.addr %s464, 18
        %s466 = smul.addr %s465, 4
        %s467 = scalar_lea.vmem %s4, %s466
        %p468 = scmp.lt.s32.totalorder %s23, 1
        %s469 = scalar_select %p468, %s23, 1
        %s470 = scalar_lea.vmem %s5, %s469
        %p471 = scmp.lt.s32.totalorder %s23, 1
        %s472 = scalar_select %p471, %s23, 1
        %s473 = smul.addr %s472, 144
        %s474 = smul.addr %s473, 4
        %s475 = scalar_lea.vmem %s7, %s474
        %p476 = scmp.lt.s32.totalorder %s23, 1
        %s477 = scalar_select %p476, %s23, 1
        %s478 = scalar_lea.vmem %s8, %s477
        %s479 = smul.u32 2, %s23
        %v481 = vld [vmem:[%s440] sm:$0xff]
        %v482 = vld [vmem:[%s440 + $0x8] sm:$0x1]
        %v483 = vld [vmem:[%s440 + $0x10] sm:$0xff]
        %v484 = vld [vmem:[%s440 + $0x18] sm:$0x1]
        %v485 = vld [vmem:[%s440 + $0x20] sm:$0xff]
        %v486 = vld [vmem:[%s440 + $0x28] sm:$0x1]
        %v487 = vld [vmem:[%s440 + $0x30] sm:$0xff]
        %v488 = vld [vmem:[%s440 + $0x38] sm:$0x1]
        %v489 = vld [vmem:[%s440 + $0x40] sm:$0xff]
        %v490 = vld [vmem:[%s440 + $0x48] sm:$0x1]
        %v491 = vld [vmem:[%s440 + $0x50] sm:$0xff]
        %v492 = vld [vmem:[%s440 + $0x58] sm:$0x1]
        %v493 = vld [vmem:[%s440 + $0x60] sm:$0xff]
        %v494 = vld [vmem:[%s440 + $0x68] sm:$0x1]
        %v495 = vld [vmem:[%s440 + $0x70] sm:$0xff]
        %v496 = vld [vmem:[%s440 + $0x78] sm:$0x1]
        %v497 = vld [vmem:[%s440 + $0x80] sm:$0xff]
        %v498 = vld [vmem:[%s440 + $0x88] sm:$0x1]
        %v499 = vld [vmem:[%s440 + $0x90] sm:$0xff]
        %v500 = vld [vmem:[%s440 + $0x98] sm:$0x1]
        %v501 = vld [vmem:[%s440 + $0xa0] sm:$0xff]
        %v502 = vld [vmem:[%s440 + $0xa8] sm:$0x1]
        %v503 = vld [vmem:[%s440 + $0xb0] sm:$0xff]
        %v504 = vld [vmem:[%s440 + $0xb8] sm:$0x1]
        %v505 = vld [vmem:[%s440 + $0xc0] sm:$0xff]
        %v506 = vld [vmem:[%s440 + $0xc8] sm:$0x1]
        %v507 = vld [vmem:[%s440 + $0xd0] sm:$0xff]
        %v508 = vld [vmem:[%s440 + $0xd8] sm:$0x1]
        %v509 = vld [vmem:[%s440 + $0xe0] sm:$0xff]
        %v510 = vld [vmem:[%s440 + $0xe8] sm:$0x1]
        %v511 = vld [vmem:[%s440 + $0xf0] sm:$0xff]
        %v512 = vld [vmem:[%s440 + $0xf8] sm:$0x1]
        %v513 = vld [vmem:[%s440 + $0x100] sm:$0xff]
        %v514 = vld [vmem:[%s440 + $0x108] sm:$0x1]
        %v515 = vld [vmem:[%s440 + $0x110] sm:$0xff]
        %v516 = vld [vmem:[%s440 + $0x118] sm:$0x1]
        %v517 = vld [vmem:[%s447] sm:$0xff]
        %v518 = vld [vmem:[%s447 + $0x10] sm:$0xff]
        %v519 = vld [vmem:[%s447 + $0x20] sm:$0xff]
        %v520 = vld [vmem:[%s447 + $0x30] sm:$0xff]
        %v521 = vld [vmem:[%s447 + $0x40] sm:$0xff]
        %v522 = vld [vmem:[%s447 + $0x50] sm:$0xff]
        %v523 = vld [vmem:[%s447 + $0x60] sm:$0xff]
        %v524 = vld [vmem:[%s447 + $0x70] sm:$0xff]
        %v525 = vld [vmem:[%s447 + $0x80] sm:$0xff]
        %v526 = vld [vmem:[%s447 + $0x90] sm:$0xff]
        %v527 = vld [vmem:[%s447 + $0xa0] sm:$0xff]
        %v528 = vld [vmem:[%s447 + $0xb0] sm:$0xff]
        %v529 = vld [vmem:[%s447 + $0xc0] sm:$0xff]
        %v530 = vld [vmem:[%s447 + $0xd0] sm:$0xff]
        %v531 = vld [vmem:[%s447 + $0xe0] sm:$0xff]
        %v532 = vld [vmem:[%s447 + $0xf0] sm:$0xff]
        %v533 = vld [vmem:[%s447 + $0x100] sm:$0xff]
        %v534 = vld [vmem:[%s447 + $0x110] sm:$0xff]
        %v535 = vld [vmem:[%s454] sm:$0xff]
        %v536 = vld [vmem:[%s454 + $0x8] sm:$0x1]
        %v537 = vld [vmem:[%s454 + $0x10] sm:$0xff]
        %v538 = vld [vmem:[%s454 + $0x18] sm:$0x1]
        %v539 = vld [vmem:[%s454 + $0x20] sm:$0xff]
        %v540 = vld [vmem:[%s454 + $0x28] sm:$0x1]
        %v541 = vld [vmem:[%s454 + $0x30] sm:$0xff]
        %v542 = vld [vmem:[%s454 + $0x38] sm:$0x1]
        %v543 = vld [vmem:[%s454 + $0x40] sm:$0xff]
        %v544 = vld [vmem:[%s454 + $0x48] sm:$0x1]
        %v545 = vld [vmem:[%s454 + $0x50] sm:$0xff]
        %v546 = vld [vmem:[%s454 + $0x58] sm:$0x1]
        %v547 = vld [vmem:[%s454 + $0x60] sm:$0xff]
        %v548 = vld [vmem:[%s454 + $0x68] sm:$0x1]
        %v549 = vld [vmem:[%s454 + $0x70] sm:$0xff]
        %v550 = vld [vmem:[%s454 + $0x78] sm:$0x1]
        %v551 = vld [vmem:[%s454 + $0x90] sm:$0xff]
        %v552 = vld [vmem:[%s454 + $0x98] sm:$0x1]
        %v553 = vld [vmem:[%s454 + $0xa0] sm:$0xff]
        %v554 = vld [vmem:[%s454 + $0xa8] sm:$0x1]
        %v555 = vld [vmem:[%s454 + $0xb0] sm:$0xff]
        %v556 = vld [vmem:[%s454 + $0xb8] sm:$0x1]
        %v557 = vld [vmem:[%s454 + $0xc0] sm:$0xff]
        %v558 = vld [vmem:[%s454 + $0xc8] sm:$0x1]
        %v559 = vld [vmem:[%s454 + $0xd0] sm:$0xff]
        %v560 = vld [vmem:[%s454 + $0xd8] sm:$0x1]
        %v561 = vld [vmem:[%s454 + $0xe0] sm:$0xff]
        %v562 = vld [vmem:[%s454 + $0xe8] sm:$0x1]
        %v563 = vld [vmem:[%s454 + $0xf0] sm:$0xff]
        %v564 = vld [vmem:[%s454 + $0xf8] sm:$0x1]
        %v565 = vld [vmem:[%s454 + $0x100] sm:$0xff]
        %v566 = vld [vmem:[%s454 + $0x108] sm:$0x1]
        %v567 = vld [vmem:[%s461] sm:$0xff]
        %v568 = vld [vmem:[%s461 + $0x10] sm:$0xff]
        %v569 = vld [vmem:[%s461 + $0x20] sm:$0xff]
        %v570 = vld [vmem:[%s461 + $0x30] sm:$0xff]
        %v571 = vld [vmem:[%s461 + $0x40] sm:$0xff]
        %v572 = vld [vmem:[%s461 + $0x50] sm:$0xff]
        %v573 = vld [vmem:[%s461 + $0x60] sm:$0xff]
        %v574 = vld [vmem:[%s461 + $0x70] sm:$0xff]
        %v575 = vld [vmem:[%s461 + $0x90] sm:$0xff]
        %v576 = vld [vmem:[%s461 + $0xa0] sm:$0xff]
        %v577 = vld [vmem:[%s461 + $0xb0] sm:$0xff]
        %v578 = vld [vmem:[%s461 + $0xc0] sm:$0xff]
        %v579 = vld [vmem:[%s461 + $0xd0] sm:$0xff]
        %v580 = vld [vmem:[%s461 + $0xe0] sm:$0xff]
        %v581 = vld [vmem:[%s461 + $0xf0] sm:$0xff]
        %v582 = vld [vmem:[%s461 + $0x100] sm:$0xff]
        %vm615 = vcmask 1046528
        %v616 = vrot.slane %v481, 1
        %v617 = vrot.slane %v482, 1
        %v618 = vsel %vm615, %v616, %v617
        %v619 = vrot.slane %v483, 1
        %v620 = vrot.slane %v484, 1
        %v621 = vsel %vm615, %v619, %v620
        %v622 = vrot.slane %v485, 1
        %v623 = vrot.slane %v486, 1
        %v624 = vsel %vm615, %v622, %v623
        %v625 = vrot.slane %v487, 1
        %v626 = vrot.slane %v488, 1
        %v627 = vsel %vm615, %v625, %v626
        %v628 = vrot.slane %v489, 1
        %v629 = vrot.slane %v490, 1
        %v630 = vsel %vm615, %v628, %v629
        %v631 = vrot.slane %v491, 1
        %v632 = vrot.slane %v492, 1
        %v633 = vsel %vm615, %v631, %v632
        %v634 = vrot.slane %v493, 1
        %v635 = vrot.slane %v494, 1
        %v636 = vsel %vm615, %v634, %v635
        %v637 = vrot.slane %v495, 1
        %v638 = vrot.slane %v496, 1
        %v639 = vsel %vm615, %v637, %v638
        %v640 = vrot.slane %v499, 1
        %v641 = vrot.slane %v500, 1
        %v642 = vsel %vm615, %v640, %v641
        %v643 = vrot.slane %v501, 1
        %v644 = vrot.slane %v502, 1
        %v645 = vsel %vm615, %v643, %v644
        %v646 = vrot.slane %v503, 1
        %v647 = vrot.slane %v504, 1
        %v648 = vsel %vm615, %v646, %v647
        %v649 = vrot.slane %v505, 1
        %v650 = vrot.slane %v506, 1
        %v651 = vsel %vm615, %v649, %v650
        %v652 = vrot.slane %v507, 1
        %v653 = vrot.slane %v508, 1
        %v654 = vsel %vm615, %v652, %v653
        %v655 = vrot.slane %v509, 1
        %v656 = vrot.slane %v510, 1
        %v657 = vsel %vm615, %v655, %v656
        %v658 = vrot.slane %v511, 1
        %v659 = vrot.slane %v512, 1
        %v660 = vsel %vm615, %v658, %v659
        %v661 = vrot.slane %v513, 1
        %v662 = vrot.slane %v514, 1
        %v663 = vsel %vm615, %v661, %v662
        %v696 = vrot.slane %v535, 1
        %v697 = vrot.slane %v536, 1
        %v698 = vsel %vm615, %v696, %v697
        %v699 = vrot.slane %v537, 1
        %v700 = vrot.slane %v538, 1
        %v701 = vsel %vm615, %v699, %v700
        %v702 = vrot.slane %v539, 1
        %v703 = vrot.slane %v540, 1
        %v704 = vsel %vm615, %v702, %v703
        %v705 = vrot.slane %v541, 1
        %v706 = vrot.slane %v542, 1
        %v707 = vsel %vm615, %v705, %v706
        %v708 = vrot.slane %v543, 1
        %v709 = vrot.slane %v544, 1
        %v710 = vsel %vm615, %v708, %v709
        %v711 = vrot.slane %v545, 1
        %v712 = vrot.slane %v546, 1
        %v713 = vsel %vm615, %v711, %v712
        %v714 = vrot.slane %v547, 1
        %v715 = vrot.slane %v548, 1
        %v716 = vsel %vm615, %v714, %v715
        %v717 = vrot.slane %v549, 1
        %v718 = vrot.slane %v550, 1
        %v719 = vsel %vm615, %v717, %v718
        %v720 = vrot.slane %v551, 1
        %v721 = vrot.slane %v552, 1
        %v722 = vsel %vm615, %v720, %v721
        %v723 = vrot.slane %v553, 1
        %v724 = vrot.slane %v554, 1
        %v725 = vsel %vm615, %v723, %v724
        %v726 = vrot.slane %v555, 1
        %v727 = vrot.slane %v556, 1
        %v728 = vsel %vm615, %v726, %v727
        %v729 = vrot.slane %v557, 1
        %v730 = vrot.slane %v558, 1
        %v731 = vsel %vm615, %v729, %v730
        %v732 = vrot.slane %v559, 1
        %v733 = vrot.slane %v560, 1
        %v734 = vsel %vm615, %v732, %v733
        %v735 = vrot.slane %v561, 1
        %v736 = vrot.slane %v562, 1
        %v737 = vsel %vm615, %v735, %v736
        %v738 = vrot.slane %v563, 1
        %v739 = vrot.slane %v564, 1
        %v740 = vsel %vm615, %v738, %v739
        %v741 = vrot.slane %v565, 1
        %v742 = vrot.slane %v566, 1
        %v743 = vsel %vm615, %v741, %v742
        %v748 = vrot.slane %v497, 1
        %v749 = vrot.slane %v498, 1
        %v750 = vsel %vm615, %v748, %v749
        %v751 = vrot.slane %v515, 1
        %v752 = vrot.slane %v516, 1
        %v753 = vsel %vm615, %v751, %v752
        %770 = vrot.lane.b32.xlu0 %v517, 8
        %v771 = vpop.permute.xlu0 %770
        %772 = vrot.lane.b32.xlu0 %v518, 8
        %v773 = vpop.permute.xlu0 %772
        %774 = vrot.lane.b32.xlu0 %v519, 8
        %v775 = vpop.permute.xlu0 %774
        %776 = vrot.lane.b32.xlu0 %v520, 8
        %v777 = vpop.permute.xlu0 %776
        %778 = vrot.lane.b32.xlu0 %v521, 8
        %v779 = vpop.permute.xlu0 %778
        %780 = vrot.lane.b32.xlu0 %v522, 8
        %v781 = vpop.permute.xlu0 %780
        %782 = vrot.lane.b32.xlu0 %v523, 8
        %v783 = vpop.permute.xlu0 %782
        %784 = vrot.lane.b32.xlu0 %v524, 8
        %v785 = vpop.permute.xlu0 %784
        %786 = vrot.lane.b32.xlu0 %v526, 8
        %v787 = vpop.permute.xlu0 %786
        %788 = vrot.lane.b32.xlu0 %v527, 8
        %v789 = vpop.permute.xlu0 %788
        %790 = vrot.lane.b32.xlu0 %v528, 8
        %v791 = vpop.permute.xlu0 %790
        %792 = vrot.lane.b32.xlu0 %v529, 8
        %v793 = vpop.permute.xlu0 %792
        %794 = vrot.lane.b32.xlu0 %v530, 8
        %v795 = vpop.permute.xlu0 %794
        %796 = vrot.lane.b32.xlu0 %v531, 8
        %v797 = vpop.permute.xlu0 %796
        %798 = vrot.lane.b32.xlu0 %v532, 8
        %v799 = vpop.permute.xlu0 %798
        %800 = vrot.lane.b32.xlu0 %v533, 8
        %v801 = vpop.permute.xlu0 %800
        %818 = vrot.lane.b32.xlu0 %v618, 16
        %v819 = vpop.permute.xlu0 %818
        %820 = vrot.lane.b32.xlu0 %v621, 16
        %v821 = vpop.permute.xlu0 %820
        %822 = vrot.lane.b32.xlu0 %v624, 16
        %v823 = vpop.permute.xlu0 %822
        %824 = vrot.lane.b32.xlu0 %v627, 16
        %v825 = vpop.permute.xlu0 %824
        %826 = vrot.lane.b32.xlu0 %v630, 16
        %v827 = vpop.permute.xlu0 %826
        %828 = vrot.lane.b32.xlu0 %v633, 16
        %v829 = vpop.permute.xlu0 %828
        %830 = vrot.lane.b32.xlu0 %v636, 16
        %v831 = vpop.permute.xlu0 %830
        %832 = vrot.lane.b32.xlu0 %v639, 16
        %v833 = vpop.permute.xlu0 %832
        %834 = vrot.lane.b32.xlu0 %v642, 16
        %v835 = vpop.permute.xlu0 %834
        %836 = vrot.lane.b32.xlu0 %v645, 16
        %v837 = vpop.permute.xlu0 %836
        %838 = vrot.lane.b32.xlu0 %v648, 16
        %v839 = vpop.permute.xlu0 %838
        %840 = vrot.lane.b32.xlu0 %v651, 16
        %v841 = vpop.permute.xlu0 %840
        %842 = vrot.lane.b32.xlu0 %v654, 16
        %v843 = vpop.permute.xlu0 %842
        %844 = vrot.lane.b32.xlu0 %v657, 16
        %v845 = vpop.permute.xlu0 %844
        %846 = vrot.lane.b32.xlu0 %v660, 16
        %v847 = vpop.permute.xlu0 %846
        %848 = vrot.lane.b32.xlu0 %v663, 16
        %v849 = vpop.permute.xlu0 %848
        %866 = vrot.lane.b32.xlu0 %v535, 24
        %v867 = vpop.permute.xlu0 %866
        %868 = vrot.lane.b32.xlu0 %v537, 24
        %v869 = vpop.permute.xlu0 %868
        %870 = vrot.lane.b32.xlu0 %v539, 24
        %v871 = vpop.permute.xlu0 %870
        %872 = vrot.lane.b32.xlu0 %v541, 24
        %v873 = vpop.permute.xlu0 %872
        %874 = vrot.lane.b32.xlu0 %v543, 24
        %v875 = vpop.permute.xlu0 %874
        %876 = vrot.lane.b32.xlu0 %v545, 24
        %v877 = vpop.permute.xlu0 %876
        %878 = vrot.lane.b32.xlu0 %v547, 24
        %v879 = vpop.permute.xlu0 %878
        %880 = vrot.lane.b32.xlu0 %v549, 24
        %v881 = vpop.permute.xlu0 %880
        %882 = vrot.lane.b32.xlu0 %v551, 24
        %v883 = vpop.permute.xlu0 %882
        %884 = vrot.lane.b32.xlu0 %v553, 24
        %v885 = vpop.permute.xlu0 %884
        %886 = vrot.lane.b32.xlu0 %v555, 24
        %v887 = vpop.permute.xlu0 %886
        %888 = vrot.lane.b32.xlu0 %v557, 24
        %v889 = vpop.permute.xlu0 %888
        %890 = vrot.lane.b32.xlu0 %v559, 24
        %v891 = vpop.permute.xlu0 %890
        %892 = vrot.lane.b32.xlu0 %v561, 24
        %v893 = vpop.permute.xlu0 %892
        %894 = vrot.lane.b32.xlu0 %v563, 24
        %v895 = vpop.permute.xlu0 %894
        %896 = vrot.lane.b32.xlu0 %v565, 24
        %v897 = vpop.permute.xlu0 %896
        %930 = vrot.lane.b32.xlu0 %v567, 32
        %v931 = vpop.permute.xlu0 %930
        %932 = vrot.lane.b32.xlu0 %v568, 32
        %v933 = vpop.permute.xlu0 %932
        %934 = vrot.lane.b32.xlu0 %v569, 32
        %v935 = vpop.permute.xlu0 %934
        %936 = vrot.lane.b32.xlu0 %v570, 32
        %v937 = vpop.permute.xlu0 %936
        %938 = vrot.lane.b32.xlu0 %v571, 32
        %v939 = vpop.permute.xlu0 %938
        %940 = vrot.lane.b32.xlu0 %v572, 32
        %v941 = vpop.permute.xlu0 %940
        %942 = vrot.lane.b32.xlu0 %v573, 32
        %v943 = vpop.permute.xlu0 %942
        %944 = vrot.lane.b32.xlu0 %v574, 32
        %v945 = vpop.permute.xlu0 %944
        %946 = vrot.lane.b32.xlu0 %v575, 32
        %v947 = vpop.permute.xlu0 %946
        %948 = vrot.lane.b32.xlu0 %v576, 32
        %v949 = vpop.permute.xlu0 %948
        %950 = vrot.lane.b32.xlu0 %v577, 32
        %v951 = vpop.permute.xlu0 %950
        %952 = vrot.lane.b32.xlu0 %v578, 32
        %v953 = vpop.permute.xlu0 %952
        %954 = vrot.lane.b32.xlu0 %v579, 32
        %v955 = vpop.permute.xlu0 %954
        %956 = vrot.lane.b32.xlu0 %v580, 32
        %v957 = vpop.permute.xlu0 %956
        %958 = vrot.lane.b32.xlu0 %v581, 32
        %v959 = vpop.permute.xlu0 %958
        %960 = vrot.lane.b32.xlu0 %v582, 32
        %v961 = vpop.permute.xlu0 %960
        %978 = vrot.lane.b32.xlu0 %v698, 40
        %v979 = vpop.permute.xlu0 %978
        %980 = vrot.lane.b32.xlu0 %v701, 40
        %v981 = vpop.permute.xlu0 %980
        %982 = vrot.lane.b32.xlu0 %v704, 40
        %v983 = vpop.permute.xlu0 %982
        %984 = vrot.lane.b32.xlu0 %v707, 40
        %v985 = vpop.permute.xlu0 %984
        %986 = vrot.lane.b32.xlu0 %v710, 40
        %v987 = vpop.permute.xlu0 %986
        %988 = vrot.lane.b32.xlu0 %v713, 40
        %v989 = vpop.permute.xlu0 %988
        %990 = vrot.lane.b32.xlu0 %v716, 40
        %v991 = vpop.permute.xlu0 %990
        %992 = vrot.lane.b32.xlu0 %v719, 40
        %v993 = vpop.permute.xlu0 %992
        %994 = vrot.lane.b32.xlu0 %v722, 40
        %v995 = vpop.permute.xlu0 %994
        %996 = vrot.lane.b32.xlu0 %v725, 40
        %v997 = vpop.permute.xlu0 %996
        %998 = vrot.lane.b32.xlu0 %v728, 40
        %v999 = vpop.permute.xlu0 %998
        %1000 = vrot.lane.b32.xlu0 %v731, 40
        %v1001 = vpop.permute.xlu0 %1000
        %1002 = vrot.lane.b32.xlu0 %v734, 40
        %v1003 = vpop.permute.xlu0 %1002
        %1004 = vrot.lane.b32.xlu0 %v737, 40
        %v1005 = vpop.permute.xlu0 %1004
        %1006 = vrot.lane.b32.xlu0 %v740, 40
        %v1007 = vpop.permute.xlu0 %1006
        %1008 = vrot.lane.b32.xlu0 %v743, 40
        %v1009 = vpop.permute.xlu0 %1008
        %1026 = vrot.lane.b32.xlu0 %v483, 48
        %v1027 = vpop.permute.xlu0 %1026
        %1028 = vrot.lane.b32.xlu0 %v485, 48
        %v1029 = vpop.permute.xlu0 %1028
        %1030 = vrot.lane.b32.xlu0 %v487, 48
        %v1031 = vpop.permute.xlu0 %1030
        %1032 = vrot.lane.b32.xlu0 %v489, 48
        %v1033 = vpop.permute.xlu0 %1032
        %1034 = vrot.lane.b32.xlu0 %v491, 48
        %v1035 = vpop.permute.xlu0 %1034
        %1036 = vrot.lane.b32.xlu0 %v493, 48
        %v1037 = vpop.permute.xlu0 %1036
        %1038 = vrot.lane.b32.xlu0 %v495, 48
        %v1039 = vpop.permute.xlu0 %1038
        %1040 = vrot.lane.b32.xlu0 %v497, 48
        %v1041 = vpop.permute.xlu0 %1040
        %1042 = vrot.lane.b32.xlu0 %v501, 48
        %v1043 = vpop.permute.xlu0 %1042
        %1044 = vrot.lane.b32.xlu0 %v503, 48
        %v1045 = vpop.permute.xlu0 %1044
        %1046 = vrot.lane.b32.xlu0 %v505, 48
        %v1047 = vpop.permute.xlu0 %1046
        %1048 = vrot.lane.b32.xlu0 %v507, 48
        %v1049 = vpop.permute.xlu0 %1048
        %1050 = vrot.lane.b32.xlu0 %v509, 48
        %v1051 = vpop.permute.xlu0 %1050
        %1052 = vrot.lane.b32.xlu0 %v511, 48
        %v1053 = vpop.permute.xlu0 %1052
        %1054 = vrot.lane.b32.xlu0 %v513, 48
        %v1055 = vpop.permute.xlu0 %1054
        %1056 = vrot.lane.b32.xlu0 %v515, 48
        %v1057 = vpop.permute.xlu0 %1056
        %1076 = vrot.lane.b32.xlu0 %v518, 56
        %v1077 = vpop.permute.xlu0 %1076
        %1078 = vrot.lane.b32.xlu0 %v519, 56
        %v1079 = vpop.permute.xlu0 %1078
        %1080 = vrot.lane.b32.xlu0 %v520, 56
        %v1081 = vpop.permute.xlu0 %1080
        %1082 = vrot.lane.b32.xlu0 %v521, 56
        %v1083 = vpop.permute.xlu0 %1082
        %1084 = vrot.lane.b32.xlu0 %v522, 56
        %v1085 = vpop.permute.xlu0 %1084
        %1086 = vrot.lane.b32.xlu0 %v523, 56
        %v1087 = vpop.permute.xlu0 %1086
        %1088 = vrot.lane.b32.xlu0 %v524, 56
        %v1089 = vpop.permute.xlu0 %1088
        %1090 = vrot.lane.b32.xlu0 %v525, 56
        %v1091 = vpop.permute.xlu0 %1090
        %1092 = vrot.lane.b32.xlu0 %v527, 56
        %v1093 = vpop.permute.xlu0 %1092
        %1094 = vrot.lane.b32.xlu0 %v528, 56
        %v1095 = vpop.permute.xlu0 %1094
        %1096 = vrot.lane.b32.xlu0 %v529, 56
        %v1097 = vpop.permute.xlu0 %1096
        %1098 = vrot.lane.b32.xlu0 %v530, 56
        %v1099 = vpop.permute.xlu0 %1098
        %1100 = vrot.lane.b32.xlu0 %v531, 56
        %v1101 = vpop.permute.xlu0 %1100
        %1102 = vrot.lane.b32.xlu0 %v532, 56
        %v1103 = vpop.permute.xlu0 %1102
        %1104 = vrot.lane.b32.xlu0 %v533, 56
        %v1105 = vpop.permute.xlu0 %1104
        %1106 = vrot.lane.b32.xlu0 %v534, 56
        %v1107 = vpop.permute.xlu0 %1106
        %1124 = vrot.lane.b32.xlu0 %v621, 64
        %v1125 = vpop.permute.xlu0 %1124
        %1126 = vrot.lane.b32.xlu0 %v624, 64
        %v1127 = vpop.permute.xlu0 %1126
        %1128 = vrot.lane.b32.xlu0 %v627, 64
        %v1129 = vpop.permute.xlu0 %1128
        %1130 = vrot.lane.b32.xlu0 %v630, 64
        %v1131 = vpop.permute.xlu0 %1130
        %1132 = vrot.lane.b32.xlu0 %v633, 64
        %v1133 = vpop.permute.xlu0 %1132
        %1134 = vrot.lane.b32.xlu0 %v636, 64
        %v1135 = vpop.permute.xlu0 %1134
        %1136 = vrot.lane.b32.xlu0 %v639, 64
        %v1137 = vpop.permute.xlu0 %1136
        %1138 = vrot.lane.b32.xlu0 %v750, 64
        %v1139 = vpop.permute.xlu0 %1138
        %1140 = vrot.lane.b32.xlu0 %v645, 64
        %v1141 = vpop.permute.xlu0 %1140
        %1142 = vrot.lane.b32.xlu0 %v648, 64
        %v1143 = vpop.permute.xlu0 %1142
        %1144 = vrot.lane.b32.xlu0 %v651, 64
        %v1145 = vpop.permute.xlu0 %1144
        %1146 = vrot.lane.b32.xlu0 %v654, 64
        %v1147 = vpop.permute.xlu0 %1146
        %1148 = vrot.lane.b32.xlu0 %v657, 64
        %v1149 = vpop.permute.xlu0 %1148
        %1150 = vrot.lane.b32.xlu0 %v660, 64
        %v1151 = vpop.permute.xlu0 %1150
        %1152 = vrot.lane.b32.xlu0 %v663, 64
        %v1153 = vpop.permute.xlu0 %1152
        %1154 = vrot.lane.b32.xlu0 %v753, 64
        %v1155 = vpop.permute.xlu0 %1154
        %vm1172 = vcmask 64512
        %v1173 = vsel %vm1172, %v481, %v771
        %v1174 = vsel %vm1172, %v483, %v773
        %v1175 = vsel %vm1172, %v485, %v775
        %v1176 = vsel %vm1172, %v487, %v777
        %v1177 = vsel %vm1172, %v489, %v779
        %v1178 = vsel %vm1172, %v491, %v781
        %v1179 = vsel %vm1172, %v493, %v783
        %v1180 = vsel %vm1172, %v495, %v785
        %v1181 = vsel %vm1172, %v499, %v787
        %v1182 = vsel %vm1172, %v501, %v789
        %v1183 = vsel %vm1172, %v503, %v791
        %v1184 = vsel %vm1172, %v505, %v793
        %v1185 = vsel %vm1172, %v507, %v795
        %v1186 = vsel %vm1172, %v509, %v797
        %v1187 = vsel %vm1172, %v511, %v799
        %v1188 = vsel %vm1172, %v513, %v801
        %vm1189 = vcmask 130048
        %v1190 = vsel %vm1189, %v1173, %v819
        %v1191 = vsel %vm1189, %v1174, %v821
        %v1192 = vsel %vm1189, %v1175, %v823
        %v1193 = vsel %vm1189, %v1176, %v825
        %v1194 = vsel %vm1189, %v1177, %v827
        %v1195 = vsel %vm1189, %v1178, %v829
        %v1196 = vsel %vm1189, %v1179, %v831
        %v1197 = vsel %vm1189, %v1180, %v833
        %v1198 = vsel %vm1189, %v1181, %v835
        %v1199 = vsel %vm1189, %v1182, %v837
        %v1200 = vsel %vm1189, %v1183, %v839
        %v1201 = vsel %vm1189, %v1184, %v841
        %v1202 = vsel %vm1189, %v1185, %v843
        %v1203 = vsel %vm1189, %v1186, %v845
        %v1204 = vsel %vm1189, %v1187, %v847
        %v1205 = vsel %vm1189, %v1188, %v849
        %vm1206 = vcmask 195584
        %v1207 = vsel %vm1206, %v1190, %v867
        %v1208 = vsel %vm1206, %v1191, %v869
        %v1209 = vsel %vm1206, %v1192, %v871
        %v1210 = vsel %vm1206, %v1193, %v873
        %v1211 = vsel %vm1206, %v1194, %v875
        %v1212 = vsel %vm1206, %v1195, %v877
        %v1213 = vsel %vm1206, %v1196, %v879
        %v1214 = vsel %vm1206, %v1197, %v881
        %v1215 = vsel %vm1206, %v1198, %v883
        %v1216 = vsel %vm1206, %v1199, %v885
        %v1217 = vsel %vm1206, %v1200, %v887
        %v1218 = vsel %vm1206, %v1201, %v889
        %v1219 = vsel %vm1206, %v1202, %v891
        %v1220 = vsel %vm1206, %v1203, %v893
        %v1221 = vsel %vm1206, %v1204, %v895
        %v1222 = vsel %vm1206, %v1205, %v897
        %vm1223 = vcmask 261120
        %v1224 = vsel %vm1223, %v1207, %v931
        %v1225 = vsel %vm1223, %v1208, %v933
        %v1226 = vsel %vm1223, %v1209, %v935
        %v1227 = vsel %vm1223, %v1210, %v937
        %v1228 = vsel %vm1223, %v1211, %v939
        %v1229 = vsel %vm1223, %v1212, %v941
        %v1230 = vsel %vm1223, %v1213, %v943
        %v1231 = vsel %vm1223, %v1214, %v945
        %v1232 = vsel %vm1223, %v1215, %v947
        %v1233 = vsel %vm1223, %v1216, %v949
        %v1234 = vsel %vm1223, %v1217, %v951
        %v1235 = vsel %vm1223, %v1218, %v953
        %v1236 = vsel %vm1223, %v1219, %v955
        %v1237 = vsel %vm1223, %v1220, %v957
        %v1238 = vsel %vm1223, %v1221, %v959
        %v1239 = vsel %vm1223, %v1222, %v961
        %vm1240 = vcmask 326656
        %v1241 = vsel %vm1240, %v1224, %v979
        %v1242 = vsel %vm1240, %v1225, %v981
        %v1243 = vsel %vm1240, %v1226, %v983
        %v1244 = vsel %vm1240, %v1227, %v985
        %v1245 = vsel %vm1240, %v1228, %v987
        %v1246 = vsel %vm1240, %v1229, %v989
        %v1247 = vsel %vm1240, %v1230, %v991
        %v1248 = vsel %vm1240, %v1231, %v993
        %v1249 = vsel %vm1240, %v1232, %v995
        %v1250 = vsel %vm1240, %v1233, %v997
        %v1251 = vsel %vm1240, %v1234, %v999
        %v1252 = vsel %vm1240, %v1235, %v1001
        %v1253 = vsel %vm1240, %v1236, %v1003
        %v1254 = vsel %vm1240, %v1237, %v1005
        %v1255 = vsel %vm1240, %v1238, %v1007
        %v1256 = vsel %vm1240, %v1239, %v1009
        %vm1257 = vcmask 392192
        %v1258 = vsel %vm1257, %v1241, %v1027
        %v1259 = vsel %vm1257, %v1242, %v1029
        %v1260 = vsel %vm1257, %v1243, %v1031
        %v1261 = vsel %vm1257, %v1244, %v1033
        %v1262 = vsel %vm1257, %v1245, %v1035
        %v1263 = vsel %vm1257, %v1246, %v1037
        %v1264 = vsel %vm1257, %v1247, %v1039
        %v1265 = vsel %vm1257, %v1248, %v1041
        %v1266 = vsel %vm1257, %v1249, %v1043
        %v1267 = vsel %vm1257, %v1250, %v1045
        %v1268 = vsel %vm1257, %v1251, %v1047
        %v1269 = vsel %vm1257, %v1252, %v1049
        %v1270 = vsel %vm1257, %v1253, %v1051
        %v1271 = vsel %vm1257, %v1254, %v1053
        %v1272 = vsel %vm1257, %v1255, %v1055
        %v1273 = vsel %vm1257, %v1256, %v1057
        %vm1274 = vcmask 457728
        %v1275 = vsel %vm1274, %v1258, %v1077
        %v1276 = vsel %vm1274, %v1259, %v1079
        %v1277 = vsel %vm1274, %v1260, %v1081
        %v1278 = vsel %vm1274, %v1261, %v1083
        %v1279 = vsel %vm1274, %v1262, %v1085
        %v1280 = vsel %vm1274, %v1263, %v1087
        %v1281 = vsel %vm1274, %v1264, %v1089
        %v1282 = vsel %vm1274, %v1265, %v1091
        %v1283 = vsel %vm1274, %v1266, %v1093
        %v1284 = vsel %vm1274, %v1267, %v1095
        %v1285 = vsel %vm1274, %v1268, %v1097
        %v1286 = vsel %vm1274, %v1269, %v1099
        %v1287 = vsel %vm1274, %v1270, %v1101
        %v1288 = vsel %vm1274, %v1271, %v1103
        %v1289 = vsel %vm1274, %v1272, %v1105
        %v1290 = vsel %vm1274, %v1273, %v1107
        %vm1291 = vcmask 523264
        %v1292 = vsel %vm1291, %v1275, %v1125
        %v1293 = vsel %vm1291, %v1276, %v1127
        %v1294 = vsel %vm1291, %v1277, %v1129
        %v1295 = vsel %vm1291, %v1278, %v1131
        %v1296 = vsel %vm1291, %v1279, %v1133
        %v1297 = vsel %vm1291, %v1280, %v1135
        %v1298 = vsel %vm1291, %v1281, %v1137
        %v1299 = vsel %vm1291, %v1282, %v1139
        %v1300 = vsel %vm1291, %v1283, %v1141
        %v1301 = vsel %vm1291, %v1284, %v1143
        %v1302 = vsel %vm1291, %v1285, %v1145
        %v1303 = vsel %vm1291, %v1286, %v1147
        %v1304 = vsel %vm1291, %v1287, %v1149
        %v1305 = vsel %vm1291, %v1288, %v1151
        %v1306 = vsel %vm1291, %v1289, %v1153
        %v1307 = vsel %vm1291, %v1290, %v1155
        %v1308 = vpack.c.bf16 %v1293, %v1292
        %v1309 = vpack.c.bf16 %v1295, %v1294
        %v1310 = vpack.c.bf16 %v1297, %v1296
        %v1311 = vpack.c.bf16 %v1299, %v1298
        %v1312 = vpack.c.bf16 %v1301, %v1300
        %v1313 = vpack.c.bf16 %v1303, %v1302
        %v1314 = vpack.c.bf16 %v1305, %v1304
        %v1315 = vpack.c.bf16 %v1307, %v1306
        %v1316 = vld [vmem:[%s467] sm:$0xff]
        %v1317 = vld [vmem:[%s467 + $0x8] sm:$0xff]
        %v1318 = vld [vmem:[%s467 + $0x10] sm:$0xff]
        %v1319 = vld [vmem:[%s467 + $0x18] sm:$0xff]
        %v1320 = vld [vmem:[%s467 + $0x20] sm:$0xff]
        %v1321 = vld [vmem:[%s467 + $0x28] sm:$0xff]
        %v1322 = vld [vmem:[%s467 + $0x30] sm:$0xff]
        %v1323 = vld [vmem:[%s467 + $0x38] sm:$0xff]
        %v1324 = vld [vmem:[%s467 + $0x40] sm:$0xff]
        %v1334 = vunpack.c.l.b16 %v1316
        %v1335 = vunpack.c.h.b16 %v1316
        %v1336 = vunpack.c.l.b16 %v1317
        %v1337 = vunpack.c.h.b16 %v1317
        %v1338 = vunpack.c.l.b16 %v1318
        %v1339 = vunpack.c.h.b16 %v1318
        %v1340 = vunpack.c.l.b16 %v1319
        %v1341 = vunpack.c.h.b16 %v1319
        %v1342 = vunpack.c.l.b16 %v1320
        %v1343 = vunpack.c.h.b16 %v1320
        %v1344 = vunpack.c.l.b16 %v1321
        %v1345 = vunpack.c.h.b16 %v1321
        %v1346 = vunpack.c.l.b16 %v1322
        %v1347 = vunpack.c.h.b16 %v1322
        %v1348 = vunpack.c.l.b16 %v1323
        %v1349 = vunpack.c.h.b16 %v1323
        %v1350 = vunpack.c.l.b16 %v1324
        %v1351 = vunpack.c.h.b16 %v1324
        %v1352 = vpack.c.b16 %v1336, %v1334
        %v1353 = vpack.c.b16 %v1337, %v1335
        %v1354 = vpack.c.b16 %v1340, %v1338
        %v1355 = vpack.c.b16 %v1341, %v1339
        %v1356 = vpack.c.b16 %v1344, %v1342
        %v1357 = vpack.c.b16 %v1345, %v1343
        %v1358 = vpack.c.b16 %v1348, %v1346
        %v1359 = vpack.c.b16 %v1349, %v1347
        %v1360 = vpack.c.b16 %v1350, %v1350
        %v1361 = vpack.c.b16 %v1351, %v1351
        %vm1370 = vcmask 588800
        %v1372 = vsel %vm1370, %v1308, 0
        %v1375 = vsel %vm1370, %v1309, 0
        %v1378 = vsel %vm1370, %v1310, 0
        %v1381 = vsel %vm1370, %v1311, 0
        %v1384 = vsel %vm1370, %v1312, 0
        %v1387 = vsel %vm1370, %v1313, 0
        %v1390 = vsel %vm1370, %v1314, 0
        %v1393 = vsel %vm1370, %v1315, 0
        %vm1395 = vcmask 1043456
        %v1397 = vsel %vm1395, %v1360, 0
        %v1400 = vsel %vm1395, %v1361, 0
        %1402 = vmatprep.subr.bf16.mxu0 %v1353
        %1403 = vmatpush1.bf16.msra.mxu0 %v1352
        %1404 = vmatprep.subr.bf16.mxu0 %v1355
        %1405 = vmatpush1.bf16.msra.mxu0 %v1354
        %1406 = vmatprep.subr.bf16.mxu0 %v1357
        %1407 = vmatpush1.bf16.msra.mxu0 %v1356
        %1408 = vmatprep.subr.bf16.mxu0 %v1359
        %1409 = vmatpush1.bf16.msra.mxu0 %v1358
        %1410 = vmatprep.subr.bf16.mxu0 %v1400
        %1411 = vmatpush1.bf16.msra.mxu0 %v1397
        %1412 = vmatprep.subr.bf16.mxu0 0
        %1413 = vmatpush1.bf16.msra.mxu0 0
        %1414 = vmatprep.subr.bf16.mxu0 0
        %1415 = vmatpush1.bf16.msra.mxu0 0
        %1416 = vmatprep.subr.bf16.mxu0 0
        %1417 = vmatpush1.bf16.msra.mxu0 0
        %1418 = vmatprep.subr.bf16.mxu0 0
        %1419 = vmatpush1.bf16.msra.mxu0 0
        %1420 = vmatprep.subr.bf16.mxu0 0
        %1421 = vmatpush1.bf16.msra.mxu0 0
        %1422 = vmatprep.subr.bf16.mxu0 0
        %1423 = vmatpush1.bf16.msra.mxu0 0
        %1424 = vmatprep.subr.bf16.mxu0 0
        %1425 = vmatpush1.bf16.msra.mxu0 0
        %1426 = vmatprep.subr.bf16.mxu0 0
        %1427 = vmatpush1.bf16.msra.mxu0 0
        %1428 = vmatprep.subr.bf16.mxu0 0
        %1429 = vmatpush1.bf16.msra.mxu0 0
        %1430 = vmatprep.subr.bf16.mxu0 0
        %1431 = vmatpush1.bf16.msra.mxu0 0
        %1432 = vmatprep.subr.bf16.mxu0 0
        %1433 = vmatpush1.bf16.msra.mxu0 0
        %1434 = vmatprep.mubr.bf16.mxu0 0
        %1435 = vmatmul.mubr.bf16.gmra.mrb[0].mxu0 %v1372
        %v1436 = vpop.f32.mrb[0].mxu0
        %v1437 = vadd.f32 0.0, %v1436
        %v1438 = vpop.f32.mrb[0].mxu0
        %v1439 = vadd.f32 0.0, %v1438
        %v1440 = vpop.f32.mrb[0].mxu0
        %v1441 = vadd.f32 0.0, %v1440
        %v1442 = vpop.f32.mrb[0].mxu0
        %v1443 = vadd.f32 0.0, %v1442
        %1444 = vmatprep.mubr.bf16.mxu0 0
        %1445 = vmatmul.mubr.bf16.gmra.mrb[0].mxu0 %v1375
        %v1446 = vpop.f32.mrb[0].mxu0
        %v1447 = vadd.f32 0.0, %v1446
        %v1448 = vpop.f32.mrb[0].mxu0
        %v1449 = vadd.f32 0.0, %v1448
        %v1450 = vpop.f32.mrb[0].mxu0
        %v1451 = vadd.f32 0.0, %v1450
        %v1452 = vpop.f32.mrb[0].mxu0
        %v1453 = vadd.f32 0.0, %v1452
        %1454 = vmatprep.mubr.bf16.mxu0 0
        %1455 = vmatmul.mubr.bf16.gmra.mrb[0].mxu0 %v1378
        %v1456 = vpop.f32.mrb[0].mxu0
        %v1457 = vadd.f32 0.0, %v1456
        %v1458 = vpop.f32.mrb[0].mxu0
        %v1459 = vadd.f32 0.0, %v1458
        %v1460 = vpop.f32.mrb[0].mxu0
        %v1461 = vadd.f32 0.0, %v1460
        %v1462 = vpop.f32.mrb[0].mxu0
        %v1463 = vadd.f32 0.0, %v1462
        %1464 = vmatprep.mubr.bf16.mxu0 0
        %1465 = vmatmul.mubr.bf16.gmra.mrb[0].mxu0 %v1381
        %v1466 = vpop.f32.mrb[0].mxu0
        %v1467 = vadd.f32 0.0, %v1466
        %v1468 = vpop.f32.mrb[0].mxu0
        %v1469 = vadd.f32 0.0, %v1468
        %v1470 = vpop.f32.mrb[0].mxu0
        %v1471 = vadd.f32 0.0, %v1470
        %v1472 = vpop.f32.mrb[0].mxu0
        %v1473 = vadd.f32 0.0, %v1472
        %1474 = vmatprep.mubr.bf16.mxu0 0
        %1475 = vmatmul.mubr.bf16.gmra.mrb[0].mxu0 %v1384
        %v1476 = vpop.f32.mrb[0].mxu0
        %v1477 = vadd.f32 0.0, %v1476
        %v1478 = vpop.f32.mrb[0].mxu0
        %v1479 = vadd.f32 0.0, %v1478
        %v1480 = vpop.f32.mrb[0].mxu0
        %v1481 = vadd.f32 0.0, %v1480
        %v1482 = vpop.f32.mrb[0].mxu0
        %v1483 = vadd.f32 0.0, %v1482
        %1484 = vmatprep.mubr.bf16.mxu0 0
        %1485 = vmatmul.mubr.bf16.gmra.mrb[0].mxu0 %v1387
        %v1486 = vpop.f32.mrb[0].mxu0
        %v1487 = vadd.f32 0.0, %v1486
        %v1488 = vpop.f32.mrb[0].mxu0
        %v1489 = vadd.f32 0.0, %v1488
        %v1490 = vpop.f32.mrb[0].mxu0
        %v1491 = vadd.f32 0.0, %v1490
        %v1492 = vpop.f32.mrb[0].mxu0
        %v1493 = vadd.f32 0.0, %v1492
        %1494 = vmatprep.mubr.bf16.mxu0 0
        %1495 = vmatmul.mubr.bf16.gmra.mrb[0].mxu0 %v1390
        %v1496 = vpop.f32.mrb[0].mxu0
        %v1497 = vadd.f32 0.0, %v1496
        %v1498 = vpop.f32.mrb[0].mxu0
        %v1499 = vadd.f32 0.0, %v1498
        %v1500 = vpop.f32.mrb[0].mxu0
        %v1501 = vadd.f32 0.0, %v1500
        %v1502 = vpop.f32.mrb[0].mxu0
        %v1503 = vadd.f32 0.0, %v1502
        %1504 = vmatprep.mubr.bf16.mxu0 0
        %1505 = vmatmul.mubr.bf16.gmra.mrb[0].mxu0 %v1393
        %v1506 = vpop.f32.mrb[0].mxu0
        %v1507 = vadd.f32 0.0, %v1506
        %v1508 = vpop.f32.mrb[0].mxu0
        %v1509 = vadd.f32 0.0, %v1508
        %v1510 = vpop.f32.mrb[0].mxu0
        %v1511 = vadd.f32 0.0, %v1510
        %v1512 = vpop.f32.mrb[0].mxu0
        %v1513 = vadd.f32 0.0, %v1512
        %1514 = vdwg.mxu0
        %v1515 = vld [vmem:[%s6] sm:$0x1]
        %v1517 = vlaneseq
        %v1518 = vshrl.u32 %v1517, 7
        %v1519 = vsub.s32 0, %v1518
        %v1520 = vrot.slane %v1515, %v1519
        %v1522 = vadd.f32 %v1439, %v1520
        %v1523 = vadd.f32 %v1443, %v1520
        %v1524 = vadd.f32 %v1449, %v1520
        %v1525 = vadd.f32 %v1453, %v1520
        %v1526 = vadd.f32 %v1459, %v1520
        %v1527 = vadd.f32 %v1463, %v1520
        %v1528 = vadd.f32 %v1469, %v1520
        %v1529 = vadd.f32 %v1473, %v1520
        %v1530 = vadd.f32 %v1479, %v1520
        %v1531 = vadd.f32 %v1483, %v1520
        %v1532 = vadd.f32 %v1489, %v1520
        %v1533 = vadd.f32 %v1493, %v1520
        %v1534 = vadd.f32 %v1499, %v1520
        %v1535 = vadd.f32 %v1503, %v1520
        %v1536 = vadd.f32 %v1509, %v1520
        %v1537 = vadd.f32 %v1513, %v1520
        %v1538 = vld [vmem:[%s470] sm:$0x1]
        %v1540 = vlaneseq
        %v1541 = vshrl.u32 %v1540, 7
        %v1542 = vsub.s32 0, %v1541
        %v1543 = vrot.slane %v1538, %v1542
        %v1545 = vadd.f32 %v1437, %v1543
        %v1546 = vadd.f32 %v1441, %v1543
        %v1547 = vadd.f32 %v1447, %v1543
        %v1548 = vadd.f32 %v1451, %v1543
        %v1549 = vadd.f32 %v1457, %v1543
        %v1550 = vadd.f32 %v1461, %v1543
        %v1551 = vadd.f32 %v1467, %v1543
        %v1552 = vadd.f32 %v1471, %v1543
        %v1553 = vadd.f32 %v1477, %v1543
        %v1554 = vadd.f32 %v1481, %v1543
        %v1555 = vadd.f32 %v1487, %v1543
        %v1556 = vadd.f32 %v1491, %v1543
        %v1557 = vadd.f32 %v1497, %v1543
        %v1558 = vadd.f32 %v1501, %v1543
        %v1559 = vadd.f32 %v1507, %v1543
        %v1560 = vadd.f32 %v1511, %v1543
        %v1561 = vmax.f32 %v1545, 0.0
        %v1562 = vmax.f32 %v1546, 0.0
        %v1563 = vmax.f32 %v1547, 0.0
        %v1564 = vmax.f32 %v1548, 0.0
        %v1565 = vmax.f32 %v1549, 0.0
        %v1566 = vmax.f32 %v1550, 0.0
        %v1567 = vmax.f32 %v1551, 0.0
        %v1568 = vmax.f32 %v1552, 0.0
        %v1569 = vmax.f32 %v1553, 0.0
        %v1570 = vmax.f32 %v1554, 0.0
        %v1571 = vmax.f32 %v1555, 0.0
        %v1572 = vmax.f32 %v1556, 0.0
        %v1573 = vmax.f32 %v1557, 0.0
        %v1574 = vmax.f32 %v1558, 0.0
        %v1575 = vmax.f32 %v1559, 0.0
        %v1576 = vmax.f32 %v1560, 0.0
        %1577 = vst [vmem:[#allocation2] sm:$0xff] 0.0
        %1578 = vst [vmem:[#allocation2 + $0x8] sm:$0x3] 0.0
        %1579 = vst [vmem:[#allocation2 + $0xa0] sm:$0xff] 0.0
        %1580 = vst [vmem:[#allocation2 + $0xa8] sm:$0x3] 0.0
        %s1581 = scalar_lea.vmem [#allocation2], 144
        %1582 = vst [vmem:[%s1581] sm:$0xff] 0.0
        %1583 = vst [vmem:[%s1581 + $0x8] sm:$0x3] 0.0
        %1584 = vst [vmem:[%s1581 + $0xa0] sm:$0xff] 0.0
        %1585 = vst [vmem:[%s1581 + $0xa8] sm:$0x3] 0.0
        %s1586 = scalar_lea.vmem [#allocation2], 16
        %1587 = vst [vmem:[%s1586] sm:$0x1] 0.0
        %1588 = vst [vmem:[%s1586 + $0x10] sm:$0x1] 0.0
        %1589 = vst [vmem:[%s1586 + $0x20] sm:$0x1] 0.0
        %1590 = vst [vmem:[%s1586 + $0x30] sm:$0x1] 0.0
        %1591 = vst [vmem:[%s1586 + $0x40] sm:$0x1] 0.0
        %1592 = vst [vmem:[%s1586 + $0x50] sm:$0x1] 0.0
        %1593 = vst [vmem:[%s1586 + $0x60] sm:$0x1] 0.0
        %1594 = vst [vmem:[%s1586 + $0x70] sm:$0x1] 0.0
        %1595 = vst [vmem:[%s1586 + $0xa0] sm:$0x1] 0.0
        %1596 = vst [vmem:[%s1586 + $0xb0] sm:$0x1] 0.0
        %1597 = vst [vmem:[%s1586 + $0xc0] sm:$0x1] 0.0
        %1598 = vst [vmem:[%s1586 + $0xd0] sm:$0x1] 0.0
        %1599 = vst [vmem:[%s1586 + $0xe0] sm:$0x1] 0.0
        %1600 = vst [vmem:[%s1586 + $0xf0] sm:$0x1] 0.0
        %1601 = vst [vmem:[%s1586 + $0x100] sm:$0x1] 0.0
        %1602 = vst [vmem:[%s1586 + $0x110] sm:$0x1] 0.0
        %1603 = vst [vmem:[%s1586 + $0x9] sm:$0x1] 0.0
        %1604 = vst [vmem:[%s1586 + $0x19] sm:$0x1] 0.0
        %1605 = vst [vmem:[%s1586 + $0x29] sm:$0x1] 0.0
        %1606 = vst [vmem:[%s1586 + $0x39] sm:$0x1] 0.0
        %1607 = vst [vmem:[%s1586 + $0x49] sm:$0x1] 0.0
        %1608 = vst [vmem:[%s1586 + $0x59] sm:$0x1] 0.0
        %1609 = vst [vmem:[%s1586 + $0x69] sm:$0x1] 0.0
        %1610 = vst [vmem:[%s1586 + $0x79] sm:$0x1] 0.0
        %1611 = vst [vmem:[%s1586 + $0xa9] sm:$0x1] 0.0
        %1612 = vst [vmem:[%s1586 + $0xb9] sm:$0x1] 0.0
        %1613 = vst [vmem:[%s1586 + $0xc9] sm:$0x1] 0.0
        %1614 = vst [vmem:[%s1586 + $0xd9] sm:$0x1] 0.0
        %1615 = vst [vmem:[%s1586 + $0xe9] sm:$0x1] 0.0
        %1616 = vst [vmem:[%s1586 + $0xf9] sm:$0x1] 0.0
        %1617 = vst [vmem:[%s1586 + $0x109] sm:$0x1] 0.0
        %1618 = vst [vmem:[%s1586 + $0x119] sm:$0x1] 0.0
        %1619 = vst [vmem:[%s1586 + $0x1] sm:$0xff] %v1561
        %1620 = vst [vmem:[%s1586 + $0x11] sm:$0xff] %v1562
        %1621 = vst [vmem:[%s1586 + $0x21] sm:$0xff] %v1563
        %1622 = vst [vmem:[%s1586 + $0x31] sm:$0xff] %v1564
        %1623 = vst [vmem:[%s1586 + $0x41] sm:$0xff] %v1565
        %1624 = vst [vmem:[%s1586 + $0x51] sm:$0xff] %v1566
        %1625 = vst [vmem:[%s1586 + $0x61] sm:$0xff] %v1567
        %1626 = vst [vmem:[%s1586 + $0x71] sm:$0xff] %v1568
        %1627 = vst [vmem:[%s1586 + $0xa1] sm:$0xff] %v1569
        %1628 = vst [vmem:[%s1586 + $0xb1] sm:$0xff] %v1570
        %1629 = vst [vmem:[%s1586 + $0xc1] sm:$0xff] %v1571
        %1630 = vst [vmem:[%s1586 + $0xd1] sm:$0xff] %v1572
        %1631 = vst [vmem:[%s1586 + $0xe1] sm:$0xff] %v1573
        %1632 = vst [vmem:[%s1586 + $0xf1] sm:$0xff] %v1574
        %1633 = vst [vmem:[%s1586 + $0x101] sm:$0xff] %v1575
        %1634 = vst [vmem:[%s1586 + $0x111] sm:$0xff] %v1576
        %v1635 = vld [vmem:[#allocation2] sm:$0xff]
        %v1636 = vld [vmem:[#allocation2 + $0x8] sm:$0x3]
        %v1637 = vld [vmem:[#allocation2 + $0x10] sm:$0xff]
        %v1638 = vld [vmem:[#allocation2 + $0x18] sm:$0x3]
        %v1639 = vld [vmem:[#allocation2 + $0x20] sm:$0xff]
        %v1640 = vld [vmem:[#allocation2 + $0x28] sm:$0x3]
        %v1641 = vld [vmem:[#allocation2 + $0x30] sm:$0xff]
        %v1642 = vld [vmem:[#allocation2 + $0x38] sm:$0x3]
        %v1643 = vld [vmem:[#allocation2 + $0x40] sm:$0xff]
        %v1644 = vld [vmem:[#allocation2 + $0x48] sm:$0x3]
        %v1645 = vld [vmem:[#allocation2 + $0x50] sm:$0xff]
        %v1646 = vld [vmem:[#allocation2 + $0x58] sm:$0x3]
        %v1647 = vld [vmem:[#allocation2 + $0x60] sm:$0xff]
        %v1648 = vld [vmem:[#allocation2 + $0x68] sm:$0x3]
        %v1649 = vld [vmem:[#allocation2 + $0x70] sm:$0xff]
        %v1650 = vld [vmem:[#allocation2 + $0x78] sm:$0x3]
        %v1651 = vld [vmem:[#allocation2 + $0x80] sm:$0xff]
        %v1652 = vld [vmem:[#allocation2 + $0x88] sm:$0x3]
        %v1653 = vld [vmem:[#allocation2 + $0x90] sm:$0xff]
        %v1654 = vld [vmem:[#allocation2 + $0x98] sm:$0x3]
        %v1655 = vld [vmem:[#allocation2 + $0xa0] sm:$0xff]
        %v1656 = vld [vmem:[#allocation2 + $0xa8] sm:$0x3]
        %v1657 = vld [vmem:[#allocation2 + $0xb0] sm:$0xff]
        %v1658 = vld [vmem:[#allocation2 + $0xb8] sm:$0x3]
        %v1659 = vld [vmem:[#allocation2 + $0xc0] sm:$0xff]
        %v1660 = vld [vmem:[#allocation2 + $0xc8] sm:$0x3]
        %v1661 = vld [vmem:[#allocation2 + $0xd0] sm:$0xff]
        %v1662 = vld [vmem:[#allocation2 + $0xd8] sm:$0x3]
        %v1663 = vld [vmem:[#allocation2 + $0xe0] sm:$0xff]
        %v1664 = vld [vmem:[#allocation2 + $0xe8] sm:$0x3]
        %v1665 = vld [vmem:[#allocation2 + $0xf0] sm:$0xff]
        %v1666 = vld [vmem:[#allocation2 + $0xf8] sm:$0x3]
        %v1667 = vld [vmem:[#allocation2 + $0x100] sm:$0xff]
        %v1668 = vld [vmem:[#allocation2 + $0x108] sm:$0x3]
        %v1669 = vld [vmem:[#allocation2 + $0x110] sm:$0xff]
        %v1670 = vld [vmem:[#allocation2 + $0x118] sm:$0x3]
        %v1671 = vld [vmem:[#allocation2 + $0x120] sm:$0xff]
        %v1672 = vld [vmem:[#allocation2 + $0x128] sm:$0x3]
        %v1673 = vld [vmem:[#allocation2 + $0x130] sm:$0xff]
        %v1674 = vld [vmem:[#allocation2 + $0x138] sm:$0x3]
        %v1675 = vpack.c.bf16 %v1637, %v1635
        %v1676 = vpack.c.bf16 %v1641, %v1639
        %v1677 = vpack.c.bf16 %v1645, %v1643
        %v1678 = vpack.c.bf16 %v1649, %v1647
        %v1679 = vpack.c.bf16 %v1657, %v1655
        %v1680 = vpack.c.bf16 %v1661, %v1659
        %v1681 = vpack.c.bf16 %v1665, %v1663
        %v1682 = vpack.c.bf16 %v1669, %v1667
        %v1683 = vld [vmem:[%s475] sm:$0xf]
        %v1684 = vld [vmem:[%s475 + $0x4] sm:$0xf]
        %v1685 = vld [vmem:[%s475 + $0x8] sm:$0xf]
        %v1686 = vld [vmem:[%s475 + $0xc] sm:$0xf]
        %v1687 = vld [vmem:[%s475 + $0x10] sm:$0xf]
        %v1688 = vld [vmem:[%s475 + $0x14] sm:$0xf]
        %v1689 = vld [vmem:[%s475 + $0x18] sm:$0xf]
        %v1690 = vld [vmem:[%s475 + $0x1c] sm:$0xf]
        %v1691 = vld [vmem:[%s475 + $0x20] sm:$0xf]
        %v1692 = vld [vmem:[%s475 + $0x24] sm:$0xf]
        %v1693 = vld [vmem:[%s475 + $0x28] sm:$0xf]
        %v1694 = vld [vmem:[%s475 + $0x2c] sm:$0xf]
        %v1695 = vld [vmem:[%s475 + $0x30] sm:$0xf]
        %v1696 = vld [vmem:[%s475 + $0x34] sm:$0xf]
        %v1697 = vld [vmem:[%s475 + $0x38] sm:$0xf]
        %v1698 = vld [vmem:[%s475 + $0x3c] sm:$0xf]
        %v1731 = vrot.slane %v1635, 1
        %v1732 = vrot.slane %v1636, 1
        %v1733 = vsel %vm615, %v1731, %v1732
        %v1734 = vrot.slane %v1637, 1
        %v1735 = vrot.slane %v1638, 1
        %v1736 = vsel %vm615, %v1734, %v1735
        %v1737 = vrot.slane %v1639, 1
        %v1738 = vrot.slane %v1640, 1
        %v1739 = vsel %vm615, %v1737, %v1738
        %v1740 = vrot.slane %v1641, 1
        %v1741 = vrot.slane %v1642, 1
        %v1742 = vsel %vm615, %v1740, %v1741
        %v1743 = vrot.slane %v1643, 1
        %v1744 = vrot.slane %v1644, 1
        %v1745 = vsel %vm615, %v1743, %v1744
        %v1746 = vrot.slane %v1645, 1
        %v1747 = vrot.slane %v1646, 1
        %v1748 = vsel %vm615, %v1746, %v1747
        %v1749 = vrot.slane %v1647, 1
        %v1750 = vrot.slane %v1648, 1
        %v1751 = vsel %vm615, %v1749, %v1750
        %v1752 = vrot.slane %v1649, 1
        %v1753 = vrot.slane %v1650, 1
        %v1754 = vsel %vm615, %v1752, %v1753
        %v1755 = vrot.slane %v1655, 1
        %v1756 = vrot.slane %v1656, 1
        %v1757 = vsel %vm615, %v1755, %v1756
        %v1758 = vrot.slane %v1657, 1
        %v1759 = vrot.slane %v1658, 1
        %v1760 = vsel %vm615, %v1758, %v1759
        %v1761 = vrot.slane %v1659, 1
        %v1762 = vrot.slane %v1660, 1
        %v1763 = vsel %vm615, %v1761, %v1762
        %v1764 = vrot.slane %v1661, 1
        %v1765 = vrot.slane %v1662, 1
        %v1766 = vsel %vm615, %v1764, %v1765
        %v1767 = vrot.slane %v1663, 1
        %v1768 = vrot.slane %v1664, 1
        %v1769 = vsel %vm615, %v1767, %v1768
        %v1770 = vrot.slane %v1665, 1
        %v1771 = vrot.slane %v1666, 1
        %v1772 = vsel %vm615, %v1770, %v1771
        %v1773 = vrot.slane %v1667, 1
        %v1774 = vrot.slane %v1668, 1
        %v1775 = vsel %vm615, %v1773, %v1774
        %v1776 = vrot.slane %v1669, 1
        %v1777 = vrot.slane %v1670, 1
        %v1778 = vsel %vm615, %v1776, %v1777
        %v1795 = vpack.c.bf16 %v1736, %v1733
        %v1796 = vpack.c.bf16 %v1742, %v1739
        %v1797 = vpack.c.bf16 %v1748, %v1745
        %v1798 = vpack.c.bf16 %v1754, %v1751
        %v1799 = vpack.c.bf16 %v1760, %v1757
        %v1800 = vpack.c.bf16 %v1766, %v1763
        %v1801 = vpack.c.bf16 %v1772, %v1769
        %v1802 = vpack.c.bf16 %v1778, %v1775
        %v1803 = vld [vmem:[%s475 + $0x40] sm:$0xf]
        %v1804 = vld [vmem:[%s475 + $0x44] sm:$0xf]
        %v1805 = vld [vmem:[%s475 + $0x48] sm:$0xf]
        %v1806 = vld [vmem:[%s475 + $0x4c] sm:$0xf]
        %v1807 = vld [vmem:[%s475 + $0x50] sm:$0xf]
        %v1808 = vld [vmem:[%s475 + $0x54] sm:$0xf]
        %v1809 = vld [vmem:[%s475 + $0x58] sm:$0xf]
        %v1810 = vld [vmem:[%s475 + $0x5c] sm:$0xf]
        %v1811 = vld [vmem:[%s475 + $0x60] sm:$0xf]
        %v1812 = vld [vmem:[%s475 + $0x64] sm:$0xf]
        %v1813 = vld [vmem:[%s475 + $0x68] sm:$0xf]
        %v1814 = vld [vmem:[%s475 + $0x6c] sm:$0xf]
        %v1815 = vld [vmem:[%s475 + $0x70] sm:$0xf]
        %v1816 = vld [vmem:[%s475 + $0x74] sm:$0xf]
        %v1817 = vld [vmem:[%s475 + $0x78] sm:$0xf]
        %v1818 = vld [vmem:[%s475 + $0x7c] sm:$0xf]
        %v1835 = vunpack.c.l.b16 %v1803
        %v1836 = vunpack.c.l.b16 %v1804
        %v1837 = vunpack.c.l.b16 %v1805
        %v1838 = vunpack.c.l.b16 %v1806
        %v1839 = vunpack.c.l.b16 %v1807
        %v1840 = vunpack.c.l.b16 %v1808
        %v1841 = vunpack.c.l.b16 %v1809
        %v1842 = vunpack.c.l.b16 %v1810
        %v1843 = vunpack.c.l.b16 %v1811
        %v1844 = vunpack.c.l.b16 %v1812
        %v1845 = vunpack.c.l.b16 %v1813
        %v1846 = vunpack.c.l.b16 %v1814
        %v1847 = vunpack.c.l.b16 %v1815
        %v1848 = vunpack.c.l.b16 %v1816
        %v1849 = vunpack.c.l.b16 %v1817
        %v1850 = vunpack.c.l.b16 %v1818
        %v1851 = vpack.c.b16 %v1836, %v1835
        %v1852 = vpack.c.b16 %v1838, %v1837
        %v1853 = vpack.c.b16 %v1840, %v1839
        %v1854 = vpack.c.b16 %v1842, %v1841
        %v1855 = vpack.c.b16 %v1844, %v1843
        %v1856 = vpack.c.b16 %v1846, %v1845
        %v1857 = vpack.c.b16 %v1848, %v1847
        %v1858 = vpack.c.b16 %v1850, %v1849
        %1867 = vmatprep.subr.bf16.mxu0 0
        %1868 = vmatpush1.bf16.msra.mxu0 %v1851
        %1869 = vmatprep.subr.bf16.mxu0 0
        %1870 = vmatpush1.bf16.msra.mxu0 %v1852
        %1871 = vmatprep.subr.bf16.mxu0 0
        %1872 = vmatpush1.bf16.msra.mxu0 %v1853
        %1873 = vmatprep.subr.bf16.mxu0 0
        %1874 = vmatpush1.bf16.msra.mxu0 %v1854
        %1875 = vmatprep.subr.bf16.mxu0 0
        %1876 = vmatpush1.bf16.msra.mxu0 %v1855
        %1877 = vmatprep.subr.bf16.mxu0 0
        %1878 = vmatpush1.bf16.msra.mxu0 %v1856
        %1879 = vmatprep.subr.bf16.mxu0 0
        %1880 = vmatpush1.bf16.msra.mxu0 %v1857
        %1881 = vmatprep.subr.bf16.mxu0 0
        %1882 = vmatpush1.bf16.msra.mxu0 %v1858
        %1883 = vmatprep.subr.bf16.mxu0 0
        %1884 = vmatpush1.bf16.msra.mxu0 0
        %1885 = vmatprep.subr.bf16.mxu0 0
        %1886 = vmatpush1.bf16.msra.mxu0 0
        %1887 = vmatprep.subr.bf16.mxu0 0
        %1888 = vmatpush1.bf16.msra.mxu0 0
        %1889 = vmatprep.subr.bf16.mxu0 0
        %1890 = vmatpush1.bf16.msra.mxu0 0
        %1891 = vmatprep.subr.bf16.mxu0 0
        %1892 = vmatpush1.bf16.msra.mxu0 0
        %1893 = vmatprep.subr.bf16.mxu0 0
        %1894 = vmatpush1.bf16.msra.mxu0 0
        %1895 = vmatprep.subr.bf16.mxu0 0
        %1896 = vmatpush1.bf16.msra.mxu0 0
        %1897 = vmatprep.subr.bf16.mxu0 0
        %1898 = vmatpush1.bf16.msra.mxu0 0
        %1899 = vmatprep.mubr.bf16.mxu0 0
        %1900 = vmatmul.mubr.bf16.gmra.mrb[0].mxu0 %v1795
        %v1901 = vpop.f32.mrb[0].mxu0
        %v1902 = vadd.f32 0.0, %v1901
        %v1903 = vpop.f32.mrb[0].mxu0
        %v1904 = vpop.f32.mrb[0].mxu0
        %v1905 = vadd.f32 0.0, %v1904
        %v1906 = vpop.f32.mrb[0].mxu0
        %1907 = vmatprep.mubr.bf16.mxu0 0
        %1908 = vmatmul.mubr.bf16.gmra.mrb[0].mxu0 %v1796
        %v1909 = vpop.f32.mrb[0].mxu0
        %v1910 = vadd.f32 0.0, %v1909
        %v1911 = vpop.f32.mrb[0].mxu0
        %v1912 = vpop.f32.mrb[0].mxu0
        %v1913 = vadd.f32 0.0, %v1912
        %v1914 = vpop.f32.mrb[0].mxu0
        %1915 = vmatprep.mubr.bf16.mxu0 0
        %1916 = vmatmul.mubr.bf16.gmra.mrb[0].mxu0 %v1797
        %v1917 = vpop.f32.mrb[0].mxu0
        %v1918 = vadd.f32 0.0, %v1917
        %v1919 = vpop.f32.mrb[0].mxu0
        %v1920 = vpop.f32.mrb[0].mxu0
        %v1921 = vadd.f32 0.0, %v1920
        %v1922 = vpop.f32.mrb[0].mxu0
        %1923 = vmatprep.mubr.bf16.mxu0 0
        %1924 = vmatmul.mubr.bf16.gmra.mrb[0].mxu0 %v1798
        %v1925 = vpop.f32.mrb[0].mxu0
        %v1926 = vadd.f32 0.0, %v1925
        %v1927 = vpop.f32.mrb[0].mxu0
        %v1928 = vpop.f32.mrb[0].mxu0
        %v1929 = vadd.f32 0.0, %v1928
        %v1930 = vpop.f32.mrb[0].mxu0
        %1931 = vmatprep.mubr.bf16.mxu0 0
        %1932 = vmatmul.mubr.bf16.gmra.mrb[0].mxu0 %v1799
        %v1933 = vpop.f32.mrb[0].mxu0
        %v1934 = vadd.f32 0.0, %v1933
        %v1935 = vpop.f32.mrb[0].mxu0
        %v1936 = vpop.f32.mrb[0].mxu0
        %v1937 = vadd.f32 0.0, %v1936
        %v1938 = vpop.f32.mrb[0].mxu0
        %1939 = vmatprep.mubr.bf16.mxu0 0
        %1940 = vmatmul.mubr.bf16.gmra.mrb[0].mxu0 %v1800
        %v1941 = vpop.f32.mrb[0].mxu0
        %v1942 = vadd.f32 0.0, %v1941
        %v1943 = vpop.f32.mrb[0].mxu0
        %v1944 = vpop.f32.mrb[0].mxu0
        %v1945 = vadd.f32 0.0, %v1944
        %v1946 = vpop.f32.mrb[0].mxu0
        %1947 = vmatprep.mubr.bf16.mxu0 0
        %1948 = vmatmul.mubr.bf16.gmra.mrb[0].mxu0 %v1801
        %v1949 = vpop.f32.mrb[0].mxu0
        %v1950 = vadd.f32 0.0, %v1949
        %v1951 = vpop.f32.mrb[0].mxu0
        %v1952 = vpop.f32.mrb[0].mxu0
        %v1953 = vadd.f32 0.0, %v1952
        %v1954 = vpop.f32.mrb[0].mxu0
        %1955 = vmatprep.mubr.bf16.mxu0 0
        %1956 = vmatmul.mubr.bf16.gmra.mrb[0].mxu0 %v1802
        %v1957 = vpop.f32.mrb[0].mxu0
        %v1958 = vadd.f32 0.0, %v1957
        %v1959 = vpop.f32.mrb[0].mxu0
        %v1960 = vpop.f32.mrb[0].mxu0
        %v1961 = vadd.f32 0.0, %v1960
        %v1962 = vpop.f32.mrb[0].mxu0
        %1963 = vdwg.mxu0
        %v1980 = vunpack.c.l.b16 %v1683
        %v1981 = vunpack.c.l.b16 %v1684
        %v1982 = vunpack.c.l.b16 %v1685
        %v1983 = vunpack.c.l.b16 %v1686
        %v1984 = vunpack.c.l.b16 %v1687
        %v1985 = vunpack.c.l.b16 %v1688
        %v1986 = vunpack.c.l.b16 %v1689
        %v1987 = vunpack.c.l.b16 %v1690
        %v1988 = vunpack.c.l.b16 %v1691
        %v1989 = vunpack.c.l.b16 %v1692
        %v1990 = vunpack.c.l.b16 %v1693
        %v1991 = vunpack.c.l.b16 %v1694
        %v1992 = vunpack.c.l.b16 %v1695
        %v1993 = vunpack.c.l.b16 %v1696
        %v1994 = vunpack.c.l.b16 %v1697
        %v1995 = vunpack.c.l.b16 %v1698
        %v1996 = vpack.c.b16 %v1981, %v1980
        %v1997 = vpack.c.b16 %v1983, %v1982
        %v1998 = vpack.c.b16 %v1985, %v1984
        %v1999 = vpack.c.b16 %v1987, %v1986
        %v2000 = vpack.c.b16 %v1989, %v1988
        %v2001 = vpack.c.b16 %v1991, %v1990
        %v2002 = vpack.c.b16 %v1993, %v1992
        %v2003 = vpack.c.b16 %v1995, %v1994
        %2012 = vmatprep.subr.bf16.mxu0 0
        %2013 = vmatpush1.bf16.msra.mxu0 %v1996
        %2014 = vmatprep.subr.bf16.mxu0 0
        %2015 = vmatpush1.bf16.msra.mxu0 %v1997
        %2016 = vmatprep.subr.bf16.mxu0 0
        %2017 = vmatpush1.bf16.msra.mxu0 %v1998
        %2018 = vmatprep.subr.bf16.mxu0 0
        %2019 = vmatpush1.bf16.msra.mxu0 %v1999
        %2020 = vmatprep.subr.bf16.mxu0 0
        %2021 = vmatpush1.bf16.msra.mxu0 %v2000
        %2022 = vmatprep.subr.bf16.mxu0 0
        %2023 = vmatpush1.bf16.msra.mxu0 %v2001
        %2024 = vmatprep.subr.bf16.mxu0 0
        %2025 = vmatpush1.bf16.msra.mxu0 %v2002
        %2026 = vmatprep.subr.bf16.mxu0 0
        %2027 = vmatpush1.bf16.msra.mxu0 %v2003
        %2028 = vmatprep.subr.bf16.mxu0 0
        %2029 = vmatpush1.bf16.msra.mxu0 0
        %2030 = vmatprep.subr.bf16.mxu0 0
        %2031 = vmatpush1.bf16.msra.mxu0 0
        %2032 = vmatprep.subr.bf16.mxu0 0
        %2033 = vmatpush1.bf16.msra.mxu0 0
        %2034 = vmatprep.subr.bf16.mxu0 0
        %2035 = vmatpush1.bf16.msra.mxu0 0
        %2036 = vmatprep.subr.bf16.mxu0 0
        %2037 = vmatpush1.bf16.msra.mxu0 0
        %2038 = vmatprep.subr.bf16.mxu0 0
        %2039 = vmatpush1.bf16.msra.mxu0 0
        %2040 = vmatprep.subr.bf16.mxu0 0
        %2041 = vmatpush1.bf16.msra.mxu0 0
        %2042 = vmatprep.subr.bf16.mxu0 0
        %2043 = vmatpush1.bf16.msra.mxu0 0
        %2044 = vmatprep.mubr.bf16.mxu0 0
        %2045 = vmatmul.mubr.bf16.gmra.mrb[0].mxu0 %v1675
        %v2046 = vpop.f32.mrb[0].mxu0
        %v2047 = vadd.f32 %v1902, %v2046
        %v2048 = vpop.f32.mrb[0].mxu0
        %v2049 = vpop.f32.mrb[0].mxu0
        %v2050 = vadd.f32 %v1905, %v2049
        %v2051 = vpop.f32.mrb[0].mxu0
        %2052 = vmatprep.mubr.bf16.mxu0 0
        %2053 = vmatmul.mubr.bf16.gmra.mrb[0].mxu0 %v1676
        %v2054 = vpop.f32.mrb[0].mxu0
        %v2055 = vadd.f32 %v1910, %v2054
        %v2056 = vpop.f32.mrb[0].mxu0
        %v2057 = vpop.f32.mrb[0].mxu0
        %v2058 = vadd.f32 %v1913, %v2057
        %v2059 = vpop.f32.mrb[0].mxu0
        %2060 = vmatprep.mubr.bf16.mxu0 0
        %2061 = vmatmul.mubr.bf16.gmra.mrb[0].mxu0 %v1677
        %v2062 = vpop.f32.mrb[0].mxu0
        %v2063 = vadd.f32 %v1918, %v2062
        %v2064 = vpop.f32.mrb[0].mxu0
        %v2065 = vpop.f32.mrb[0].mxu0
        %v2066 = vadd.f32 %v1921, %v2065
        %v2067 = vpop.f32.mrb[0].mxu0
        %2068 = vmatprep.mubr.bf16.mxu0 0
        %2069 = vmatmul.mubr.bf16.gmra.mrb[0].mxu0 %v1678
        %v2070 = vpop.f32.mrb[0].mxu0
        %v2071 = vadd.f32 %v1926, %v2070
        %v2072 = vpop.f32.mrb[0].mxu0
        %v2073 = vpop.f32.mrb[0].mxu0
        %v2074 = vadd.f32 %v1929, %v2073
        %v2075 = vpop.f32.mrb[0].mxu0
        %2076 = vmatprep.mubr.bf16.mxu0 0
        %2077 = vmatmul.mubr.bf16.gmra.mrb[0].mxu0 %v1679
        %v2078 = vpop.f32.mrb[0].mxu0
        %v2079 = vadd.f32 %v1934, %v2078
        %v2080 = vpop.f32.mrb[0].mxu0
        %v2081 = vpop.f32.mrb[0].mxu0
        %v2082 = vadd.f32 %v1937, %v2081
        %v2083 = vpop.f32.mrb[0].mxu0
        %2084 = vmatprep.mubr.bf16.mxu0 0
        %2085 = vmatmul.mubr.bf16.gmra.mrb[0].mxu0 %v1680
        %v2086 = vpop.f32.mrb[0].mxu0
        %v2087 = vadd.f32 %v1942, %v2086
        %v2088 = vpop.f32.mrb[0].mxu0
        %v2089 = vpop.f32.mrb[0].mxu0
        %v2090 = vadd.f32 %v1945, %v2089
        %v2091 = vpop.f32.mrb[0].mxu0
        %2092 = vmatprep.mubr.bf16.mxu0 0
        %2093 = vmatmul.mubr.bf16.gmra.mrb[0].mxu0 %v1681
        %v2094 = vpop.f32.mrb[0].mxu0
        %v2095 = vadd.f32 %v1950, %v2094
        %v2096 = vpop.f32.mrb[0].mxu0
        %v2097 = vpop.f32.mrb[0].mxu0
        %v2098 = vadd.f32 %v1953, %v2097
        %v2099 = vpop.f32.mrb[0].mxu0
        %2100 = vmatprep.mubr.bf16.mxu0 0
        %2101 = vmatmul.mubr.bf16.gmra.mrb[0].mxu0 %v1682
        %v2102 = vpop.f32.mrb[0].mxu0
        %v2103 = vadd.f32 %v1958, %v2102
        %v2104 = vpop.f32.mrb[0].mxu0
        %v2105 = vpop.f32.mrb[0].mxu0
        %v2106 = vadd.f32 %v1961, %v2105
        %v2107 = vpop.f32.mrb[0].mxu0
        %2108 = vdwg.mxu0
        %vm2109 = vcmask 1045504
        %v2110 = vrot.slane %v1635, 2
        %v2111 = vrot.slane %v1636, 2
        %v2112 = vsel %vm2109, %v2110, %v2111
        %v2113 = vrot.slane %v1637, 2
        %v2114 = vrot.slane %v1638, 2
        %v2115 = vsel %vm2109, %v2113, %v2114
        %v2116 = vrot.slane %v1639, 2
        %v2117 = vrot.slane %v1640, 2
        %v2118 = vsel %vm2109, %v2116, %v2117
        %v2119 = vrot.slane %v1641, 2
        %v2120 = vrot.slane %v1642, 2
        %v2121 = vsel %vm2109, %v2119, %v2120
        %v2122 = vrot.slane %v1643, 2
        %v2123 = vrot.slane %v1644, 2
        %v2124 = vsel %vm2109, %v2122, %v2123
        %v2125 = vrot.slane %v1645, 2
        %v2126 = vrot.slane %v1646, 2
        %v2127 = vsel %vm2109, %v2125, %v2126
        %v2128 = vrot.slane %v1647, 2
        %v2129 = vrot.slane %v1648, 2
        %v2130 = vsel %vm2109, %v2128, %v2129
        %v2131 = vrot.slane %v1649, 2
        %v2132 = vrot.slane %v1650, 2
        %v2133 = vsel %vm2109, %v2131, %v2132
        %v2134 = vrot.slane %v1655, 2
        %v2135 = vrot.slane %v1656, 2
        %v2136 = vsel %vm2109, %v2134, %v2135
        %v2137 = vrot.slane %v1657, 2
        %v2138 = vrot.slane %v1658, 2
        %v2139 = vsel %vm2109, %v2137, %v2138
        %v2140 = vrot.slane %v1659, 2
        %v2141 = vrot.slane %v1660, 2
        %v2142 = vsel %vm2109, %v2140, %v2141
        %v2143 = vrot.slane %v1661, 2
        %v2144 = vrot.slane %v1662, 2
        %v2145 = vsel %vm2109, %v2143, %v2144
        %v2146 = vrot.slane %v1663, 2
        %v2147 = vrot.slane %v1664, 2
        %v2148 = vsel %vm2109, %v2146, %v2147
        %v2149 = vrot.slane %v1665, 2
        %v2150 = vrot.slane %v1666, 2
        %v2151 = vsel %vm2109, %v2149, %v2150
        %v2152 = vrot.slane %v1667, 2
        %v2153 = vrot.slane %v1668, 2
        %v2154 = vsel %vm2109, %v2152, %v2153
        %v2155 = vrot.slane %v1669, 2
        %v2156 = vrot.slane %v1670, 2
        %v2157 = vsel %vm2109, %v2155, %v2156
        %v2174 = vpack.c.bf16 %v2115, %v2112
        %v2175 = vpack.c.bf16 %v2121, %v2118
        %v2176 = vpack.c.bf16 %v2127, %v2124
        %v2177 = vpack.c.bf16 %v2133, %v2130
        %v2178 = vpack.c.bf16 %v2139, %v2136
        %v2179 = vpack.c.bf16 %v2145, %v2142
        %v2180 = vpack.c.bf16 %v2151, %v2148
        %v2181 = vpack.c.bf16 %v2157, %v2154
        %v2182 = vld [vmem:[%s475 + $0x80] sm:$0xf]
        %v2183 = vld [vmem:[%s475 + $0x84] sm:$0xf]
        %v2184 = vld [vmem:[%s475 + $0x88] sm:$0xf]
        %v2185 = vld [vmem:[%s475 + $0x8c] sm:$0xf]
        %v2186 = vld [vmem:[%s475 + $0x90] sm:$0xf]
        %v2187 = vld [vmem:[%s475 + $0x94] sm:$0xf]
        %v2188 = vld [vmem:[%s475 + $0x98] sm:$0xf]
        %v2189 = vld [vmem:[%s475 + $0x9c] sm:$0xf]
        %v2190 = vld [vmem:[%s475 + $0xa0] sm:$0xf]
        %v2191 = vld [vmem:[%s475 + $0xa4] sm:$0xf]
        %v2192 = vld [vmem:[%s475 + $0xa8] sm:$0xf]
        %v2193 = vld [vmem:[%s475 + $0xac] sm:$0xf]
        %v2194 = vld [vmem:[%s475 + $0xb0] sm:$0xf]
        %v2195 = vld [vmem:[%s475 + $0xb4] sm:$0xf]
        %v2196 = vld [vmem:[%s475 + $0xb8] sm:$0xf]
        %v2197 = vld [vmem:[%s475 + $0xbc] sm:$0xf]
        %v2214 = vunpack.c.l.b16 %v2182
        %v2215 = vunpack.c.l.b16 %v2183
        %v2216 = vunpack.c.l.b16 %v2184
        %v2217 = vunpack.c.l.b16 %v2185
        %v2218 = vunpack.c.l.b16 %v2186
        %v2219 = vunpack.c.l.b16 %v2187
        %v2220 = vunpack.c.l.b16 %v2188
        %v2221 = vunpack.c.l.b16 %v2189
        %v2222 = vunpack.c.l.b16 %v2190
        %v2223 = vunpack.c.l.b16 %v2191
        %v2224 = vunpack.c.l.b16 %v2192
        %v2225 = vunpack.c.l.b16 %v2193
        %v2226 = vunpack.c.l.b16 %v2194
        %v2227 = vunpack.c.l.b16 %v2195
        %v2228 = vunpack.c.l.b16 %v2196
        %v2229 = vunpack.c.l.b16 %v2197
        %v2230 = vpack.c.b16 %v2215, %v2214
        %v2231 = vpack.c.b16 %v2217, %v2216
        %v2232 = vpack.c.b16 %v2219, %v2218
        %v2233 = vpack.c.b16 %v2221, %v2220
        %v2234 = vpack.c.b16 %v2223, %v2222
        %v2235 = vpack.c.b16 %v2225, %v2224
        %v2236 = vpack.c.b16 %v2227, %v2226
        %v2237 = vpack.c.b16 %v2229, %v2228
        %2246 = vmatprep.subr.bf16.mxu0 0
        %2247 = vmatpush1.bf16.msra.mxu0 %v2230
        %2248 = vmatprep.subr.bf16.mxu0 0
        %2249 = vmatpush1.bf16.msra.mxu0 %v2231
        %2250 = vmatprep.subr.bf16.mxu0 0
        %2251 = vmatpush1.bf16.msra.mxu0 %v2232
        %2252 = vmatprep.subr.bf16.mxu0 0
        %2253 = vmatpush1.bf16.msra.mxu0 %v2233
        %2254 = vmatprep.subr.bf16.mxu0 0
        %2255 = vmatpush1.bf16.msra.mxu0 %v2234
        %2256 = vmatprep.subr.bf16.mxu0 0
        %2257 = vmatpush1.bf16.msra.mxu0 %v2235
        %2258 = vmatprep.subr.bf16.mxu0 0
        %2259 = vmatpush1.bf16.msra.mxu0 %v2236
        %2260 = vmatprep.subr.bf16.mxu0 0
        %2261 = vmatpush1.bf16.msra.mxu0 %v2237
        %2262 = vmatprep.subr.bf16.mxu0 0
        %2263 = vmatpush1.bf16.msra.mxu0 0
        %2264 = vmatprep.subr.bf16.mxu0 0
        %2265 = vmatpush1.bf16.msra.mxu0 0
        %2266 = vmatprep.subr.bf16.mxu0 0
        %2267 = vmatpush1.bf16.msra.mxu0 0
        %2268 = vmatprep.subr.bf16.mxu0 0
        %2269 = vmatpush1.bf16.msra.mxu0 0
        %2270 = vmatprep.subr.bf16.mxu0 0
        %2271 = vmatpush1.bf16.msra.mxu0 0
        %2272 = vmatprep.subr.bf16.mxu0 0
        %2273 = vmatpush1.bf16.msra.mxu0 0
        %2274 = vmatprep.subr.bf16.mxu0 0
        %2275 = vmatpush1.bf16.msra.mxu0 0
        %2276 = vmatprep.subr.bf16.mxu0 0
        %2277 = vmatpush1.bf16.msra.mxu0 0
        %2278 = vmatprep.mubr.bf16.mxu0 0
        %2279 = vmatmul.mubr.bf16.gmra.mrb[0].mxu0 %v2174
        %v2280 = vpop.f32.mrb[0].mxu0
        %v2281 = vadd.f32 0.0, %v2280
        %v2282 = vpop.f32.mrb[0].mxu0
        %v2283 = vpop.f32.mrb[0].mxu0
        %v2284 = vadd.f32 0.0, %v2283
        %v2285 = vpop.f32.mrb[0].mxu0
        %2286 = vmatprep.mubr.bf16.mxu0 0
        %2287 = vmatmul.mubr.bf16.gmra.mrb[0].mxu0 %v2175
        %v2288 = vpop.f32.mrb[0].mxu0
        %v2289 = vadd.f32 0.0, %v2288
        %v2290 = vpop.f32.mrb[0].mxu0
        %v2291 = vpop.f32.mrb[0].mxu0
        %v2292 = vadd.f32 0.0, %v2291
        %v2293 = vpop.f32.mrb[0].mxu0
        %2294 = vmatprep.mubr.bf16.mxu0 0
        %2295 = vmatmul.mubr.bf16.gmra.mrb[0].mxu0 %v2176
        %v2296 = vpop.f32.mrb[0].mxu0
        %v2297 = vadd.f32 0.0, %v2296
        %v2298 = vpop.f32.mrb[0].mxu0
        %v2299 = vpop.f32.mrb[0].mxu0
        %v2300 = vadd.f32 0.0, %v2299
        %v2301 = vpop.f32.mrb[0].mxu0
        %2302 = vmatprep.mubr.bf16.mxu0 0
        %2303 = vmatmul.mubr.bf16.gmra.mrb[0].mxu0 %v2177
        %v2304 = vpop.f32.mrb[0].mxu0
        %v2305 = vadd.f32 0.0, %v2304
        %v2306 = vpop.f32.mrb[0].mxu0
        %v2307 = vpop.f32.mrb[0].mxu0
        %v2308 = vadd.f32 0.0, %v2307
        %v2309 = vpop.f32.mrb[0].mxu0
        %2310 = vmatprep.mubr.bf16.mxu0 0
        %2311 = vmatmul.mubr.bf16.gmra.mrb[0].mxu0 %v2178
        %v2312 = vpop.f32.mrb[0].mxu0
        %v2313 = vadd.f32 0.0, %v2312
        %v2314 = vpop.f32.mrb[0].mxu0
        %v2315 = vpop.f32.mrb[0].mxu0
        %v2316 = vadd.f32 0.0, %v2315
        %v2317 = vpop.f32.mrb[0].mxu0
        %2318 = vmatprep.mubr.bf16.mxu0 0
        %2319 = vmatmul.mubr.bf16.gmra.mrb[0].mxu0 %v2179
        %v2320 = vpop.f32.mrb[0].mxu0
        %v2321 = vadd.f32 0.0, %v2320
        %v2322 = vpop.f32.mrb[0].mxu0
        %v2323 = vpop.f32.mrb[0].mxu0
        %v2324 = vadd.f32 0.0, %v2323
        %v2325 = vpop.f32.mrb[0].mxu0
        %2326 = vmatprep.mubr.bf16.mxu0 0
        %2327 = vmatmul.mubr.bf16.gmra.mrb[0].mxu0 %v2180
        %v2328 = vpop.f32.mrb[0].mxu0
        %v2329 = vadd.f32 0.0, %v2328
        %v2330 = vpop.f32.mrb[0].mxu0
        %v2331 = vpop.f32.mrb[0].mxu0
        %v2332 = vadd.f32 0.0, %v2331
        %v2333 = vpop.f32.mrb[0].mxu0
        %2334 = vmatprep.mubr.bf16.mxu0 0
        %2335 = vmatmul.mubr.bf16.gmra.mrb[0].mxu0 %v2181
        %v2336 = vpop.f32.mrb[0].mxu0
        %v2337 = vadd.f32 0.0, %v2336
        %v2338 = vpop.f32.mrb[0].mxu0
        %v2339 = vpop.f32.mrb[0].mxu0
        %v2340 = vadd.f32 0.0, %v2339
        %v2341 = vpop.f32.mrb[0].mxu0
        %2342 = vdwg.mxu0
        %v2343 = vadd.f32 %v2047, %v2281
        %v2344 = vadd.f32 %v2050, %v2284
        %v2345 = vadd.f32 %v2055, %v2289
        %v2346 = vadd.f32 %v2058, %v2292
        %v2347 = vadd.f32 %v2063, %v2297
        %v2348 = vadd.f32 %v2066, %v2300
        %v2349 = vadd.f32 %v2071, %v2305
        %v2350 = vadd.f32 %v2074, %v2308
        %v2351 = vadd.f32 %v2079, %v2313
        %v2352 = vadd.f32 %v2082, %v2316
        %v2353 = vadd.f32 %v2087, %v2321
        %v2354 = vadd.f32 %v2090, %v2324
        %v2355 = vadd.f32 %v2095, %v2329
        %v2356 = vadd.f32 %v2098, %v2332
        %v2357 = vadd.f32 %v2103, %v2337
        %v2358 = vadd.f32 %v2106, %v2340
        %v2359 = vpack.c.bf16 %v1639, %v1637
        %v2360 = vpack.c.bf16 %v1643, %v1641
        %v2361 = vpack.c.bf16 %v1647, %v1645
        %v2362 = vpack.c.bf16 %v1651, %v1649
        %v2363 = vpack.c.bf16 %v1659, %v1657
        %v2364 = vpack.c.bf16 %v1663, %v1661
        %v2365 = vpack.c.bf16 %v1667, %v1665
        %v2366 = vpack.c.bf16 %v1671, %v1669
        %v2367 = vld [vmem:[%s475 + $0xc0] sm:$0xf]
        %v2368 = vld [vmem:[%s475 + $0xc4] sm:$0xf]
        %v2369 = vld [vmem:[%s475 + $0xc8] sm:$0xf]
        %v2370 = vld [vmem:[%s475 + $0xcc] sm:$0xf]
        %v2371 = vld [vmem:[%s475 + $0xd0] sm:$0xf]
        %v2372 = vld [vmem:[%s475 + $0xd4] sm:$0xf]
        %v2373 = vld [vmem:[%s475 + $0xd8] sm:$0xf]
        %v2374 = vld [vmem:[%s475 + $0xdc] sm:$0xf]
        %v2375 = vld [vmem:[%s475 + $0xe0] sm:$0xf]
        %v2376 = vld [vmem:[%s475 + $0xe4] sm:$0xf]
        %v2377 = vld [vmem:[%s475 + $0xe8] sm:$0xf]
        %v2378 = vld [vmem:[%s475 + $0xec] sm:$0xf]
        %v2379 = vld [vmem:[%s475 + $0xf0] sm:$0xf]
        %v2380 = vld [vmem:[%s475 + $0xf4] sm:$0xf]
        %v2381 = vld [vmem:[%s475 + $0xf8] sm:$0xf]
        %v2382 = vld [vmem:[%s475 + $0xfc] sm:$0xf]
        %v2399 = vunpack.c.l.b16 %v2367
        %v2400 = vunpack.c.l.b16 %v2368
        %v2401 = vunpack.c.l.b16 %v2369
        %v2402 = vunpack.c.l.b16 %v2370
        %v2403 = vunpack.c.l.b16 %v2371
        %v2404 = vunpack.c.l.b16 %v2372
        %v2405 = vunpack.c.l.b16 %v2373
        %v2406 = vunpack.c.l.b16 %v2374
        %v2407 = vunpack.c.l.b16 %v2375
        %v2408 = vunpack.c.l.b16 %v2376
        %v2409 = vunpack.c.l.b16 %v2377
        %v2410 = vunpack.c.l.b16 %v2378
        %v2411 = vunpack.c.l.b16 %v2379
        %v2412 = vunpack.c.l.b16 %v2380
        %v2413 = vunpack.c.l.b16 %v2381
        %v2414 = vunpack.c.l.b16 %v2382
        %v2415 = vpack.c.b16 %v2400, %v2399
        %v2416 = vpack.c.b16 %v2402, %v2401
        %v2417 = vpack.c.b16 %v2404, %v2403
        %v2418 = vpack.c.b16 %v2406, %v2405
        %v2419 = vpack.c.b16 %v2408, %v2407
        %v2420 = vpack.c.b16 %v2410, %v2409
        %v2421 = vpack.c.b16 %v2412, %v2411
        %v2422 = vpack.c.b16 %v2414, %v2413
        %2431 = vmatprep.subr.bf16.mxu0 0
        %2432 = vmatpush1.bf16.msra.mxu0 %v2415
        %2433 = vmatprep.subr.bf16.mxu0 0
        %2434 = vmatpush1.bf16.msra.mxu0 %v2416
        %2435 = vmatprep.subr.bf16.mxu0 0
        %2436 = vmatpush1.bf16.msra.mxu0 %v2417
        %2437 = vmatprep.subr.bf16.mxu0 0
        %2438 = vmatpush1.bf16.msra.mxu0 %v2418
        %2439 = vmatprep.subr.bf16.mxu0 0
        %2440 = vmatpush1.bf16.msra.mxu0 %v2419
        %2441 = vmatprep.subr.bf16.mxu0 0
        %2442 = vmatpush1.bf16.msra.mxu0 %v2420
        %2443 = vmatprep.subr.bf16.mxu0 0
        %2444 = vmatpush1.bf16.msra.mxu0 %v2421
        %2445 = vmatprep.subr.bf16.mxu0 0
        %2446 = vmatpush1.bf16.msra.mxu0 %v2422
        %2447 = vmatprep.subr.bf16.mxu0 0
        %2448 = vmatpush1.bf16.msra.mxu0 0
        %2449 = vmatprep.subr.bf16.mxu0 0
        %2450 = vmatpush1.bf16.msra.mxu0 0
        %2451 = vmatprep.subr.bf16.mxu0 0
        %2452 = vmatpush1.bf16.msra.mxu0 0
        %2453 = vmatprep.subr.bf16.mxu0 0
        %2454 = vmatpush1.bf16.msra.mxu0 0
        %2455 = vmatprep.subr.bf16.mxu0 0
        %2456 = vmatpush1.bf16.msra.mxu0 0
        %2457 = vmatprep.subr.bf16.mxu0 0
        %2458 = vmatpush1.bf16.msra.mxu0 0
        %2459 = vmatprep.subr.bf16.mxu0 0
        %2460 = vmatpush1.bf16.msra.mxu0 0
        %2461 = vmatprep.subr.bf16.mxu0 0
        %2462 = vmatpush1.bf16.msra.mxu0 0
        %2463 = vmatprep.mubr.bf16.mxu0 0
        %2464 = vmatmul.mubr.bf16.gmra.mrb[0].mxu0 %v2359
        %v2465 = vpop.f32.mrb[0].mxu0
        %v2466 = vadd.f32 0.0, %v2465
        %v2467 = vpop.f32.mrb[0].mxu0
        %v2468 = vpop.f32.mrb[0].mxu0
        %v2469 = vadd.f32 0.0, %v2468
        %v2470 = vpop.f32.mrb[0].mxu0
        %2471 = vmatprep.mubr.bf16.mxu0 0
        %2472 = vmatmul.mubr.bf16.gmra.mrb[0].mxu0 %v2360
        %v2473 = vpop.f32.mrb[0].mxu0
        %v2474 = vadd.f32 0.0, %v2473
        %v2475 = vpop.f32.mrb[0].mxu0
        %v2476 = vpop.f32.mrb[0].mxu0
        %v2477 = vadd.f32 0.0, %v2476
        %v2478 = vpop.f32.mrb[0].mxu0
        %2479 = vmatprep.mubr.bf16.mxu0 0
        %2480 = vmatmul.mubr.bf16.gmra.mrb[0].mxu0 %v2361
        %v2481 = vpop.f32.mrb[0].mxu0
        %v2482 = vadd.f32 0.0, %v2481
        %v2483 = vpop.f32.mrb[0].mxu0
        %v2484 = vpop.f32.mrb[0].mxu0
        %v2485 = vadd.f32 0.0, %v2484
        %v2486 = vpop.f32.mrb[0].mxu0
        %2487 = vmatprep.mubr.bf16.mxu0 0
        %2488 = vmatmul.mubr.bf16.gmra.mrb[0].mxu0 %v2362
        %v2489 = vpop.f32.mrb[0].mxu0
        %v2490 = vadd.f32 0.0, %v2489
        %v2491 = vpop.f32.mrb[0].mxu0
        %v2492 = vpop.f32.mrb[0].mxu0
        %v2493 = vadd.f32 0.0, %v2492
        %v2494 = vpop.f32.mrb[0].mxu0
        %2495 = vmatprep.mubr.bf16.mxu0 0
        %2496 = vmatmul.mubr.bf16.gmra.mrb[0].mxu0 %v2363
        %v2497 = vpop.f32.mrb[0].mxu0
        %v2498 = vadd.f32 0.0, %v2497
        %v2499 = vpop.f32.mrb[0].mxu0
        %v2500 = vpop.f32.mrb[0].mxu0
        %v2501 = vadd.f32 0.0, %v2500
        %v2502 = vpop.f32.mrb[0].mxu0
        %2503 = vmatprep.mubr.bf16.mxu0 0
        %2504 = vmatmul.mubr.bf16.gmra.mrb[0].mxu0 %v2364
        %v2505 = vpop.f32.mrb[0].mxu0
        %v2506 = vadd.f32 0.0, %v2505
        %v2507 = vpop.f32.mrb[0].mxu0
        %v2508 = vpop.f32.mrb[0].mxu0
        %v2509 = vadd.f32 0.0, %v2508
        %v2510 = vpop.f32.mrb[0].mxu0
        %2511 = vmatprep.mubr.bf16.mxu0 0
        %2512 = vmatmul.mubr.bf16.gmra.mrb[0].mxu0 %v2365
        %v2513 = vpop.f32.mrb[0].mxu0
        %v2514 = vadd.f32 0.0, %v2513
        %v2515 = vpop.f32.mrb[0].mxu0
        %v2516 = vpop.f32.mrb[0].mxu0
        %v2517 = vadd.f32 0.0, %v2516
        %v2518 = vpop.f32.mrb[0].mxu0
        %2519 = vmatprep.mubr.bf16.mxu0 0
        %2520 = vmatmul.mubr.bf16.gmra.mrb[0].mxu0 %v2366
        %v2521 = vpop.f32.mrb[0].mxu0
        %v2522 = vadd.f32 0.0, %v2521
        %v2523 = vpop.f32.mrb[0].mxu0
        %v2524 = vpop.f32.mrb[0].mxu0
        %v2525 = vadd.f32 0.0, %v2524
        %v2526 = vpop.f32.mrb[0].mxu0
        %2527 = vdwg.mxu0
        %v2528 = vadd.f32 %v2343, %v2466
        %v2529 = vadd.f32 %v2344, %v2469
        %v2530 = vadd.f32 %v2345, %v2474
        %v2531 = vadd.f32 %v2346, %v2477
        %v2532 = vadd.f32 %v2347, %v2482
        %v2533 = vadd.f32 %v2348, %v2485
        %v2534 = vadd.f32 %v2349, %v2490
        %v2535 = vadd.f32 %v2350, %v2493
        %v2536 = vadd.f32 %v2351, %v2498
        %v2537 = vadd.f32 %v2352, %v2501
        %v2538 = vadd.f32 %v2353, %v2506
        %v2539 = vadd.f32 %v2354, %v2509
        %v2540 = vadd.f32 %v2355, %v2514
        %v2541 = vadd.f32 %v2356, %v2517
        %v2542 = vadd.f32 %v2357, %v2522
        %v2543 = vadd.f32 %v2358, %v2525
        %v2548 = vrot.slane %v1651, 1
        %v2549 = vrot.slane %v1652, 1
        %v2550 = vsel %vm615, %v2548, %v2549
        %v2551 = vrot.slane %v1671, 1
        %v2552 = vrot.slane %v1672, 1
        %v2553 = vsel %vm615, %v2551, %v2552
        %v2556 = vpack.c.bf16 %v1739, %v1736
        %v2557 = vpack.c.bf16 %v1745, %v1742
        %v2558 = vpack.c.bf16 %v1751, %v1748
        %v2559 = vpack.c.bf16 %v2550, %v1754
        %v2560 = vpack.c.bf16 %v1763, %v1760
        %v2561 = vpack.c.bf16 %v1769, %v1766
        %v2562 = vpack.c.bf16 %v1775, %v1772
        %v2563 = vpack.c.bf16 %v2553, %v1778
        %v2564 = vld [vmem:[%s475 + $0x100] sm:$0xf]
        %v2565 = vld [vmem:[%s475 + $0x104] sm:$0xf]
        %v2566 = vld [vmem:[%s475 + $0x108] sm:$0xf]
        %v2567 = vld [vmem:[%s475 + $0x10c] sm:$0xf]
        %v2568 = vld [vmem:[%s475 + $0x110] sm:$0xf]
        %v2569 = vld [vmem:[%s475 + $0x114] sm:$0xf]
        %v2570 = vld [vmem:[%s475 + $0x118] sm:$0xf]
        %v2571 = vld [vmem:[%s475 + $0x11c] sm:$0xf]
        %v2572 = vld [vmem:[%s475 + $0x120] sm:$0xf]
        %v2573 = vld [vmem:[%s475 + $0x124] sm:$0xf]
        %v2574 = vld [vmem:[%s475 + $0x128] sm:$0xf]
        %v2575 = vld [vmem:[%s475 + $0x12c] sm:$0xf]
        %v2576 = vld [vmem:[%s475 + $0x130] sm:$0xf]
        %v2577 = vld [vmem:[%s475 + $0x134] sm:$0xf]
        %v2578 = vld [vmem:[%s475 + $0x138] sm:$0xf]
        %v2579 = vld [vmem:[%s475 + $0x13c] sm:$0xf]
        %v2596 = vunpack.c.l.b16 %v2564
        %v2597 = vunpack.c.l.b16 %v2565
        %v2598 = vunpack.c.l.b16 %v2566
        %v2599 = vunpack.c.l.b16 %v2567
        %v2600 = vunpack.c.l.b16 %v2568
        %v2601 = vunpack.c.l.b16 %v2569
        %v2602 = vunpack.c.l.b16 %v2570
        %v2603 = vunpack.c.l.b16 %v2571
        %v2604 = vunpack.c.l.b16 %v2572
        %v2605 = vunpack.c.l.b16 %v2573
        %v2606 = vunpack.c.l.b16 %v2574
        %v2607 = vunpack.c.l.b16 %v2575
        %v2608 = vunpack.c.l.b16 %v2576
        %v2609 = vunpack.c.l.b16 %v2577
        %v2610 = vunpack.c.l.b16 %v2578
        %v2611 = vunpack.c.l.b16 %v2579
        %v2612 = vpack.c.b16 %v2597, %v2596
        %v2613 = vpack.c.b16 %v2599, %v2598
        %v2614 = vpack.c.b16 %v2601, %v2600
        %v2615 = vpack.c.b16 %v2603, %v2602
        %v2616 = vpack.c.b16 %v2605, %v2604
        %v2617 = vpack.c.b16 %v2607, %v2606
        %v2618 = vpack.c.b16 %v2609, %v2608
        %v2619 = vpack.c.b16 %v2611, %v2610
        %2628 = vmatprep.subr.bf16.mxu0 0
        %2629 = vmatpush1.bf16.msra.mxu0 %v2612
        %2630 = vmatprep.subr.bf16.mxu0 0
        %2631 = vmatpush1.bf16.msra.mxu0 %v2613
        %2632 = vmatprep.subr.bf16.mxu0 0
        %2633 = vmatpush1.bf16.msra.mxu0 %v2614
        %2634 = vmatprep.subr.bf16.mxu0 0
        %2635 = vmatpush1.bf16.msra.mxu0 %v2615
        %2636 = vmatprep.subr.bf16.mxu0 0
        %2637 = vmatpush1.bf16.msra.mxu0 %v2616
        %2638 = vmatprep.subr.bf16.mxu0 0
        %2639 = vmatpush1.bf16.msra.mxu0 %v2617
        %2640 = vmatprep.subr.bf16.mxu0 0
        %2641 = vmatpush1.bf16.msra.mxu0 %v2618
        %2642 = vmatprep.subr.bf16.mxu0 0
        %2643 = vmatpush1.bf16.msra.mxu0 %v2619
        %2644 = vmatprep.subr.bf16.mxu0 0
        %2645 = vmatpush1.bf16.msra.mxu0 0
        %2646 = vmatprep.subr.bf16.mxu0 0
        %2647 = vmatpush1.bf16.msra.mxu0 0
        %2648 = vmatprep.subr.bf16.mxu0 0
        %2649 = vmatpush1.bf16.msra.mxu0 0
        %2650 = vmatprep.subr.bf16.mxu0 0
        %2651 = vmatpush1.bf16.msra.mxu0 0
        %2652 = vmatprep.subr.bf16.mxu0 0
        %2653 = vmatpush1.bf16.msra.mxu0 0
        %2654 = vmatprep.subr.bf16.mxu0 0
        %2655 = vmatpush1.bf16.msra.mxu0 0
        %2656 = vmatprep.subr.bf16.mxu0 0
        %2657 = vmatpush1.bf16.msra.mxu0 0
        %2658 = vmatprep.subr.bf16.mxu0 0
        %2659 = vmatpush1.bf16.msra.mxu0 0
        %2660 = vmatprep.mubr.bf16.mxu0 0
        %2661 = vmatmul.mubr.bf16.gmra.mrb[0].mxu0 %v2556
        %v2662 = vpop.f32.mrb[0].mxu0
        %v2663 = vadd.f32 0.0, %v2662
        %v2664 = vpop.f32.mrb[0].mxu0
        %v2665 = vpop.f32.mrb[0].mxu0
        %v2666 = vadd.f32 0.0, %v2665
        %v2667 = vpop.f32.mrb[0].mxu0
        %2668 = vmatprep.mubr.bf16.mxu0 0
        %2669 = vmatmul.mubr.bf16.gmra.mrb[0].mxu0 %v2557
        %v2670 = vpop.f32.mrb[0].mxu0
        %v2671 = vadd.f32 0.0, %v2670
        %v2672 = vpop.f32.mrb[0].mxu0
        %v2673 = vpop.f32.mrb[0].mxu0
        %v2674 = vadd.f32 0.0, %v2673
        %v2675 = vpop.f32.mrb[0].mxu0
        %2676 = vmatprep.mubr.bf16.mxu0 0
        %2677 = vmatmul.mubr.bf16.gmra.mrb[0].mxu0 %v2558
        %v2678 = vpop.f32.mrb[0].mxu0
        %v2679 = vadd.f32 0.0, %v2678
        %v2680 = vpop.f32.mrb[0].mxu0
        %v2681 = vpop.f32.mrb[0].mxu0
        %v2682 = vadd.f32 0.0, %v2681
        %v2683 = vpop.f32.mrb[0].mxu0
        %2684 = vmatprep.mubr.bf16.mxu0 0
        %2685 = vmatmul.mubr.bf16.gmra.mrb[0].mxu0 %v2559
        %v2686 = vpop.f32.mrb[0].mxu0
        %v2687 = vadd.f32 0.0, %v2686
        %v2688 = vpop.f32.mrb[0].mxu0
        %v2689 = vpop.f32.mrb[0].mxu0
        %v2690 = vadd.f32 0.0, %v2689
        %v2691 = vpop.f32.mrb[0].mxu0
        %2692 = vmatprep.mubr.bf16.mxu0 0
        %2693 = vmatmul.mubr.bf16.gmra.mrb[0].mxu0 %v2560
        %v2694 = vpop.f32.mrb[0].mxu0
        %v2695 = vadd.f32 0.0, %v2694
        %v2696 = vpop.f32.mrb[0].mxu0
        %v2697 = vpop.f32.mrb[0].mxu0
        %v2698 = vadd.f32 0.0, %v2697
        %v2699 = vpop.f32.mrb[0].mxu0
        %2700 = vmatprep.mubr.bf16.mxu0 0
        %2701 = vmatmul.mubr.bf16.gmra.mrb[0].mxu0 %v2561
        %v2702 = vpop.f32.mrb[0].mxu0
        %v2703 = vadd.f32 0.0, %v2702
        %v2704 = vpop.f32.mrb[0].mxu0
        %v2705 = vpop.f32.mrb[0].mxu0
        %v2706 = vadd.f32 0.0, %v2705
        %v2707 = vpop.f32.mrb[0].mxu0
        %2708 = vmatprep.mubr.bf16.mxu0 0
        %2709 = vmatmul.mubr.bf16.gmra.mrb[0].mxu0 %v2562
        %v2710 = vpop.f32.mrb[0].mxu0
        %v2711 = vadd.f32 0.0, %v2710
        %v2712 = vpop.f32.mrb[0].mxu0
        %v2713 = vpop.f32.mrb[0].mxu0
        %v2714 = vadd.f32 0.0, %v2713
        %v2715 = vpop.f32.mrb[0].mxu0
        %2716 = vmatprep.mubr.bf16.mxu0 0
        %2717 = vmatmul.mubr.bf16.gmra.mrb[0].mxu0 %v2563
        %v2718 = vpop.f32.mrb[0].mxu0
        %v2719 = vadd.f32 0.0, %v2718
        %v2720 = vpop.f32.mrb[0].mxu0
        %v2721 = vpop.f32.mrb[0].mxu0
        %v2722 = vadd.f32 0.0, %v2721
        %v2723 = vpop.f32.mrb[0].mxu0
        %2724 = vdwg.mxu0
        %v2725 = vadd.f32 %v2528, %v2663
        %v2726 = vadd.f32 %v2529, %v2666
        %v2727 = vadd.f32 %v2530, %v2671
        %v2728 = vadd.f32 %v2531, %v2674
        %v2729 = vadd.f32 %v2532, %v2679
        %v2730 = vadd.f32 %v2533, %v2682
        %v2731 = vadd.f32 %v2534, %v2687
        %v2732 = vadd.f32 %v2535, %v2690
        %v2733 = vadd.f32 %v2536, %v2695
        %v2734 = vadd.f32 %v2537, %v2698
        %v2735 = vadd.f32 %v2538, %v2703
        %v2736 = vadd.f32 %v2539, %v2706
        %v2737 = vadd.f32 %v2540, %v2711
        %v2738 = vadd.f32 %v2541, %v2714
        %v2739 = vadd.f32 %v2542, %v2719
        %v2740 = vadd.f32 %v2543, %v2722
        %v2741 = vrot.slane %v1651, 2
        %v2742 = vrot.slane %v1652, 2
        %v2743 = vsel %vm2109, %v2741, %v2742
        %v2744 = vrot.slane %v1671, 2
        %v2745 = vrot.slane %v1672, 2
        %v2746 = vsel %vm2109, %v2744, %v2745
        %v2749 = vpack.c.bf16 %v2118, %v2115
        %v2750 = vpack.c.bf16 %v2124, %v2121
        %v2751 = vpack.c.bf16 %v2130, %v2127
        %v2752 = vpack.c.bf16 %v2743, %v2133
        %v2753 = vpack.c.bf16 %v2142, %v2139
        %v2754 = vpack.c.bf16 %v2148, %v2145
        %v2755 = vpack.c.bf16 %v2154, %v2151
        %v2756 = vpack.c.bf16 %v2746, %v2157
        %v2757 = vld [vmem:[%s475 + $0x140] sm:$0xf]
        %v2758 = vld [vmem:[%s475 + $0x144] sm:$0xf]
        %v2759 = vld [vmem:[%s475 + $0x148] sm:$0xf]
        %v2760 = vld [vmem:[%s475 + $0x14c] sm:$0xf]
        %v2761 = vld [vmem:[%s475 + $0x150] sm:$0xf]
        %v2762 = vld [vmem:[%s475 + $0x154] sm:$0xf]
        %v2763 = vld [vmem:[%s475 + $0x158] sm:$0xf]
        %v2764 = vld [vmem:[%s475 + $0x15c] sm:$0xf]
        %v2765 = vld [vmem:[%s475 + $0x160] sm:$0xf]
        %v2766 = vld [vmem:[%s475 + $0x164] sm:$0xf]
        %v2767 = vld [vmem:[%s475 + $0x168] sm:$0xf]
        %v2768 = vld [vmem:[%s475 + $0x16c] sm:$0xf]
        %v2769 = vld [vmem:[%s475 + $0x170] sm:$0xf]
        %v2770 = vld [vmem:[%s475 + $0x174] sm:$0xf]
        %v2771 = vld [vmem:[%s475 + $0x178] sm:$0xf]
        %v2772 = vld [vmem:[%s475 + $0x17c] sm:$0xf]
        %v2789 = vunpack.c.l.b16 %v2757
        %v2790 = vunpack.c.l.b16 %v2758
        %v2791 = vunpack.c.l.b16 %v2759
        %v2792 = vunpack.c.l.b16 %v2760
        %v2793 = vunpack.c.l.b16 %v2761
        %v2794 = vunpack.c.l.b16 %v2762
        %v2795 = vunpack.c.l.b16 %v2763
        %v2796 = vunpack.c.l.b16 %v2764
        %v2797 = vunpack.c.l.b16 %v2765
        %v2798 = vunpack.c.l.b16 %v2766
        %v2799 = vunpack.c.l.b16 %v2767
        %v2800 = vunpack.c.l.b16 %v2768
        %v2801 = vunpack.c.l.b16 %v2769
        %v2802 = vunpack.c.l.b16 %v2770
        %v2803 = vunpack.c.l.b16 %v2771
        %v2804 = vunpack.c.l.b16 %v2772
        %v2805 = vpack.c.b16 %v2790, %v2789
        %v2806 = vpack.c.b16 %v2792, %v2791
        %v2807 = vpack.c.b16 %v2794, %v2793
        %v2808 = vpack.c.b16 %v2796, %v2795
        %v2809 = vpack.c.b16 %v2798, %v2797
        %v2810 = vpack.c.b16 %v2800, %v2799
        %v2811 = vpack.c.b16 %v2802, %v2801
        %v2812 = vpack.c.b16 %v2804, %v2803
        %2821 = vmatprep.subr.bf16.mxu0 0
        %2822 = vmatpush1.bf16.msra.mxu0 %v2805
        %2823 = vmatprep.subr.bf16.mxu0 0
        %2824 = vmatpush1.bf16.msra.mxu0 %v2806
        %2825 = vmatprep.subr.bf16.mxu0 0
        %2826 = vmatpush1.bf16.msra.mxu0 %v2807
        %2827 = vmatprep.subr.bf16.mxu0 0
        %2828 = vmatpush1.bf16.msra.mxu0 %v2808
        %2829 = vmatprep.subr.bf16.mxu0 0
        %2830 = vmatpush1.bf16.msra.mxu0 %v2809
        %2831 = vmatprep.subr.bf16.mxu0 0
        %2832 = vmatpush1.bf16.msra.mxu0 %v2810
        %2833 = vmatprep.subr.bf16.mxu0 0
        %2834 = vmatpush1.bf16.msra.mxu0 %v2811
        %2835 = vmatprep.subr.bf16.mxu0 0
        %2836 = vmatpush1.bf16.msra.mxu0 %v2812
        %2837 = vmatprep.subr.bf16.mxu0 0
        %2838 = vmatpush1.bf16.msra.mxu0 0
        %2839 = vmatprep.subr.bf16.mxu0 0
        %2840 = vmatpush1.bf16.msra.mxu0 0
        %2841 = vmatprep.subr.bf16.mxu0 0
        %2842 = vmatpush1.bf16.msra.mxu0 0
        %2843 = vmatprep.subr.bf16.mxu0 0
        %2844 = vmatpush1.bf16.msra.mxu0 0
        %2845 = vmatprep.subr.bf16.mxu0 0
        %2846 = vmatpush1.bf16.msra.mxu0 0
        %2847 = vmatprep.subr.bf16.mxu0 0
        %2848 = vmatpush1.bf16.msra.mxu0 0
        %2849 = vmatprep.subr.bf16.mxu0 0
        %2850 = vmatpush1.bf16.msra.mxu0 0
        %2851 = vmatprep.subr.bf16.mxu0 0
        %2852 = vmatpush1.bf16.msra.mxu0 0
        %2853 = vmatprep.mubr.bf16.mxu0 0
        %2854 = vmatmul.mubr.bf16.gmra.mrb[0].mxu0 %v2749
        %v2855 = vpop.f32.mrb[0].mxu0
        %v2856 = vadd.f32 0.0, %v2855
        %v2857 = vpop.f32.mrb[0].mxu0
        %v2858 = vpop.f32.mrb[0].mxu0
        %v2859 = vadd.f32 0.0, %v2858
        %v2860 = vpop.f32.mrb[0].mxu0
        %2861 = vmatprep.mubr.bf16.mxu0 0
        %2862 = vmatmul.mubr.bf16.gmra.mrb[0].mxu0 %v2750
        %v2863 = vpop.f32.mrb[0].mxu0
        %v2864 = vadd.f32 0.0, %v2863
        %v2865 = vpop.f32.mrb[0].mxu0
        %v2866 = vpop.f32.mrb[0].mxu0
        %v2867 = vadd.f32 0.0, %v2866
        %v2868 = vpop.f32.mrb[0].mxu0
        %2869 = vmatprep.mubr.bf16.mxu0 0
        %2870 = vmatmul.mubr.bf16.gmra.mrb[0].mxu0 %v2751
        %v2871 = vpop.f32.mrb[0].mxu0
        %v2872 = vadd.f32 0.0, %v2871
        %v2873 = vpop.f32.mrb[0].mxu0
        %v2874 = vpop.f32.mrb[0].mxu0
        %v2875 = vadd.f32 0.0, %v2874
        %v2876 = vpop.f32.mrb[0].mxu0
        %2877 = vmatprep.mubr.bf16.mxu0 0
        %2878 = vmatmul.mubr.bf16.gmra.mrb[0].mxu0 %v2752
        %v2879 = vpop.f32.mrb[0].mxu0
        %v2880 = vadd.f32 0.0, %v2879
        %v2881 = vpop.f32.mrb[0].mxu0
        %v2882 = vpop.f32.mrb[0].mxu0
        %v2883 = vadd.f32 0.0, %v2882
        %v2884 = vpop.f32.mrb[0].mxu0
        %2885 = vmatprep.mubr.bf16.mxu0 0
        %2886 = vmatmul.mubr.bf16.gmra.mrb[0].mxu0 %v2753
        %v2887 = vpop.f32.mrb[0].mxu0
        %v2888 = vadd.f32 0.0, %v2887
        %v2889 = vpop.f32.mrb[0].mxu0
        %v2890 = vpop.f32.mrb[0].mxu0
        %v2891 = vadd.f32 0.0, %v2890
        %v2892 = vpop.f32.mrb[0].mxu0
        %2893 = vmatprep.mubr.bf16.mxu0 0
        %2894 = vmatmul.mubr.bf16.gmra.mrb[0].mxu0 %v2754
        %v2895 = vpop.f32.mrb[0].mxu0
        %v2896 = vadd.f32 0.0, %v2895
        %v2897 = vpop.f32.mrb[0].mxu0
        %v2898 = vpop.f32.mrb[0].mxu0
        %v2899 = vadd.f32 0.0, %v2898
        %v2900 = vpop.f32.mrb[0].mxu0
        %2901 = vmatprep.mubr.bf16.mxu0 0
        %2902 = vmatmul.mubr.bf16.gmra.mrb[0].mxu0 %v2755
        %v2903 = vpop.f32.mrb[0].mxu0
        %v2904 = vadd.f32 0.0, %v2903
        %v2905 = vpop.f32.mrb[0].mxu0
        %v2906 = vpop.f32.mrb[0].mxu0
        %v2907 = vadd.f32 0.0, %v2906
        %v2908 = vpop.f32.mrb[0].mxu0
        %2909 = vmatprep.mubr.bf16.mxu0 0
        %2910 = vmatmul.mubr.bf16.gmra.mrb[0].mxu0 %v2756
        %v2911 = vpop.f32.mrb[0].mxu0
        %v2912 = vadd.f32 0.0, %v2911
        %v2913 = vpop.f32.mrb[0].mxu0
        %v2914 = vpop.f32.mrb[0].mxu0
        %v2915 = vadd.f32 0.0, %v2914
        %v2916 = vpop.f32.mrb[0].mxu0
        %2917 = vdwg.mxu0
        %v2918 = vadd.f32 %v2725, %v2856
        %v2919 = vadd.f32 %v2726, %v2859
        %v2920 = vadd.f32 %v2727, %v2864
        %v2921 = vadd.f32 %v2728, %v2867
        %v2922 = vadd.f32 %v2729, %v2872
        %v2923 = vadd.f32 %v2730, %v2875
        %v2924 = vadd.f32 %v2731, %v2880
        %v2925 = vadd.f32 %v2732, %v2883
        %v2926 = vadd.f32 %v2733, %v2888
        %v2927 = vadd.f32 %v2734, %v2891
        %v2928 = vadd.f32 %v2735, %v2896
        %v2929 = vadd.f32 %v2736, %v2899
        %v2930 = vadd.f32 %v2737, %v2904
        %v2931 = vadd.f32 %v2738, %v2907
        %v2932 = vadd.f32 %v2739, %v2912
        %v2933 = vadd.f32 %v2740, %v2915
        %v2934 = vpack.c.bf16 %v1653, %v1651
        %v2935 = vpack.c.bf16 %v1673, %v1671
        %v2936 = vld [vmem:[%s475 + $0x180] sm:$0xf]
        %v2937 = vld [vmem:[%s475 + $0x184] sm:$0xf]
        %v2938 = vld [vmem:[%s475 + $0x188] sm:$0xf]
        %v2939 = vld [vmem:[%s475 + $0x18c] sm:$0xf]
        %v2940 = vld [vmem:[%s475 + $0x190] sm:$0xf]
        %v2941 = vld [vmem:[%s475 + $0x194] sm:$0xf]
        %v2942 = vld [vmem:[%s475 + $0x198] sm:$0xf]
        %v2943 = vld [vmem:[%s475 + $0x19c] sm:$0xf]
        %v2944 = vld [vmem:[%s475 + $0x1a0] sm:$0xf]
        %v2945 = vld [vmem:[%s475 + $0x1a4] sm:$0xf]
        %v2946 = vld [vmem:[%s475 + $0x1a8] sm:$0xf]
        %v2947 = vld [vmem:[%s475 + $0x1ac] sm:$0xf]
        %v2948 = vld [vmem:[%s475 + $0x1b0] sm:$0xf]
        %v2949 = vld [vmem:[%s475 + $0x1b4] sm:$0xf]
        %v2950 = vld [vmem:[%s475 + $0x1b8] sm:$0xf]
        %v2951 = vld [vmem:[%s475 + $0x1bc] sm:$0xf]
        %v2968 = vunpack.c.l.b16 %v2936
        %v2969 = vunpack.c.l.b16 %v2937
        %v2970 = vunpack.c.l.b16 %v2938
        %v2971 = vunpack.c.l.b16 %v2939
        %v2972 = vunpack.c.l.b16 %v2940
        %v2973 = vunpack.c.l.b16 %v2941
        %v2974 = vunpack.c.l.b16 %v2942
        %v2975 = vunpack.c.l.b16 %v2943
        %v2976 = vunpack.c.l.b16 %v2944
        %v2977 = vunpack.c.l.b16 %v2945
        %v2978 = vunpack.c.l.b16 %v2946
        %v2979 = vunpack.c.l.b16 %v2947
        %v2980 = vunpack.c.l.b16 %v2948
        %v2981 = vunpack.c.l.b16 %v2949
        %v2982 = vunpack.c.l.b16 %v2950
        %v2983 = vunpack.c.l.b16 %v2951
        %v2984 = vpack.c.b16 %v2969, %v2968
        %v2985 = vpack.c.b16 %v2971, %v2970
        %v2986 = vpack.c.b16 %v2973, %v2972
        %v2987 = vpack.c.b16 %v2975, %v2974
        %v2988 = vpack.c.b16 %v2977, %v2976
        %v2989 = vpack.c.b16 %v2979, %v2978
        %v2990 = vpack.c.b16 %v2981, %v2980
        %v2991 = vpack.c.b16 %v2983, %v2982
        %3000 = vmatprep.subr.bf16.mxu0 0
        %3001 = vmatpush1.bf16.msra.mxu0 %v2984
        %3002 = vmatprep.subr.bf16.mxu0 0
        %3003 = vmatpush1.bf16.msra.mxu0 %v2985
        %3004 = vmatprep.subr.bf16.mxu0 0
        %3005 = vmatpush1.bf16.msra.mxu0 %v2986
        %3006 = vmatprep.subr.bf16.mxu0 0
        %3007 = vmatpush1.bf16.msra.mxu0 %v2987
        %3008 = vmatprep.subr.bf16.mxu0 0
        %3009 = vmatpush1.bf16.msra.mxu0 %v2988
        %3010 = vmatprep.subr.bf16.mxu0 0
        %3011 = vmatpush1.bf16.msra.mxu0 %v2989
        %3012 = vmatprep.subr.bf16.mxu0 0
        %3013 = vmatpush1.bf16.msra.mxu0 %v2990
        %3014 = vmatprep.subr.bf16.mxu0 0
        %3015 = vmatpush1.bf16.msra.mxu0 %v2991
        %3016 = vmatprep.subr.bf16.mxu0 0
        %3017 = vmatpush1.bf16.msra.mxu0 0
        %3018 = vmatprep.subr.bf16.mxu0 0
        %3019 = vmatpush1.bf16.msra.mxu0 0
        %3020 = vmatprep.subr.bf16.mxu0 0
        %3021 = vmatpush1.bf16.msra.mxu0 0
        %3022 = vmatprep.subr.bf16.mxu0 0
        %3023 = vmatpush1.bf16.msra.mxu0 0
        %3024 = vmatprep.subr.bf16.mxu0 0
        %3025 = vmatpush1.bf16.msra.mxu0 0
        %3026 = vmatprep.subr.bf16.mxu0 0
        %3027 = vmatpush1.bf16.msra.mxu0 0
        %3028 = vmatprep.subr.bf16.mxu0 0
        %3029 = vmatpush1.bf16.msra.mxu0 0
        %3030 = vmatprep.subr.bf16.mxu0 0
        %3031 = vmatpush1.bf16.msra.mxu0 0
        %3032 = vmatprep.mubr.bf16.mxu0 0
        %3033 = vmatmul.mubr.bf16.gmra.mrb[0].mxu0 %v1676
        %v3034 = vpop.f32.mrb[0].mxu0
        %v3035 = vadd.f32 0.0, %v3034
        %v3036 = vpop.f32.mrb[0].mxu0
        %v3037 = vpop.f32.mrb[0].mxu0
        %v3038 = vadd.f32 0.0, %v3037
        %v3039 = vpop.f32.mrb[0].mxu0
        %3040 = vmatprep.mubr.bf16.mxu0 0
        %3041 = vmatmul.mubr.bf16.gmra.mrb[0].mxu0 %v1677
        %v3042 = vpop.f32.mrb[0].mxu0
        %v3043 = vadd.f32 0.0, %v3042
        %v3044 = vpop.f32.mrb[0].mxu0
        %v3045 = vpop.f32.mrb[0].mxu0
        %v3046 = vadd.f32 0.0, %v3045
        %v3047 = vpop.f32.mrb[0].mxu0
        %3048 = vmatprep.mubr.bf16.mxu0 0
        %3049 = vmatmul.mubr.bf16.gmra.mrb[0].mxu0 %v1678
        %v3050 = vpop.f32.mrb[0].mxu0
        %v3051 = vadd.f32 0.0, %v3050
        %v3052 = vpop.f32.mrb[0].mxu0
        %v3053 = vpop.f32.mrb[0].mxu0
        %v3054 = vadd.f32 0.0, %v3053
        %v3055 = vpop.f32.mrb[0].mxu0
        %3056 = vmatprep.mubr.bf16.mxu0 0
        %3057 = vmatmul.mubr.bf16.gmra.mrb[0].mxu0 %v2934
        %v3058 = vpop.f32.mrb[0].mxu0
        %v3059 = vadd.f32 0.0, %v3058
        %v3060 = vpop.f32.mrb[0].mxu0
        %v3061 = vpop.f32.mrb[0].mxu0
        %v3062 = vadd.f32 0.0, %v3061
        %v3063 = vpop.f32.mrb[0].mxu0
        %3064 = vmatprep.mubr.bf16.mxu0 0
        %3065 = vmatmul.mubr.bf16.gmra.mrb[0].mxu0 %v1680
        %v3066 = vpop.f32.mrb[0].mxu0
        %v3067 = vadd.f32 0.0, %v3066
        %v3068 = vpop.f32.mrb[0].mxu0
        %v3069 = vpop.f32.mrb[0].mxu0
        %v3070 = vadd.f32 0.0, %v3069
        %v3071 = vpop.f32.mrb[0].mxu0
        %3072 = vmatprep.mubr.bf16.mxu0 0
        %3073 = vmatmul.mubr.bf16.gmra.mrb[0].mxu0 %v1681
        %v3074 = vpop.f32.mrb[0].mxu0
        %v3075 = vadd.f32 0.0, %v3074
        %v3076 = vpop.f32.mrb[0].mxu0
        %v3077 = vpop.f32.mrb[0].mxu0
        %v3078 = vadd.f32 0.0, %v3077
        %v3079 = vpop.f32.mrb[0].mxu0
        %3080 = vmatprep.mubr.bf16.mxu0 0
        %3081 = vmatmul.mubr.bf16.gmra.mrb[0].mxu0 %v1682
        %v3082 = vpop.f32.mrb[0].mxu0
        %v3083 = vadd.f32 0.0, %v3082
        %v3084 = vpop.f32.mrb[0].mxu0
        %v3085 = vpop.f32.mrb[0].mxu0
        %v3086 = vadd.f32 0.0, %v3085
        %v3087 = vpop.f32.mrb[0].mxu0
        %3088 = vmatprep.mubr.bf16.mxu0 0
        %3089 = vmatmul.mubr.bf16.gmra.mrb[0].mxu0 %v2935
        %v3090 = vpop.f32.mrb[0].mxu0
        %v3091 = vadd.f32 0.0, %v3090
        %v3092 = vpop.f32.mrb[0].mxu0
        %v3093 = vpop.f32.mrb[0].mxu0
        %v3094 = vadd.f32 0.0, %v3093
        %v3095 = vpop.f32.mrb[0].mxu0
        %3096 = vdwg.mxu0
        %v3097 = vadd.f32 %v2918, %v3035
        %v3098 = vadd.f32 %v2919, %v3038
        %v3099 = vadd.f32 %v2920, %v3043
        %v3100 = vadd.f32 %v2921, %v3046
        %v3101 = vadd.f32 %v2922, %v3051
        %v3102 = vadd.f32 %v2923, %v3054
        %v3103 = vadd.f32 %v2924, %v3059
        %v3104 = vadd.f32 %v2925, %v3062
        %v3105 = vadd.f32 %v2926, %v3067
        %v3106 = vadd.f32 %v2927, %v3070
        %v3107 = vadd.f32 %v2928, %v3075
        %v3108 = vadd.f32 %v2929, %v3078
        %v3109 = vadd.f32 %v2930, %v3083
        %v3110 = vadd.f32 %v2931, %v3086
        %v3111 = vadd.f32 %v2932, %v3091
        %v3112 = vadd.f32 %v2933, %v3094
        %v3117 = vrot.slane %v1653, 1
        %v3118 = vrot.slane %v1654, 1
        %v3119 = vsel %vm615, %v3117, %v3118
        %v3120 = vrot.slane %v1673, 1
        %v3121 = vrot.slane %v1674, 1
        %v3122 = vsel %vm615, %v3120, %v3121
        %v3125 = vpack.c.bf16 %v3119, %v2550
        %v3126 = vpack.c.bf16 %v3122, %v2553
        %v3127 = vld [vmem:[%s475 + $0x1c0] sm:$0xf]
        %v3128 = vld [vmem:[%s475 + $0x1c4] sm:$0xf]
        %v3129 = vld [vmem:[%s475 + $0x1c8] sm:$0xf]
        %v3130 = vld [vmem:[%s475 + $0x1cc] sm:$0xf]
        %v3131 = vld [vmem:[%s475 + $0x1d0] sm:$0xf]
        %v3132 = vld [vmem:[%s475 + $0x1d4] sm:$0xf]
        %v3133 = vld [vmem:[%s475 + $0x1d8] sm:$0xf]
        %v3134 = vld [vmem:[%s475 + $0x1dc] sm:$0xf]
        %v3135 = vld [vmem:[%s475 + $0x1e0] sm:$0xf]
        %v3136 = vld [vmem:[%s475 + $0x1e4] sm:$0xf]
        %v3137 = vld [vmem:[%s475 + $0x1e8] sm:$0xf]
        %v3138 = vld [vmem:[%s475 + $0x1ec] sm:$0xf]
        %v3139 = vld [vmem:[%s475 + $0x1f0] sm:$0xf]
        %v3140 = vld [vmem:[%s475 + $0x1f4] sm:$0xf]
        %v3141 = vld [vmem:[%s475 + $0x1f8] sm:$0xf]
        %v3142 = vld [vmem:[%s475 + $0x1fc] sm:$0xf]
        %v3159 = vunpack.c.l.b16 %v3127
        %v3160 = vunpack.c.l.b16 %v3128
        %v3161 = vunpack.c.l.b16 %v3129
        %v3162 = vunpack.c.l.b16 %v3130
        %v3163 = vunpack.c.l.b16 %v3131
        %v3164 = vunpack.c.l.b16 %v3132
        %v3165 = vunpack.c.l.b16 %v3133
        %v3166 = vunpack.c.l.b16 %v3134
        %v3167 = vunpack.c.l.b16 %v3135
        %v3168 = vunpack.c.l.b16 %v3136
        %v3169 = vunpack.c.l.b16 %v3137
        %v3170 = vunpack.c.l.b16 %v3138
        %v3171 = vunpack.c.l.b16 %v3139
        %v3172 = vunpack.c.l.b16 %v3140
        %v3173 = vunpack.c.l.b16 %v3141
        %v3174 = vunpack.c.l.b16 %v3142
        %v3175 = vpack.c.b16 %v3160, %v3159
        %v3176 = vpack.c.b16 %v3162, %v3161
        %v3177 = vpack.c.b16 %v3164, %v3163
        %v3178 = vpack.c.b16 %v3166, %v3165
        %v3179 = vpack.c.b16 %v3168, %v3167
        %v3180 = vpack.c.b16 %v3170, %v3169
        %v3181 = vpack.c.b16 %v3172, %v3171
        %v3182 = vpack.c.b16 %v3174, %v3173
        %3191 = vmatprep.subr.bf16.mxu0 0
        %3192 = vmatpush1.bf16.msra.mxu0 %v3175
        %3193 = vmatprep.subr.bf16.mxu0 0
        %3194 = vmatpush1.bf16.msra.mxu0 %v3176
        %3195 = vmatprep.subr.bf16.mxu0 0
        %3196 = vmatpush1.bf16.msra.mxu0 %v3177
        %3197 = vmatprep.subr.bf16.mxu0 0
        %3198 = vmatpush1.bf16.msra.mxu0 %v3178
        %3199 = vmatprep.subr.bf16.mxu0 0
        %3200 = vmatpush1.bf16.msra.mxu0 %v3179
        %3201 = vmatprep.subr.bf16.mxu0 0
        %3202 = vmatpush1.bf16.msra.mxu0 %v3180
        %3203 = vmatprep.subr.bf16.mxu0 0
        %3204 = vmatpush1.bf16.msra.mxu0 %v3181
        %3205 = vmatprep.subr.bf16.mxu0 0
        %3206 = vmatpush1.bf16.msra.mxu0 %v3182
        %3207 = vmatprep.subr.bf16.mxu0 0
        %3208 = vmatpush1.bf16.msra.mxu0 0
        %3209 = vmatprep.subr.bf16.mxu0 0
        %3210 = vmatpush1.bf16.msra.mxu0 0
        %3211 = vmatprep.subr.bf16.mxu0 0
        %3212 = vmatpush1.bf16.msra.mxu0 0
        %3213 = vmatprep.subr.bf16.mxu0 0
        %3214 = vmatpush1.bf16.msra.mxu0 0
        %3215 = vmatprep.subr.bf16.mxu0 0
        %3216 = vmatpush1.bf16.msra.mxu0 0
        %3217 = vmatprep.subr.bf16.mxu0 0
        %3218 = vmatpush1.bf16.msra.mxu0 0
        %3219 = vmatprep.subr.bf16.mxu0 0
        %3220 = vmatpush1.bf16.msra.mxu0 0
        %3221 = vmatprep.subr.bf16.mxu0 0
        %3222 = vmatpush1.bf16.msra.mxu0 0
        %3223 = vmatprep.mubr.bf16.mxu0 0
        %3224 = vmatmul.mubr.bf16.gmra.mrb[0].mxu0 %v1796
        %v3225 = vpop.f32.mrb[0].mxu0
        %v3226 = vadd.f32 0.0, %v3225
        %v3227 = vpop.f32.mrb[0].mxu0
        %v3228 = vpop.f32.mrb[0].mxu0
        %v3229 = vadd.f32 0.0, %v3228
        %v3230 = vpop.f32.mrb[0].mxu0
        %3231 = vmatprep.mubr.bf16.mxu0 0
        %3232 = vmatmul.mubr.bf16.gmra.mrb[0].mxu0 %v1797
        %v3233 = vpop.f32.mrb[0].mxu0
        %v3234 = vadd.f32 0.0, %v3233
        %v3235 = vpop.f32.mrb[0].mxu0
        %v3236 = vpop.f32.mrb[0].mxu0
        %v3237 = vadd.f32 0.0, %v3236
        %v3238 = vpop.f32.mrb[0].mxu0
        %3239 = vmatprep.mubr.bf16.mxu0 0
        %3240 = vmatmul.mubr.bf16.gmra.mrb[0].mxu0 %v1798
        %v3241 = vpop.f32.mrb[0].mxu0
        %v3242 = vadd.f32 0.0, %v3241
        %v3243 = vpop.f32.mrb[0].mxu0
        %v3244 = vpop.f32.mrb[0].mxu0
        %v3245 = vadd.f32 0.0, %v3244
        %v3246 = vpop.f32.mrb[0].mxu0
        %3247 = vmatprep.mubr.bf16.mxu0 0
        %3248 = vmatmul.mubr.bf16.gmra.mrb[0].mxu0 %v3125
        %v3249 = vpop.f32.mrb[0].mxu0
        %v3250 = vadd.f32 0.0, %v3249
        %v3251 = vpop.f32.mrb[0].mxu0
        %v3252 = vpop.f32.mrb[0].mxu0
        %v3253 = vadd.f32 0.0, %v3252
        %v3254 = vpop.f32.mrb[0].mxu0
        %3255 = vmatprep.mubr.bf16.mxu0 0
        %3256 = vmatmul.mubr.bf16.gmra.mrb[0].mxu0 %v1800
        %v3257 = vpop.f32.mrb[0].mxu0
        %v3258 = vadd.f32 0.0, %v3257
        %v3259 = vpop.f32.mrb[0].mxu0
        %v3260 = vpop.f32.mrb[0].mxu0
        %v3261 = vadd.f32 0.0, %v3260
        %v3262 = vpop.f32.mrb[0].mxu0
        %3263 = vmatprep.mubr.bf16.mxu0 0
        %3264 = vmatmul.mubr.bf16.gmra.mrb[0].mxu0 %v1801
        %v3265 = vpop.f32.mrb[0].mxu0
        %v3266 = vadd.f32 0.0, %v3265
        %v3267 = vpop.f32.mrb[0].mxu0
        %v3268 = vpop.f32.mrb[0].mxu0
        %v3269 = vadd.f32 0.0, %v3268
        %v3270 = vpop.f32.mrb[0].mxu0
        %3271 = vmatprep.mubr.bf16.mxu0 0
        %3272 = vmatmul.mubr.bf16.gmra.mrb[0].mxu0 %v1802
        %v3273 = vpop.f32.mrb[0].mxu0
        %v3274 = vadd.f32 0.0, %v3273
        %v3275 = vpop.f32.mrb[0].mxu0
        %v3276 = vpop.f32.mrb[0].mxu0
        %v3277 = vadd.f32 0.0, %v3276
        %v3278 = vpop.f32.mrb[0].mxu0
        %3279 = vmatprep.mubr.bf16.mxu0 0
        %3280 = vmatmul.mubr.bf16.gmra.mrb[0].mxu0 %v3126
        %v3281 = vpop.f32.mrb[0].mxu0
        %v3282 = vadd.f32 0.0, %v3281
        %v3283 = vpop.f32.mrb[0].mxu0
        %v3284 = vpop.f32.mrb[0].mxu0
        %v3285 = vadd.f32 0.0, %v3284
        %v3286 = vpop.f32.mrb[0].mxu0
        %3287 = vdwg.mxu0
        %v3288 = vadd.f32 %v3097, %v3226
        %v3289 = vadd.f32 %v3098, %v3229
        %v3290 = vadd.f32 %v3099, %v3234
        %v3291 = vadd.f32 %v3100, %v3237
        %v3292 = vadd.f32 %v3101, %v3242
        %v3293 = vadd.f32 %v3102, %v3245
        %v3294 = vadd.f32 %v3103, %v3250
        %v3295 = vadd.f32 %v3104, %v3253
        %v3296 = vadd.f32 %v3105, %v3258
        %v3297 = vadd.f32 %v3106, %v3261
        %v3298 = vadd.f32 %v3107, %v3266
        %v3299 = vadd.f32 %v3108, %v3269
        %v3300 = vadd.f32 %v3109, %v3274
        %v3301 = vadd.f32 %v3110, %v3277
        %v3302 = vadd.f32 %v3111, %v3282
        %v3303 = vadd.f32 %v3112, %v3285
        %v3304 = vrot.slane %v1653, 2
        %v3305 = vrot.slane %v1654, 2
        %v3306 = vsel %vm2109, %v3304, %v3305
        %v3307 = vrot.slane %v1673, 2
        %v3308 = vrot.slane %v1674, 2
        %v3309 = vsel %vm2109, %v3307, %v3308
        %v3312 = vpack.c.bf16 %v3306, %v2743
        %v3313 = vpack.c.bf16 %v3309, %v2746
        %v3314 = vld [vmem:[%s475 + $0x200] sm:$0xf]
        %v3315 = vld [vmem:[%s475 + $0x204] sm:$0xf]
        %v3316 = vld [vmem:[%s475 + $0x208] sm:$0xf]
        %v3317 = vld [vmem:[%s475 + $0x20c] sm:$0xf]
        %v3318 = vld [vmem:[%s475 + $0x210] sm:$0xf]
        %v3319 = vld [vmem:[%s475 + $0x214] sm:$0xf]
        %v3320 = vld [vmem:[%s475 + $0x218] sm:$0xf]
        %v3321 = vld [vmem:[%s475 + $0x21c] sm:$0xf]
        %v3322 = vld [vmem:[%s475 + $0x220] sm:$0xf]
        %v3323 = vld [vmem:[%s475 + $0x224] sm:$0xf]
        %v3324 = vld [vmem:[%s475 + $0x228] sm:$0xf]
        %v3325 = vld [vmem:[%s475 + $0x22c] sm:$0xf]
        %v3326 = vld [vmem:[%s475 + $0x230] sm:$0xf]
        %v3327 = vld [vmem:[%s475 + $0x234] sm:$0xf]
        %v3328 = vld [vmem:[%s475 + $0x238] sm:$0xf]
        %v3329 = vld [vmem:[%s475 + $0x23c] sm:$0xf]
        %v3346 = vunpack.c.l.b16 %v3314
        %v3347 = vunpack.c.l.b16 %v3315
        %v3348 = vunpack.c.l.b16 %v3316
        %v3349 = vunpack.c.l.b16 %v3317
        %v3350 = vunpack.c.l.b16 %v3318
        %v3351 = vunpack.c.l.b16 %v3319
        %v3352 = vunpack.c.l.b16 %v3320
        %v3353 = vunpack.c.l.b16 %v3321
        %v3354 = vunpack.c.l.b16 %v3322
        %v3355 = vunpack.c.l.b16 %v3323
        %v3356 = vunpack.c.l.b16 %v3324
        %v3357 = vunpack.c.l.b16 %v3325
        %v3358 = vunpack.c.l.b16 %v3326
        %v3359 = vunpack.c.l.b16 %v3327
        %v3360 = vunpack.c.l.b16 %v3328
        %v3361 = vunpack.c.l.b16 %v3329
        %v3362 = vpack.c.b16 %v3347, %v3346
        %v3363 = vpack.c.b16 %v3349, %v3348
        %v3364 = vpack.c.b16 %v3351, %v3350
        %v3365 = vpack.c.b16 %v3353, %v3352
        %v3366 = vpack.c.b16 %v3355, %v3354
        %v3367 = vpack.c.b16 %v3357, %v3356
        %v3368 = vpack.c.b16 %v3359, %v3358
        %v3369 = vpack.c.b16 %v3361, %v3360
        %3378 = vmatprep.subr.bf16.mxu0 0
        %3379 = vmatpush1.bf16.msra.mxu0 %v3362
        %3380 = vmatprep.subr.bf16.mxu0 0
        %3381 = vmatpush1.bf16.msra.mxu0 %v3363
        %3382 = vmatprep.subr.bf16.mxu0 0
        %3383 = vmatpush1.bf16.msra.mxu0 %v3364
        %3384 = vmatprep.subr.bf16.mxu0 0
        %3385 = vmatpush1.bf16.msra.mxu0 %v3365
        %3386 = vmatprep.subr.bf16.mxu0 0
        %3387 = vmatpush1.bf16.msra.mxu0 %v3366
        %3388 = vmatprep.subr.bf16.mxu0 0
        %3389 = vmatpush1.bf16.msra.mxu0 %v3367
        %3390 = vmatprep.subr.bf16.mxu0 0
        %3391 = vmatpush1.bf16.msra.mxu0 %v3368
        %3392 = vmatprep.subr.bf16.mxu0 0
        %3393 = vmatpush1.bf16.msra.mxu0 %v3369
        %3394 = vmatprep.subr.bf16.mxu0 0
        %3395 = vmatpush1.bf16.msra.mxu0 0
        %3396 = vmatprep.subr.bf16.mxu0 0
        %3397 = vmatpush1.bf16.msra.mxu0 0
        %3398 = vmatprep.subr.bf16.mxu0 0
        %3399 = vmatpush1.bf16.msra.mxu0 0
        %3400 = vmatprep.subr.bf16.mxu0 0
        %3401 = vmatpush1.bf16.msra.mxu0 0
        %3402 = vmatprep.subr.bf16.mxu0 0
        %3403 = vmatpush1.bf16.msra.mxu0 0
        %3404 = vmatprep.subr.bf16.mxu0 0
        %3405 = vmatpush1.bf16.msra.mxu0 0
        %3406 = vmatprep.subr.bf16.mxu0 0
        %3407 = vmatpush1.bf16.msra.mxu0 0
        %3408 = vmatprep.subr.bf16.mxu0 0
        %3409 = vmatpush1.bf16.msra.mxu0 0
        %3410 = vmatprep.mubr.bf16.mxu0 0
        %3411 = vmatmul.mubr.bf16.gmra.mrb[0].mxu0 %v2175
        %v3412 = vpop.f32.mrb[0].mxu0
        %v3413 = vadd.f32 0.0, %v3412
        %v3414 = vpop.f32.mrb[0].mxu0
        %v3415 = vpop.f32.mrb[0].mxu0
        %v3416 = vadd.f32 0.0, %v3415
        %v3417 = vpop.f32.mrb[0].mxu0
        %3418 = vmatprep.mubr.bf16.mxu0 0
        %3419 = vmatmul.mubr.bf16.gmra.mrb[0].mxu0 %v2176
        %v3420 = vpop.f32.mrb[0].mxu0
        %v3421 = vadd.f32 0.0, %v3420
        %v3422 = vpop.f32.mrb[0].mxu0
        %v3423 = vpop.f32.mrb[0].mxu0
        %v3424 = vadd.f32 0.0, %v3423
        %v3425 = vpop.f32.mrb[0].mxu0
        %3426 = vmatprep.mubr.bf16.mxu0 0
        %3427 = vmatmul.mubr.bf16.gmra.mrb[0].mxu0 %v2177
        %v3428 = vpop.f32.mrb[0].mxu0
        %v3429 = vadd.f32 0.0, %v3428
        %v3430 = vpop.f32.mrb[0].mxu0
        %v3431 = vpop.f32.mrb[0].mxu0
        %v3432 = vadd.f32 0.0, %v3431
        %v3433 = vpop.f32.mrb[0].mxu0
        %3434 = vmatprep.mubr.bf16.mxu0 0
        %3435 = vmatmul.mubr.bf16.gmra.mrb[0].mxu0 %v3312
        %v3436 = vpop.f32.mrb[0].mxu0
        %v3437 = vadd.f32 0.0, %v3436
        %v3438 = vpop.f32.mrb[0].mxu0
        %v3439 = vpop.f32.mrb[0].mxu0
        %v3440 = vadd.f32 0.0, %v3439
        %v3441 = vpop.f32.mrb[0].mxu0
        %3442 = vmatprep.mubr.bf16.mxu0 0
        %3443 = vmatmul.mubr.bf16.gmra.mrb[0].mxu0 %v2179
        %v3444 = vpop.f32.mrb[0].mxu0
        %v3445 = vadd.f32 0.0, %v3444
        %v3446 = vpop.f32.mrb[0].mxu0
        %v3447 = vpop.f32.mrb[0].mxu0
        %v3448 = vadd.f32 0.0, %v3447
        %v3449 = vpop.f32.mrb[0].mxu0
        %3450 = vmatprep.mubr.bf16.mxu0 0
        %3451 = vmatmul.mubr.bf16.gmra.mrb[0].mxu0 %v2180
        %v3452 = vpop.f32.mrb[0].mxu0
        %v3453 = vadd.f32 0.0, %v3452
        %v3454 = vpop.f32.mrb[0].mxu0
        %v3455 = vpop.f32.mrb[0].mxu0
        %v3456 = vadd.f32 0.0, %v3455
        %v3457 = vpop.f32.mrb[0].mxu0
        %3458 = vmatprep.mubr.bf16.mxu0 0
        %3459 = vmatmul.mubr.bf16.gmra.mrb[0].mxu0 %v2181
        %v3460 = vpop.f32.mrb[0].mxu0
        %v3461 = vadd.f32 0.0, %v3460
        %v3462 = vpop.f32.mrb[0].mxu0
        %v3463 = vpop.f32.mrb[0].mxu0
        %v3464 = vadd.f32 0.0, %v3463
        %v3465 = vpop.f32.mrb[0].mxu0
        %3466 = vmatprep.mubr.bf16.mxu0 0
        %3467 = vmatmul.mubr.bf16.gmra.mrb[0].mxu0 %v3313
        %v3468 = vpop.f32.mrb[0].mxu0
        %v3469 = vadd.f32 0.0, %v3468
        %v3470 = vpop.f32.mrb[0].mxu0
        %v3471 = vpop.f32.mrb[0].mxu0
        %v3472 = vadd.f32 0.0, %v3471
        %v3473 = vpop.f32.mrb[0].mxu0
        %3474 = vdwg.mxu0
        %v3475 = vadd.f32 %v3288, %v3413
        %v3476 = vadd.f32 %v3289, %v3416
        %v3477 = vadd.f32 %v3290, %v3421
        %v3478 = vadd.f32 %v3291, %v3424
        %v3479 = vadd.f32 %v3292, %v3429
        %v3480 = vadd.f32 %v3293, %v3432
        %v3481 = vadd.f32 %v3294, %v3437
        %v3482 = vadd.f32 %v3295, %v3440
        %v3483 = vadd.f32 %v3296, %v3445
        %v3484 = vadd.f32 %v3297, %v3448
        %v3485 = vadd.f32 %v3298, %v3453
        %v3486 = vadd.f32 %v3299, %v3456
        %v3487 = vadd.f32 %v3300, %v3461
        %v3488 = vadd.f32 %v3301, %v3464
        %v3489 = vadd.f32 %v3302, %v3469
        %v3490 = vadd.f32 %v3303, %v3472
        %v3491 = vld [vmem:[%s478] sm:$0x1]
        %v3493 = vlaneseq
        %v3494 = vshrl.u32 %v3493, 7
        %v3495 = vsub.s32 0, %v3494
        %v3496 = vrot.slane %v3491, %v3495
        %v3498 = vadd.f32 %v3475, %v3496
        %v3499 = vadd.f32 %v3476, %v3496
        %v3500 = vadd.f32 %v3477, %v3496
        %v3501 = vadd.f32 %v3478, %v3496
        %v3502 = vadd.f32 %v3479, %v3496
        %v3503 = vadd.f32 %v3480, %v3496
        %v3504 = vadd.f32 %v3481, %v3496
        %v3505 = vadd.f32 %v3482, %v3496
        %v3506 = vadd.f32 %v3483, %v3496
        %v3507 = vadd.f32 %v3484, %v3496
        %v3508 = vadd.f32 %v3485, %v3496
        %v3509 = vadd.f32 %v3486, %v3496
        %v3510 = vadd.f32 %v3487, %v3496
        %v3511 = vadd.f32 %v3488, %v3496
        %v3512 = vadd.f32 %v3489, %v3496
        %v3513 = vadd.f32 %v3490, %v3496
        %v3514 = vadd.f32 %v3498, %v1522
        %v3515 = vadd.f32 %v3499, %v1523
        %v3516 = vadd.f32 %v3500, %v1524
        %v3517 = vadd.f32 %v3501, %v1525
        %v3518 = vadd.f32 %v3502, %v1526
        %v3519 = vadd.f32 %v3503, %v1527
        %v3520 = vadd.f32 %v3504, %v1528
        %v3521 = vadd.f32 %v3505, %v1529
        %v3522 = vadd.f32 %v3506, %v1530
        %v3523 = vadd.f32 %v3507, %v1531
        %v3524 = vadd.f32 %v3508, %v1532
        %v3525 = vadd.f32 %v3509, %v1533
        %v3526 = vadd.f32 %v3510, %v1534
        %v3527 = vadd.f32 %v3511, %v1535
        %v3528 = vadd.f32 %v3512, %v1536
        %v3529 = vadd.f32 %v3513, %v1537
        %v3530 = vmax.f32 %v3514, 0.0
        %v3531 = vmax.f32 %v3515, 0.0
        %v3532 = vmax.f32 %v3516, 0.0
        %v3533 = vmax.f32 %v3517, 0.0
        %v3534 = vmax.f32 %v3518, 0.0
        %v3535 = vmax.f32 %v3519, 0.0
        %v3536 = vmax.f32 %v3520, 0.0
        %v3537 = vmax.f32 %v3521, 0.0
        %v3538 = vmax.f32 %v3522, 0.0
        %v3539 = vmax.f32 %v3523, 0.0
        %v3540 = vmax.f32 %v3524, 0.0
        %v3541 = vmax.f32 %v3525, 0.0
        %v3542 = vmax.f32 %v3526, 0.0
        %v3543 = vmax.f32 %v3527, 0.0
        %v3544 = vmax.f32 %v3528, 0.0
        %v3545 = vmax.f32 %v3529, 0.0
        %3546 = vst [vmem:[%s434] sm:$0xff] %v3530
        %3547 = vst [vmem:[%s434 + $0x8] sm:$0xff] %v3531
        %3548 = vst [vmem:[%s434 + $0x10] sm:$0xff] %v3532
        %3549 = vst [vmem:[%s434 + $0x18] sm:$0xff] %v3533
        %3550 = vst [vmem:[%s434 + $0x20] sm:$0xff] %v3534
        %3551 = vst [vmem:[%s434 + $0x28] sm:$0xff] %v3535
        %3552 = vst [vmem:[%s434 + $0x30] sm:$0xff] %v3536
        %3553 = vst [vmem:[%s434 + $0x38] sm:$0xff] %v3537
        %3554 = vst [vmem:[%s434 + $0x40] sm:$0xff] %v3538
        %3555 = vst [vmem:[%s434 + $0x48] sm:$0xff] %v3539
        %3556 = vst [vmem:[%s434 + $0x50] sm:$0xff] %v3540
        %3557 = vst [vmem:[%s434 + $0x58] sm:$0xff] %v3541
        %3558 = vst [vmem:[%s434 + $0x60] sm:$0xff] %v3542
        %3559 = vst [vmem:[%s434 + $0x68] sm:$0xff] %v3543
        %3560 = vst [vmem:[%s434 + $0x70] sm:$0xff] %v3544
        %3561 = vst [vmem:[%s434 + $0x78] sm:$0xff] %v3545
        %s3562 = sand.u32 %s260, 1
        %s3563 = scalar_lea.sflag [#allocation4], %s3562
        %s3564 = sand.u32 %s260, 1
        %s3565 = smul.addr %s3564, 128
        %s3566 = scalar_lea.vmem [#allocation3], %s3565
        // Predicated region
        $region57: #{tpu_custom_call.1} parent=55 // pred_check
          %p3567 = pneg %p270
        $region58: #{tpu_custom_call.1} parent=55 // pred_check_branch
          %3569 = sbr.rel (%p3567) target = $region60
        $region59: #{tpu_custom_call.1} parent=55 // pred_region
          %s3570 = smul.u32 2, %s23
          %s3572 = ssub.s32 2048, 2048
          %3573 = vsyncadd %s3563, %s3572
          %s3574 = smul.addr %s3570, 8
          %s3575 = smul.addr %s3574, 128
          %s3576 = scalar_lea.hbm %s9, %s3575
          %s3577 = sshll.u32 %s3566, 4
          %s3578 = int_to_ptr.vmem [resolvable:$true] %s3577
          %3583 = dma.vmem_to_hbm [thread:$0]  %s3578, 2048, %s3576, %s3563, 128, 128, 8
        $region60: #{tpu_custom_call.1} parent=55 // pred_fallthru
          _
      $region56: #{tpu_custom_call.1} parent=5 // pred_fallthru
        _
      %p3584 = scmp.le.s32.totalorder 2, %s18
      // Predicated region
      $region61: #{tpu_custom_call.1} parent=5 // pred_check
        %p3585 = pneg %p3584
      $region62: #{tpu_custom_call.1} parent=5 // pred_check_branch
        %3587 = sbr.rel (%p3585) target = $region64
      $region63: #{tpu_custom_call.1} parent=5 // pred_region
        %s3588 = ssub.s32 %s18, 2
        // Predicated region
        $region65: #{tpu_custom_call.1} parent=63 // pred_check
          %p3589 = pneg %p276
        $region66: #{tpu_custom_call.1} parent=63 // pred_check_branch
          %3591 = sbr.rel (%p3589) target = $region68
        $region67: #{tpu_custom_call.1} parent=63 // pred_region
          %s3592 = sand.u32 %s261, 1
          %s3593 = scalar_lea.sflag [#allocation4], %s3592
          %s3594 = sand.u32 %s261, 1
          %s3595 = smul.addr %s3594, 128
          %s3596 = scalar_lea.vmem [#allocation3], %s3595
          %3597 = dma.done %s3593, 2048
        $region68: #{tpu_custom_call.1} parent=63 // pred_fallthru
          _
      $region64: #{tpu_custom_call.1} parent=5 // pred_fallthru
        _
    $region6: #{tpu_custom_call.1} parent=1 // loop_footer
      %s22 = sadd.s32 1, %s18
    $region7: #{tpu_custom_call.1} parent=1 // loop_footer_branch
      %17 = sbr.rel target = $region3
    $region8: #{tpu_custom_call.1} parent=1 // loop_exit
      _
    %3598 = vsyncpa [#allocation4], 1
    %s3599 = scalar_lea.sflag [#allocation4], 1
    %3600 = vsyncpa %s3599, 1

</llo_original>
